<compile_context>
chip_gen: v6e
topology: v6e:2x2x1
jax: 0.10.0
libtpu: 0.0.40
codegen_flags: <defaults>
</compile_context>

<pallas_src>
import jax
import jax.numpy as jnp
from jax.experimental import pallas as pl
from jax.experimental.pallas import tpu as pltpu


_LAYER_DIMS = [(4, 16), (16, 12), (12, 8), (8, 3)]   # (din, dout) per layer
_LANES = 128
_MIN_TB = 1024          # => sublane-rows per tile is a multiple of 8


def _round_up(a, m):
    return ((a + m - 1) // m) * m


def _dense_layer(w_ref, b_ref, xs, *, relu):
    """y[j] = sum_k w[j,k] * x[k] + b[j] on dense (rows, 128) batch slabs.

    w_ref: SMEM (dout, din), b_ref: SMEM (dout,), xs: list of din dense slabs.
    Weights are read as SMEM scalars and splatted for free; every vreg element
    is a live batch element (no sublane padding, no in-vreg broadcasts).
    """
    dout, din = w_ref.shape
    ys = []
    for j in range(dout):
        acc = xs[0] * w_ref[j, 0] + b_ref[j]          # fuse bias into MAC #0
        for k in range(1, din):                       # din <= 16: fully unrolled
            acc = acc + xs[k] * w_ref[j, k]
        if relu:
            acc = jnp.maximum(acc, 0.0)
        ys.append(acc)
    return ys


def simplenet_kernel(x_ref,
                     w1_ref, b1_ref,
                     w2_ref, b2_ref,
                     w3_ref, b3_ref,
                     w4_ref, b4_ref,
                     o_ref):
    # x_ref: (4, rows, 128) VMEM; o_ref: (11, rows, 128) VMEM (0-7 hidden, 8-10 out).
    xs = [x_ref[k] for k in range(4)]                            # 4 dense slabs
    h1 = _dense_layer(w1_ref, b1_ref, xs, relu=True)             # 16 slabs
    h2 = _dense_layer(w2_ref, b2_ref, h1, relu=True)             # 12 slabs
    h3 = _dense_layer(w3_ref, b3_ref, h2, relu=True)             # 8 slabs (= hidden)
    y = _dense_layer(w4_ref, b4_ref, h3, relu=False)             # 3 slabs (= output)
    for j in range(8):
        o_ref[j] = h3[j].astype(o_ref.dtype)
    for j in range(3):
        o_ref[8 + j] = y[j].astype(o_ref.dtype)


def simplenet_forward(x, params, *, target_tb=8192):
    """x: (B, 4) float32. params: dict of (out,in) weights / (out,) biases.

    Returns (output (B, 3), hidden (B, 8)) — same semantics as SimpleNet.forward.
    """
    B = x.shape[0]
    assert x.shape[1] == 4, "SimpleNet expects 4 input features"

    # Tile choice: as big as possible (amortise the ~0.35 us/step overhead),
    # but keep >= 2 tiles whenever the batch allows so both v7x TCs get work.
    half = _round_up(max(1, (B + 1) // 2), _MIN_TB)
    tb = max(_MIN_TB, min(_round_up(target_tb, _MIN_TB), half))
    Bp = _round_up(B, tb)
    n_tiles = Bp // tb
    rt = tb // _LANES            # sublane-rows per tile (multiple of 8)
    Rp = Bp // _LANES            # total sublane-rows

    # Feature-major dense slabs: (feature, row, lane); pad ragged batch with
    # zeros (columns are independent, padded results are dropped below).
    xt = jnp.transpose(x.astype(jnp.float32))            # (4, B)
    if Bp != B:
        xt = jnp.pad(xt, ((0, 0), (0, Bp - B)))          # (4, Bp)
    x_slab = xt.reshape(4, Rp, _LANES)

    smem_spec = pl.BlockSpec(memory_space=pltpu.MemorySpace.SMEM)
    weight_args, weight_specs = [], []
    for i in range(1, 5):
        weight_args += [params[f"w{i}"], params[f"b{i}"]]
        weight_specs += [smem_spec, smem_spec]

    slab = pl.pallas_call(
        simplenet_kernel,
        out_shape=jax.ShapeDtypeStruct((11, Rp, _LANES), jnp.float32),
        grid=(n_tiles,),
        in_specs=[pl.BlockSpec((4, rt, _LANES), lambda i: (0, i, 0))]
                 + weight_specs,
        out_specs=pl.BlockSpec((11, rt, _LANES), lambda i: (0, i, 0)),
        compiler_params=pltpu.CompilerParams(
            dimension_semantics=("parallel",)),   # shard batch tiles across TCs (v7x)
    )(x_slab, *weight_args)

    # Back to PyTorch's (batch, feature) convention; drop padded columns.
    slab = slab.reshape(11, Bp)
    hidden = jnp.transpose(slab[:8, :B])        # (B, 8) post-3rd-ReLU activation
    output = jnp.transpose(slab[8:11, :B])      # (B, 3)
    return output, hidden


def init_params(key):
    """Deterministic synthetic init mirroring nn.Linear(in, out).

    Weights stored torch-style as (out, in); biases as (out,).
    """
    params = {}
    for i, (din, dout) in enumerate(_LAYER_DIMS, start=1):
        key, kw, kb = jax.random.split(key, 3)
        bound = 1.0 / jnp.sqrt(float(din))               # torch default uniform bound
        params[f"w{i}"] = jax.random.uniform(
            kw, (dout, din), jnp.float32, minval=-bound, maxval=bound)
        params[f"b{i}"] = jax.random.uniform(
            kb, (dout,), jnp.float32, minval=-bound, maxval=bound)
    return params


def reference_forward(x, params):
    """Plain-JAX reference of SimpleNet.forward (batch-major layout)."""
    h = jnp.maximum(x @ params["w1"].T + params["b1"], 0.0)
    h = jnp.maximum(h @ params["w2"].T + params["b2"], 0.0)
    h = jnp.maximum(h @ params["w3"].T + params["b3"], 0.0)
    out = h @ params["w4"].T + params["b4"]
    return out, h


if __name__ == "__main__":
    key = jax.random.PRNGKey(0)
    key, kx = jax.random.split(key)

    B = 8                                    # iris-style: 4 input features
    x = jax.random.normal(kx, (B, 4), jnp.float32)
    params = init_params(key)

    output, hidden = simplenet_forward(x, params)
    output = jax.block_until_ready(output)
    hidden = jax.block_until_ready(hidden)

    ref_out, ref_hidden = reference_forward(x, params)
    assert output.shape == (B, 3) and hidden.shape == (B, 8)
    assert jnp.allclose(output, ref_out, atol=1e-5, rtol=1e-5)
    assert jnp.allclose(hidden, ref_hidden, atol=1e-5, rtol=1e-5)

    print("KERNEL_OK")
</pallas_src>

<mosaic_0001>
module attributes {stable_mosaic.version = 11 : i64} {
  func.func @simplenet_kernel(%arg0: i32, %arg1: memref<4x8x128xf32, #tpu.memory_space<vmem>>, %arg2: memref<16x4xf32, #tpu.memory_space<smem>>, %arg3: memref<16xf32, #tpu.memory_space<smem>>, %arg4: memref<12x16xf32, #tpu.memory_space<smem>>, %arg5: memref<12xf32, #tpu.memory_space<smem>>, %arg6: memref<8x12xf32, #tpu.memory_space<smem>>, %arg7: memref<8xf32, #tpu.memory_space<smem>>, %arg8: memref<3x8xf32, #tpu.memory_space<smem>>, %arg9: memref<3xf32, #tpu.memory_space<smem>>, %arg10: memref<11x8x128xf32, #tpu.memory_space<vmem>>) attributes {dimension_semantics = [#tpu.dimension_semantics<parallel>], iteration_bounds = array<i64: 1>, scalar_prefetch = 0 : i64, scratch_operands = 0 : i64, tpu.core_type = #tpu.core_type<tc>, window_params = [{transform_indices = @transform_0, window_bounds = array<i64: 4, 8, 128>}, {transform_indices = @transform_1, window_bounds = array<i64: 16, 4>}, {transform_indices = @transform_2, window_bounds = array<i64: 16>}, {transform_indices = @transform_3, window_bounds = array<i64: 12, 16>}, {transform_indices = @transform_4, window_bounds = array<i64: 12>}, {transform_indices = @transform_5, window_bounds = array<i64: 8, 12>}, {transform_indices = @transform_6, window_bounds = array<i64: 8>}, {transform_indices = @transform_7, window_bounds = array<i64: 3, 8>}, {transform_indices = @transform_8, window_bounds = array<i64: 3>}, {transform_indices = @transform_9, window_bounds = array<i64: 11, 8, 128>}]} {
    %c0 = arith.constant 0 : index
    %c0_0 = arith.constant 0 : index
    %c0_1 = arith.constant 0 : index
    %0 = vector.load %arg1[%c0, %c0_0, %c0_1] : memref<4x8x128xf32, #tpu.memory_space<vmem>>, vector<1x8x128xf32>
    %1 = vector.shape_cast %0 : vector<1x8x128xf32> to vector<8x128xf32>
    %c1 = arith.constant 1 : index
    %c0_2 = arith.constant 0 : index
    %c0_3 = arith.constant 0 : index
    %2 = vector.load %arg1[%c1, %c0_2, %c0_3] : memref<4x8x128xf32, #tpu.memory_space<vmem>>, vector<1x8x128xf32>
    %3 = vector.shape_cast %2 : vector<1x8x128xf32> to vector<8x128xf32>
    %c2 = arith.constant 2 : index
    %c0_4 = arith.constant 0 : index
    %c0_5 = arith.constant 0 : index
    %4 = vector.load %arg1[%c2, %c0_4, %c0_5] : memref<4x8x128xf32, #tpu.memory_space<vmem>>, vector<1x8x128xf32>
    %5 = vector.shape_cast %4 : vector<1x8x128xf32> to vector<8x128xf32>
    %c3 = arith.constant 3 : index
    %c0_6 = arith.constant 0 : index
    %c0_7 = arith.constant 0 : index
    %6 = vector.load %arg1[%c3, %c0_6, %c0_7] : memref<4x8x128xf32, #tpu.memory_space<vmem>>, vector<1x8x128xf32>
    %7 = vector.shape_cast %6 : vector<1x8x128xf32> to vector<8x128xf32>
    %c0_8 = arith.constant 0 : index
    %c0_9 = arith.constant 0 : index
    %8 = memref.load %arg2[%c0_8, %c0_9] : memref<16x4xf32, #tpu.memory_space<smem>>
    %9 = vector.broadcast %8 : f32 to vector<8x128xf32>
    %10 = arith.mulf %1, %9 : vector<8x128xf32>
    %c0_10 = arith.constant 0 : index
    %11 = memref.load %arg3[%c0_10] : memref<16xf32, #tpu.memory_space<smem>>
    %12 = vector.broadcast %11 : f32 to vector<8x128xf32>
    %13 = arith.addf %10, %12 : vector<8x128xf32>
    %c0_11 = arith.constant 0 : index
    %c1_12 = arith.constant 1 : index
    %14 = memref.load %arg2[%c0_11, %c1_12] : memref<16x4xf32, #tpu.memory_space<smem>>
    %15 = vector.broadcast %14 : f32 to vector<8x128xf32>
    %16 = arith.mulf %3, %15 : vector<8x128xf32>
    %17 = arith.addf %13, %16 : vector<8x128xf32>
    %c0_13 = arith.constant 0 : index
    %c2_14 = arith.constant 2 : index
    %18 = memref.load %arg2[%c0_13, %c2_14] : memref<16x4xf32, #tpu.memory_space<smem>>
    %19 = vector.broadcast %18 : f32 to vector<8x128xf32>
    %20 = arith.mulf %5, %19 : vector<8x128xf32>
    %21 = arith.addf %17, %20 : vector<8x128xf32>
    %c0_15 = arith.constant 0 : index
    %c3_16 = arith.constant 3 : index
    %22 = memref.load %arg2[%c0_15, %c3_16] : memref<16x4xf32, #tpu.memory_space<smem>>
    %23 = vector.broadcast %22 : f32 to vector<8x128xf32>
    %24 = arith.mulf %7, %23 : vector<8x128xf32>
    %25 = arith.addf %21, %24 : vector<8x128xf32>
    %cst = arith.constant 0.000000e+00 : f32
    %26 = vector.broadcast %cst : f32 to vector<8x128xf32>
    %27 = arith.maximumf %25, %26 : vector<8x128xf32>
    %c1_17 = arith.constant 1 : index
    %c0_18 = arith.constant 0 : index
    %28 = memref.load %arg2[%c1_17, %c0_18] : memref<16x4xf32, #tpu.memory_space<smem>>
    %29 = vector.broadcast %28 : f32 to vector<8x128xf32>
    %30 = arith.mulf %1, %29 : vector<8x128xf32>
    %c1_19 = arith.constant 1 : index
    %31 = memref.load %arg3[%c1_19] : memref<16xf32, #tpu.memory_space<smem>>
    %32 = vector.broadcast %31 : f32 to vector<8x128xf32>
    %33 = arith.addf %30, %32 : vector<8x128xf32>
    %c1_20 = arith.constant 1 : index
    %c1_21 = arith.constant 1 : index
    %34 = memref.load %arg2[%c1_20, %c1_21] : memref<16x4xf32, #tpu.memory_space<smem>>
    %35 = vector.broadcast %34 : f32 to vector<8x128xf32>
    %36 = arith.mulf %3, %35 : vector<8x128xf32>
    %37 = arith.addf %33, %36 : vector<8x128xf32>
    %c1_22 = arith.constant 1 : index
    %c2_23 = arith.constant 2 : index
    %38 = memref.load %arg2[%c1_22, %c2_23] : memref<16x4xf32, #tpu.memory_space<smem>>
    %39 = vector.broadcast %38 : f32 to vector<8x128xf32>
    %40 = arith.mulf %5, %39 : vector<8x128xf32>
    %41 = arith.addf %37, %40 : vector<8x128xf32>
    %c1_24 = arith.constant 1 : index
    %c3_25 = arith.constant 3 : index
    %42 = memref.load %arg2[%c1_24, %c3_25] : memref<16x4xf32, #tpu.memory_space<smem>>
    %43 = vector.broadcast %42 : f32 to vector<8x128xf32>
    %44 = arith.mulf %7, %43 : vector<8x128xf32>
    %45 = arith.addf %41, %44 : vector<8x128xf32>
    %cst_26 = arith.constant 0.000000e+00 : f32
    %46 = vector.broadcast %cst_26 : f32 to vector<8x128xf32>
    %47 = arith.maximumf %45, %46 : vector<8x128xf32>
    %c2_27 = arith.constant 2 : index
    %c0_28 = arith.constant 0 : index
    %48 = memref.load %arg2[%c2_27, %c0_28] : memref<16x4xf32, #tpu.memory_space<smem>>
    %49 = vector.broadcast %48 : f32 to vector<8x128xf32>
    %50 = arith.mulf %1, %49 : vector<8x128xf32>
    %c2_29 = arith.constant 2 : index
    %51 = memref.load %arg3[%c2_29] : memref<16xf32, #tpu.memory_space<smem>>
    %52 = vector.broadcast %51 : f32 to vector<8x128xf32>
    %53 = arith.addf %50, %52 : vector<8x128xf32>
    %c2_30 = arith.constant 2 : index
    %c1_31 = arith.constant 1 : index
    %54 = memref.load %arg2[%c2_30, %c1_31] : memref<16x4xf32, #tpu.memory_space<smem>>
    %55 = vector.broadcast %54 : f32 to vector<8x128xf32>
    %56 = arith.mulf %3, %55 : vector<8x128xf32>
    %57 = arith.addf %53, %56 : vector<8x128xf32>
    %c2_32 = arith.constant 2 : index
    %c2_33 = arith.constant 2 : index
    %58 = memref.load %arg2[%c2_32, %c2_33] : memref<16x4xf32, #tpu.memory_space<smem>>
    %59 = vector.broadcast %58 : f32 to vector<8x128xf32>
    %60 = arith.mulf %5, %59 : vector<8x128xf32>
    %61 = arith.addf %57, %60 : vector<8x128xf32>
    %c2_34 = arith.constant 2 : index
    %c3_35 = arith.constant 3 : index
    %62 = memref.load %arg2[%c2_34, %c3_35] : memref<16x4xf32, #tpu.memory_space<smem>>
    %63 = vector.broadcast %62 : f32 to vector<8x128xf32>
    %64 = arith.mulf %7, %63 : vector<8x128xf32>
    %65 = arith.addf %61, %64 : vector<8x128xf32>
    %cst_36 = arith.constant 0.000000e+00 : f32
    %66 = vector.broadcast %cst_36 : f32 to vector<8x128xf32>
    %67 = arith.maximumf %65, %66 : vector<8x128xf32>
    %c3_37 = arith.constant 3 : index
    %c0_38 = arith.constant 0 : index
    %68 = memref.load %arg2[%c3_37, %c0_38] : memref<16x4xf32, #tpu.memory_space<smem>>
    %69 = vector.broadcast %68 : f32 to vector<8x128xf32>
    %70 = arith.mulf %1, %69 : vector<8x128xf32>
    %c3_39 = arith.constant 3 : index
    %71 = memref.load %arg3[%c3_39] : memref<16xf32, #tpu.memory_space<smem>>
    %72 = vector.broadcast %71 : f32 to vector<8x128xf32>
    %73 = arith.addf %70, %72 : vector<8x128xf32>
    %c3_40 = arith.constant 3 : index
    %c1_41 = arith.constant 1 : index
    %74 = memref.load %arg2[%c3_40, %c1_41] : memref<16x4xf32, #tpu.memory_space<smem>>
    %75 = vector.broadcast %74 : f32 to vector<8x128xf32>
    %76 = arith.mulf %3, %75 : vector<8x128xf32>
    %77 = arith.addf %73, %76 : vector<8x128xf32>
    %c3_42 = arith.constant 3 : index
    %c2_43 = arith.constant 2 : index
    %78 = memref.load %arg2[%c3_42, %c2_43] : memref<16x4xf32, #tpu.memory_space<smem>>
    %79 = vector.broadcast %78 : f32 to vector<8x128xf32>
    %80 = arith.mulf %5, %79 : vector<8x128xf32>
    %81 = arith.addf %77, %80 : vector<8x128xf32>
    %c3_44 = arith.constant 3 : index
    %c3_45 = arith.constant 3 : index
    %82 = memref.load %arg2[%c3_44, %c3_45] : memref<16x4xf32, #tpu.memory_space<smem>>
    %83 = vector.broadcast %82 : f32 to vector<8x128xf32>
    %84 = arith.mulf %7, %83 : vector<8x128xf32>
    %85 = arith.addf %81, %84 : vector<8x128xf32>
    %cst_46 = arith.constant 0.000000e+00 : f32
    %86 = vector.broadcast %cst_46 : f32 to vector<8x128xf32>
    %87 = arith.maximumf %85, %86 : vector<8x128xf32>
    %c4 = arith.constant 4 : index
    %c0_47 = arith.constant 0 : index
    %88 = memref.load %arg2[%c4, %c0_47] : memref<16x4xf32, #tpu.memory_space<smem>>
    %89 = vector.broadcast %88 : f32 to vector<8x128xf32>
    %90 = arith.mulf %1, %89 : vector<8x128xf32>
    %c4_48 = arith.constant 4 : index
    %91 = memref.load %arg3[%c4_48] : memref<16xf32, #tpu.memory_space<smem>>
    %92 = vector.broadcast %91 : f32 to vector<8x128xf32>
    %93 = arith.addf %90, %92 : vector<8x128xf32>
    %c4_49 = arith.constant 4 : index
    %c1_50 = arith.constant 1 : index
    %94 = memref.load %arg2[%c4_49, %c1_50] : memref<16x4xf32, #tpu.memory_space<smem>>
    %95 = vector.broadcast %94 : f32 to vector<8x128xf32>
    %96 = arith.mulf %3, %95 : vector<8x128xf32>
    %97 = arith.addf %93, %96 : vector<8x128xf32>
    %c4_51 = arith.constant 4 : index
    %c2_52 = arith.constant 2 : index
    %98 = memref.load %arg2[%c4_51, %c2_52] : memref<16x4xf32, #tpu.memory_space<smem>>
    %99 = vector.broadcast %98 : f32 to vector<8x128xf32>
    %100 = arith.mulf %5, %99 : vector<8x128xf32>
    %101 = arith.addf %97, %100 : vector<8x128xf32>
    %c4_53 = arith.constant 4 : index
    %c3_54 = arith.constant 3 : index
    %102 = memref.load %arg2[%c4_53, %c3_54] : memref<16x4xf32, #tpu.memory_space<smem>>
    %103 = vector.broadcast %102 : f32 to vector<8x128xf32>
    %104 = arith.mulf %7, %103 : vector<8x128xf32>
    %105 = arith.addf %101, %104 : vector<8x128xf32>
    %cst_55 = arith.constant 0.000000e+00 : f32
    %106 = vector.broadcast %cst_55 : f32 to vector<8x128xf32>
    %107 = arith.maximumf %105, %106 : vector<8x128xf32>
    %c5 = arith.constant 5 : index
    %c0_56 = arith.constant 0 : index
    %108 = memref.load %arg2[%c5, %c0_56] : memref<16x4xf32, #tpu.memory_space<smem>>
    %109 = vector.broadcast %108 : f32 to vector<8x128xf32>
    %110 = arith.mulf %1, %109 : vector<8x128xf32>
    %c5_57 = arith.constant 5 : index
    %111 = memref.load %arg3[%c5_57] : memref<16xf32, #tpu.memory_space<smem>>
    %112 = vector.broadcast %111 : f32 to vector<8x128xf32>
    %113 = arith.addf %110, %112 : vector<8x128xf32>
    %c5_58 = arith.constant 5 : index
    %c1_59 = arith.constant 1 : index
    %114 = memref.load %arg2[%c5_58, %c1_59] : memref<16x4xf32, #tpu.memory_space<smem>>
    %115 = vector.broadcast %114 : f32 to vector<8x128xf32>
    %116 = arith.mulf %3, %115 : vector<8x128xf32>
    %117 = arith.addf %113, %116 : vector<8x128xf32>
    %c5_60 = arith.constant 5 : index
    %c2_61 = arith.constant 2 : index
    %118 = memref.load %arg2[%c5_60, %c2_61] : memref<16x4xf32, #tpu.memory_space<smem>>
    %119 = vector.broadcast %118 : f32 to vector<8x128xf32>
    %120 = arith.mulf %5, %119 : vector<8x128xf32>
    %121 = arith.addf %117, %120 : vector<8x128xf32>
    %c5_62 = arith.constant 5 : index
    %c3_63 = arith.constant 3 : index
    %122 = memref.load %arg2[%c5_62, %c3_63] : memref<16x4xf32, #tpu.memory_space<smem>>
    %123 = vector.broadcast %122 : f32 to vector<8x128xf32>
    %124 = arith.mulf %7, %123 : vector<8x128xf32>
    %125 = arith.addf %121, %124 : vector<8x128xf32>
    %cst_64 = arith.constant 0.000000e+00 : f32
    %126 = vector.broadcast %cst_64 : f32 to vector<8x128xf32>
    %127 = arith.maximumf %125, %126 : vector<8x128xf32>
    %c6 = arith.constant 6 : index
    %c0_65 = arith.constant 0 : index
    %128 = memref.load %arg2[%c6, %c0_65] : memref<16x4xf32, #tpu.memory_space<smem>>
    %129 = vector.broadcast %128 : f32 to vector<8x128xf32>
    %130 = arith.mulf %1, %129 : vector<8x128xf32>
    %c6_66 = arith.constant 6 : index
    %131 = memref.load %arg3[%c6_66] : memref<16xf32, #tpu.memory_space<smem>>
    %132 = vector.broadcast %131 : f32 to vector<8x128xf32>
    %133 = arith.addf %130, %132 : vector<8x128xf32>
    %c6_67 = arith.constant 6 : index
    %c1_68 = arith.constant 1 : index
    %134 = memref.load %arg2[%c6_67, %c1_68] : memref<16x4xf32, #tpu.memory_space<smem>>
    %135 = vector.broadcast %134 : f32 to vector<8x128xf32>
    %136 = arith.mulf %3, %135 : vector<8x128xf32>
    %137 = arith.addf %133, %136 : vector<8x128xf32>
    %c6_69 = arith.constant 6 : index
    %c2_70 = arith.constant 2 : index
    %138 = memref.load %arg2[%c6_69, %c2_70] : memref<16x4xf32, #tpu.memory_space<smem>>
    %139 = vector.broadcast %138 : f32 to vector<8x128xf32>
    %140 = arith.mulf %5, %139 : vector<8x128xf32>
    %141 = arith.addf %137, %140 : vector<8x128xf32>
    %c6_71 = arith.constant 6 : index
    %c3_72 = arith.constant 3 : index
    %142 = memref.load %arg2[%c6_71, %c3_72] : memref<16x4xf32, #tpu.memory_space<smem>>
    %143 = vector.broadcast %142 : f32 to vector<8x128xf32>
    %144 = arith.mulf %7, %143 : vector<8x128xf32>
    %145 = arith.addf %141, %144 : vector<8x128xf32>
    %cst_73 = arith.constant 0.000000e+00 : f32
    %146 = vector.broadcast %cst_73 : f32 to vector<8x128xf32>
    %147 = arith.maximumf %145, %146 : vector<8x128xf32>
    %c7 = arith.constant 7 : index
    %c0_74 = arith.constant 0 : index
    %148 = memref.load %arg2[%c7, %c0_74] : memref<16x4xf32, #tpu.memory_space<smem>>
    %149 = vector.broadcast %148 : f32 to vector<8x128xf32>
    %150 = arith.mulf %1, %149 : vector<8x128xf32>
    %c7_75 = arith.constant 7 : index
    %151 = memref.load %arg3[%c7_75] : memref<16xf32, #tpu.memory_space<smem>>
    %152 = vector.broadcast %151 : f32 to vector<8x128xf32>
    %153 = arith.addf %150, %152 : vector<8x128xf32>
    %c7_76 = arith.constant 7 : index
    %c1_77 = arith.constant 1 : index
    %154 = memref.load %arg2[%c7_76, %c1_77] : memref<16x4xf32, #tpu.memory_space<smem>>
    %155 = vector.broadcast %154 : f32 to vector<8x128xf32>
    %156 = arith.mulf %3, %155 : vector<8x128xf32>
    %157 = arith.addf %153, %156 : vector<8x128xf32>
    %c7_78 = arith.constant 7 : index
    %c2_79 = arith.constant 2 : index
    %158 = memref.load %arg2[%c7_78, %c2_79] : memref<16x4xf32, #tpu.memory_space<smem>>
    %159 = vector.broadcast %158 : f32 to vector<8x128xf32>
    %160 = arith.mulf %5, %159 : vector<8x128xf32>
    %161 = arith.addf %157, %160 : vector<8x128xf32>
    %c7_80 = arith.constant 7 : index
    %c3_81 = arith.constant 3 : index
    %162 = memref.load %arg2[%c7_80, %c3_81] : memref<16x4xf32, #tpu.memory_space<smem>>
    %163 = vector.broadcast %162 : f32 to vector<8x128xf32>
    %164 = arith.mulf %7, %163 : vector<8x128xf32>
    %165 = arith.addf %161, %164 : vector<8x128xf32>
    %cst_82 = arith.constant 0.000000e+00 : f32
    %166 = vector.broadcast %cst_82 : f32 to vector<8x128xf32>
    %167 = arith.maximumf %165, %166 : vector<8x128xf32>
    %c8 = arith.constant 8 : index
    %c0_83 = arith.constant 0 : index
    %168 = memref.load %arg2[%c8, %c0_83] : memref<16x4xf32, #tpu.memory_space<smem>>
    %169 = vector.broadcast %168 : f32 to vector<8x128xf32>
    %170 = arith.mulf %1, %169 : vector<8x128xf32>
    %c8_84 = arith.constant 8 : index
    %171 = memref.load %arg3[%c8_84] : memref<16xf32, #tpu.memory_space<smem>>
    %172 = vector.broadcast %171 : f32 to vector<8x128xf32>
    %173 = arith.addf %170, %172 : vector<8x128xf32>
    %c8_85 = arith.constant 8 : index
    %c1_86 = arith.constant 1 : index
    %174 = memref.load %arg2[%c8_85, %c1_86] : memref<16x4xf32, #tpu.memory_space<smem>>
    %175 = vector.broadcast %174 : f32 to vector<8x128xf32>
    %176 = arith.mulf %3, %175 : vector<8x128xf32>
    %177 = arith.addf %173, %176 : vector<8x128xf32>
    %c8_87 = arith.constant 8 : index
    %c2_88 = arith.constant 2 : index
    %178 = memref.load %arg2[%c8_87, %c2_88] : memref<16x4xf32, #tpu.memory_space<smem>>
    %179 = vector.broadcast %178 : f32 to vector<8x128xf32>
    %180 = arith.mulf %5, %179 : vector<8x128xf32>
    %181 = arith.addf %177, %180 : vector<8x128xf32>
    %c8_89 = arith.constant 8 : index
    %c3_90 = arith.constant 3 : index
    %182 = memref.load %arg2[%c8_89, %c3_90] : memref<16x4xf32, #tpu.memory_space<smem>>
    %183 = vector.broadcast %182 : f32 to vector<8x128xf32>
    %184 = arith.mulf %7, %183 : vector<8x128xf32>
    %185 = arith.addf %181, %184 : vector<8x128xf32>
    %cst_91 = arith.constant 0.000000e+00 : f32
    %186 = vector.broadcast %cst_91 : f32 to vector<8x128xf32>
    %187 = arith.maximumf %185, %186 : vector<8x128xf32>
    %c9 = arith.constant 9 : index
    %c0_92 = arith.constant 0 : index
    %188 = memref.load %arg2[%c9, %c0_92] : memref<16x4xf32, #tpu.memory_space<smem>>
    %189 = vector.broadcast %188 : f32 to vector<8x128xf32>
    %190 = arith.mulf %1, %189 : vector<8x128xf32>
    %c9_93 = arith.constant 9 : index
    %191 = memref.load %arg3[%c9_93] : memref<16xf32, #tpu.memory_space<smem>>
    %192 = vector.broadcast %191 : f32 to vector<8x128xf32>
    %193 = arith.addf %190, %192 : vector<8x128xf32>
    %c9_94 = arith.constant 9 : index
    %c1_95 = arith.constant 1 : index
    %194 = memref.load %arg2[%c9_94, %c1_95] : memref<16x4xf32, #tpu.memory_space<smem>>
    %195 = vector.broadcast %194 : f32 to vector<8x128xf32>
    %196 = arith.mulf %3, %195 : vector<8x128xf32>
    %197 = arith.addf %193, %196 : vector<8x128xf32>
    %c9_96 = arith.constant 9 : index
    %c2_97 = arith.constant 2 : index
    %198 = memref.load %arg2[%c9_96, %c2_97] : memref<16x4xf32, #tpu.memory_space<smem>>
    %199 = vector.broadcast %198 : f32 to vector<8x128xf32>
    %200 = arith.mulf %5, %199 : vector<8x128xf32>
    %201 = arith.addf %197, %200 : vector<8x128xf32>
    %c9_98 = arith.constant 9 : index
    %c3_99 = arith.constant 3 : index
    %202 = memref.load %arg2[%c9_98, %c3_99] : memref<16x4xf32, #tpu.memory_space<smem>>
    %203 = vector.broadcast %202 : f32 to vector<8x128xf32>
    %204 = arith.mulf %7, %203 : vector<8x128xf32>
    %205 = arith.addf %201, %204 : vector<8x128xf32>
    %cst_100 = arith.constant 0.000000e+00 : f32
    %206 = vector.broadcast %cst_100 : f32 to vector<8x128xf32>
    %207 = arith.maximumf %205, %206 : vector<8x128xf32>
    %c10 = arith.constant 10 : index
    %c0_101 = arith.constant 0 : index
    %208 = memref.load %arg2[%c10, %c0_101] : memref<16x4xf32, #tpu.memory_space<smem>>
    %209 = vector.broadcast %208 : f32 to vector<8x128xf32>
    %210 = arith.mulf %1, %209 : vector<8x128xf32>
    %c10_102 = arith.constant 10 : index
    %211 = memref.load %arg3[%c10_102] : memref<16xf32, #tpu.memory_space<smem>>
    %212 = vector.broadcast %211 : f32 to vector<8x128xf32>
    %213 = arith.addf %210, %212 : vector<8x128xf32>
    %c10_103 = arith.constant 10 : index
    %c1_104 = arith.constant 1 : index
    %214 = memref.load %arg2[%c10_103, %c1_104] : memref<16x4xf32, #tpu.memory_space<smem>>
    %215 = vector.broadcast %214 : f32 to vector<8x128xf32>
    %216 = arith.mulf %3, %215 : vector<8x128xf32>
    %217 = arith.addf %213, %216 : vector<8x128xf32>
    %c10_105 = arith.constant 10 : index
    %c2_106 = arith.constant 2 : index
    %218 = memref.load %arg2[%c10_105, %c2_106] : memref<16x4xf32, #tpu.memory_space<smem>>
    %219 = vector.broadcast %218 : f32 to vector<8x128xf32>
    %220 = arith.mulf %5, %219 : vector<8x128xf32>
    %221 = arith.addf %217, %220 : vector<8x128xf32>
    %c10_107 = arith.constant 10 : index
    %c3_108 = arith.constant 3 : index
    %222 = memref.load %arg2[%c10_107, %c3_108] : memref<16x4xf32, #tpu.memory_space<smem>>
    %223 = vector.broadcast %222 : f32 to vector<8x128xf32>
    %224 = arith.mulf %7, %223 : vector<8x128xf32>
    %225 = arith.addf %221, %224 : vector<8x128xf32>
    %cst_109 = arith.constant 0.000000e+00 : f32
    %226 = vector.broadcast %cst_109 : f32 to vector<8x128xf32>
    %227 = arith.maximumf %225, %226 : vector<8x128xf32>
    %c11 = arith.constant 11 : index
    %c0_110 = arith.constant 0 : index
    %228 = memref.load %arg2[%c11, %c0_110] : memref<16x4xf32, #tpu.memory_space<smem>>
    %229 = vector.broadcast %228 : f32 to vector<8x128xf32>
    %230 = arith.mulf %1, %229 : vector<8x128xf32>
    %c11_111 = arith.constant 11 : index
    %231 = memref.load %arg3[%c11_111] : memref<16xf32, #tpu.memory_space<smem>>
    %232 = vector.broadcast %231 : f32 to vector<8x128xf32>
    %233 = arith.addf %230, %232 : vector<8x128xf32>
    %c11_112 = arith.constant 11 : index
    %c1_113 = arith.constant 1 : index
    %234 = memref.load %arg2[%c11_112, %c1_113] : memref<16x4xf32, #tpu.memory_space<smem>>
    %235 = vector.broadcast %234 : f32 to vector<8x128xf32>
    %236 = arith.mulf %3, %235 : vector<8x128xf32>
    %237 = arith.addf %233, %236 : vector<8x128xf32>
    %c11_114 = arith.constant 11 : index
    %c2_115 = arith.constant 2 : index
    %238 = memref.load %arg2[%c11_114, %c2_115] : memref<16x4xf32, #tpu.memory_space<smem>>
    %239 = vector.broadcast %238 : f32 to vector<8x128xf32>
    %240 = arith.mulf %5, %239 : vector<8x128xf32>
    %241 = arith.addf %237, %240 : vector<8x128xf32>
    %c11_116 = arith.constant 11 : index
    %c3_117 = arith.constant 3 : index
    %242 = memref.load %arg2[%c11_116, %c3_117] : memref<16x4xf32, #tpu.memory_space<smem>>
    %243 = vector.broadcast %242 : f32 to vector<8x128xf32>
    %244 = arith.mulf %7, %243 : vector<8x128xf32>
    %245 = arith.addf %241, %244 : vector<8x128xf32>
    %cst_118 = arith.constant 0.000000e+00 : f32
    %246 = vector.broadcast %cst_118 : f32 to vector<8x128xf32>
    %247 = arith.maximumf %245, %246 : vector<8x128xf32>
    %c12 = arith.constant 12 : index
    %c0_119 = arith.constant 0 : index
    %248 = memref.load %arg2[%c12, %c0_119] : memref<16x4xf32, #tpu.memory_space<smem>>
    %249 = vector.broadcast %248 : f32 to vector<8x128xf32>
    %250 = arith.mulf %1, %249 : vector<8x128xf32>
    %c12_120 = arith.constant 12 : index
    %251 = memref.load %arg3[%c12_120] : memref<16xf32, #tpu.memory_space<smem>>
    %252 = vector.broadcast %251 : f32 to vector<8x128xf32>
    %253 = arith.addf %250, %252 : vector<8x128xf32>
    %c12_121 = arith.constant 12 : index
    %c1_122 = arith.constant 1 : index
    %254 = memref.load %arg2[%c12_121, %c1_122] : memref<16x4xf32, #tpu.memory_space<smem>>
    %255 = vector.broadcast %254 : f32 to vector<8x128xf32>
    %256 = arith.mulf %3, %255 : vector<8x128xf32>
    %257 = arith.addf %253, %256 : vector<8x128xf32>
    %c12_123 = arith.constant 12 : index
    %c2_124 = arith.constant 2 : index
    %258 = memref.load %arg2[%c12_123, %c2_124] : memref<16x4xf32, #tpu.memory_space<smem>>
    %259 = vector.broadcast %258 : f32 to vector<8x128xf32>
    %260 = arith.mulf %5, %259 : vector<8x128xf32>
    %261 = arith.addf %257, %260 : vector<8x128xf32>
    %c12_125 = arith.constant 12 : index
    %c3_126 = arith.constant 3 : index
    %262 = memref.load %arg2[%c12_125, %c3_126] : memref<16x4xf32, #tpu.memory_space<smem>>
    %263 = vector.broadcast %262 : f32 to vector<8x128xf32>
    %264 = arith.mulf %7, %263 : vector<8x128xf32>
    %265 = arith.addf %261, %264 : vector<8x128xf32>
    %cst_127 = arith.constant 0.000000e+00 : f32
    %266 = vector.broadcast %cst_127 : f32 to vector<8x128xf32>
    %267 = arith.maximumf %265, %266 : vector<8x128xf32>
    %c13 = arith.constant 13 : index
    %c0_128 = arith.constant 0 : index
    %268 = memref.load %arg2[%c13, %c0_128] : memref<16x4xf32, #tpu.memory_space<smem>>
    %269 = vector.broadcast %268 : f32 to vector<8x128xf32>
    %270 = arith.mulf %1, %269 : vector<8x128xf32>
    %c13_129 = arith.constant 13 : index
    %271 = memref.load %arg3[%c13_129] : memref<16xf32, #tpu.memory_space<smem>>
    %272 = vector.broadcast %271 : f32 to vector<8x128xf32>
    %273 = arith.addf %270, %272 : vector<8x128xf32>
    %c13_130 = arith.constant 13 : index
    %c1_131 = arith.constant 1 : index
    %274 = memref.load %arg2[%c13_130, %c1_131] : memref<16x4xf32, #tpu.memory_space<smem>>
    %275 = vector.broadcast %274 : f32 to vector<8x128xf32>
    %276 = arith.mulf %3, %275 : vector<8x128xf32>
    %277 = arith.addf %273, %276 : vector<8x128xf32>
    %c13_132 = arith.constant 13 : index
    %c2_133 = arith.constant 2 : index
    %278 = memref.load %arg2[%c13_132, %c2_133] : memref<16x4xf32, #tpu.memory_space<smem>>
    %279 = vector.broadcast %278 : f32 to vector<8x128xf32>
    %280 = arith.mulf %5, %279 : vector<8x128xf32>
    %281 = arith.addf %277, %280 : vector<8x128xf32>
    %c13_134 = arith.constant 13 : index
    %c3_135 = arith.constant 3 : index
    %282 = memref.load %arg2[%c13_134, %c3_135] : memref<16x4xf32, #tpu.memory_space<smem>>
    %283 = vector.broadcast %282 : f32 to vector<8x128xf32>
    %284 = arith.mulf %7, %283 : vector<8x128xf32>
    %285 = arith.addf %281, %284 : vector<8x128xf32>
    %cst_136 = arith.constant 0.000000e+00 : f32
    %286 = vector.broadcast %cst_136 : f32 to vector<8x128xf32>
    %287 = arith.maximumf %285, %286 : vector<8x128xf32>
    %c14 = arith.constant 14 : index
    %c0_137 = arith.constant 0 : index
    %288 = memref.load %arg2[%c14, %c0_137] : memref<16x4xf32, #tpu.memory_space<smem>>
    %289 = vector.broadcast %288 : f32 to vector<8x128xf32>
    %290 = arith.mulf %1, %289 : vector<8x128xf32>
    %c14_138 = arith.constant 14 : index
    %291 = memref.load %arg3[%c14_138] : memref<16xf32, #tpu.memory_space<smem>>
    %292 = vector.broadcast %291 : f32 to vector<8x128xf32>
    %293 = arith.addf %290, %292 : vector<8x128xf32>
    %c14_139 = arith.constant 14 : index
    %c1_140 = arith.constant 1 : index
    %294 = memref.load %arg2[%c14_139, %c1_140] : memref<16x4xf32, #tpu.memory_space<smem>>
    %295 = vector.broadcast %294 : f32 to vector<8x128xf32>
    %296 = arith.mulf %3, %295 : vector<8x128xf32>
    %297 = arith.addf %293, %296 : vector<8x128xf32>
    %c14_141 = arith.constant 14 : index
    %c2_142 = arith.constant 2 : index
    %298 = memref.load %arg2[%c14_141, %c2_142] : memref<16x4xf32, #tpu.memory_space<smem>>
    %299 = vector.broadcast %298 : f32 to vector<8x128xf32>
    %300 = arith.mulf %5, %299 : vector<8x128xf32>
    %301 = arith.addf %297, %300 : vector<8x128xf32>
    %c14_143 = arith.constant 14 : index
    %c3_144 = arith.constant 3 : index
    %302 = memref.load %arg2[%c14_143, %c3_144] : memref<16x4xf32, #tpu.memory_space<smem>>
    %303 = vector.broadcast %302 : f32 to vector<8x128xf32>
    %304 = arith.mulf %7, %303 : vector<8x128xf32>
    %305 = arith.addf %301, %304 : vector<8x128xf32>
    %cst_145 = arith.constant 0.000000e+00 : f32
    %306 = vector.broadcast %cst_145 : f32 to vector<8x128xf32>
    %307 = arith.maximumf %305, %306 : vector<8x128xf32>
    %c15 = arith.constant 15 : index
    %c0_146 = arith.constant 0 : index
    %308 = memref.load %arg2[%c15, %c0_146] : memref<16x4xf32, #tpu.memory_space<smem>>
    %309 = vector.broadcast %308 : f32 to vector<8x128xf32>
    %310 = arith.mulf %1, %309 : vector<8x128xf32>
    %c15_147 = arith.constant 15 : index
    %311 = memref.load %arg3[%c15_147] : memref<16xf32, #tpu.memory_space<smem>>
    %312 = vector.broadcast %311 : f32 to vector<8x128xf32>
    %313 = arith.addf %310, %312 : vector<8x128xf32>
    %c15_148 = arith.constant 15 : index
    %c1_149 = arith.constant 1 : index
    %314 = memref.load %arg2[%c15_148, %c1_149] : memref<16x4xf32, #tpu.memory_space<smem>>
    %315 = vector.broadcast %314 : f32 to vector<8x128xf32>
    %316 = arith.mulf %3, %315 : vector<8x128xf32>
    %317 = arith.addf %313, %316 : vector<8x128xf32>
    %c15_150 = arith.constant 15 : index
    %c2_151 = arith.constant 2 : index
    %318 = memref.load %arg2[%c15_150, %c2_151] : memref<16x4xf32, #tpu.memory_space<smem>>
    %319 = vector.broadcast %318 : f32 to vector<8x128xf32>
    %320 = arith.mulf %5, %319 : vector<8x128xf32>
    %321 = arith.addf %317, %320 : vector<8x128xf32>
    %c15_152 = arith.constant 15 : index
    %c3_153 = arith.constant 3 : index
    %322 = memref.load %arg2[%c15_152, %c3_153] : memref<16x4xf32, #tpu.memory_space<smem>>
    %323 = vector.broadcast %322 : f32 to vector<8x128xf32>
    %324 = arith.mulf %7, %323 : vector<8x128xf32>
    %325 = arith.addf %321, %324 : vector<8x128xf32>
    %cst_154 = arith.constant 0.000000e+00 : f32
    %326 = vector.broadcast %cst_154 : f32 to vector<8x128xf32>
    %327 = arith.maximumf %325, %326 : vector<8x128xf32>
    %c0_155 = arith.constant 0 : index
    %c0_156 = arith.constant 0 : index
    %328 = memref.load %arg4[%c0_155, %c0_156] : memref<12x16xf32, #tpu.memory_space<smem>>
    %329 = vector.broadcast %328 : f32 to vector<8x128xf32>
    %330 = arith.mulf %27, %329 : vector<8x128xf32>
    %c0_157 = arith.constant 0 : index
    %331 = memref.load %arg5[%c0_157] : memref<12xf32, #tpu.memory_space<smem>>
    %332 = vector.broadcast %331 : f32 to vector<8x128xf32>
    %333 = arith.addf %330, %332 : vector<8x128xf32>
    %c0_158 = arith.constant 0 : index
    %c1_159 = arith.constant 1 : index
    %334 = memref.load %arg4[%c0_158, %c1_159] : memref<12x16xf32, #tpu.memory_space<smem>>
    %335 = vector.broadcast %334 : f32 to vector<8x128xf32>
    %336 = arith.mulf %47, %335 : vector<8x128xf32>
    %337 = arith.addf %333, %336 : vector<8x128xf32>
    %c0_160 = arith.constant 0 : index
    %c2_161 = arith.constant 2 : index
    %338 = memref.load %arg4[%c0_160, %c2_161] : memref<12x16xf32, #tpu.memory_space<smem>>
    %339 = vector.broadcast %338 : f32 to vector<8x128xf32>
    %340 = arith.mulf %67, %339 : vector<8x128xf32>
    %341 = arith.addf %337, %340 : vector<8x128xf32>
    %c0_162 = arith.constant 0 : index
    %c3_163 = arith.constant 3 : index
    %342 = memref.load %arg4[%c0_162, %c3_163] : memref<12x16xf32, #tpu.memory_space<smem>>
    %343 = vector.broadcast %342 : f32 to vector<8x128xf32>
    %344 = arith.mulf %87, %343 : vector<8x128xf32>
    %345 = arith.addf %341, %344 : vector<8x128xf32>
    %c0_164 = arith.constant 0 : index
    %c4_165 = arith.constant 4 : index
    %346 = memref.load %arg4[%c0_164, %c4_165] : memref<12x16xf32, #tpu.memory_space<smem>>
    %347 = vector.broadcast %346 : f32 to vector<8x128xf32>
    %348 = arith.mulf %107, %347 : vector<8x128xf32>
    %349 = arith.addf %345, %348 : vector<8x128xf32>
    %c0_166 = arith.constant 0 : index
    %c5_167 = arith.constant 5 : index
    %350 = memref.load %arg4[%c0_166, %c5_167] : memref<12x16xf32, #tpu.memory_space<smem>>
    %351 = vector.broadcast %350 : f32 to vector<8x128xf32>
    %352 = arith.mulf %127, %351 : vector<8x128xf32>
    %353 = arith.addf %349, %352 : vector<8x128xf32>
    %c0_168 = arith.constant 0 : index
    %c6_169 = arith.constant 6 : index
    %354 = memref.load %arg4[%c0_168, %c6_169] : memref<12x16xf32, #tpu.memory_space<smem>>
    %355 = vector.broadcast %354 : f32 to vector<8x128xf32>
    %356 = arith.mulf %147, %355 : vector<8x128xf32>
    %357 = arith.addf %353, %356 : vector<8x128xf32>
    %c0_170 = arith.constant 0 : index
    %c7_171 = arith.constant 7 : index
    %358 = memref.load %arg4[%c0_170, %c7_171] : memref<12x16xf32, #tpu.memory_space<smem>>
    %359 = vector.broadcast %358 : f32 to vector<8x128xf32>
    %360 = arith.mulf %167, %359 : vector<8x128xf32>
    %361 = arith.addf %357, %360 : vector<8x128xf32>
    %c0_172 = arith.constant 0 : index
    %c8_173 = arith.constant 8 : index
    %362 = memref.load %arg4[%c0_172, %c8_173] : memref<12x16xf32, #tpu.memory_space<smem>>
    %363 = vector.broadcast %362 : f32 to vector<8x128xf32>
    %364 = arith.mulf %187, %363 : vector<8x128xf32>
    %365 = arith.addf %361, %364 : vector<8x128xf32>
    %c0_174 = arith.constant 0 : index
    %c9_175 = arith.constant 9 : index
    %366 = memref.load %arg4[%c0_174, %c9_175] : memref<12x16xf32, #tpu.memory_space<smem>>
    %367 = vector.broadcast %366 : f32 to vector<8x128xf32>
    %368 = arith.mulf %207, %367 : vector<8x128xf32>
    %369 = arith.addf %365, %368 : vector<8x128xf32>
    %c0_176 = arith.constant 0 : index
    %c10_177 = arith.constant 10 : index
    %370 = memref.load %arg4[%c0_176, %c10_177] : memref<12x16xf32, #tpu.memory_space<smem>>
    %371 = vector.broadcast %370 : f32 to vector<8x128xf32>
    %372 = arith.mulf %227, %371 : vector<8x128xf32>
    %373 = arith.addf %369, %372 : vector<8x128xf32>
    %c0_178 = arith.constant 0 : index
    %c11_179 = arith.constant 11 : index
    %374 = memref.load %arg4[%c0_178, %c11_179] : memref<12x16xf32, #tpu.memory_space<smem>>
    %375 = vector.broadcast %374 : f32 to vector<8x128xf32>
    %376 = arith.mulf %247, %375 : vector<8x128xf32>
    %377 = arith.addf %373, %376 : vector<8x128xf32>
    %c0_180 = arith.constant 0 : index
    %c12_181 = arith.constant 12 : index
    %378 = memref.load %arg4[%c0_180, %c12_181] : memref<12x16xf32, #tpu.memory_space<smem>>
    %379 = vector.broadcast %378 : f32 to vector<8x128xf32>
    %380 = arith.mulf %267, %379 : vector<8x128xf32>
    %381 = arith.addf %377, %380 : vector<8x128xf32>
    %c0_182 = arith.constant 0 : index
    %c13_183 = arith.constant 13 : index
    %382 = memref.load %arg4[%c0_182, %c13_183] : memref<12x16xf32, #tpu.memory_space<smem>>
    %383 = vector.broadcast %382 : f32 to vector<8x128xf32>
    %384 = arith.mulf %287, %383 : vector<8x128xf32>
    %385 = arith.addf %381, %384 : vector<8x128xf32>
    %c0_184 = arith.constant 0 : index
    %c14_185 = arith.constant 14 : index
    %386 = memref.load %arg4[%c0_184, %c14_185] : memref<12x16xf32, #tpu.memory_space<smem>>
    %387 = vector.broadcast %386 : f32 to vector<8x128xf32>
    %388 = arith.mulf %307, %387 : vector<8x128xf32>
    %389 = arith.addf %385, %388 : vector<8x128xf32>
    %c0_186 = arith.constant 0 : index
    %c15_187 = arith.constant 15 : index
    %390 = memref.load %arg4[%c0_186, %c15_187] : memref<12x16xf32, #tpu.memory_space<smem>>
    %391 = vector.broadcast %390 : f32 to vector<8x128xf32>
    %392 = arith.mulf %327, %391 : vector<8x128xf32>
    %393 = arith.addf %389, %392 : vector<8x128xf32>
    %cst_188 = arith.constant 0.000000e+00 : f32
    %394 = vector.broadcast %cst_188 : f32 to vector<8x128xf32>
    %395 = arith.maximumf %393, %394 : vector<8x128xf32>
    %c1_189 = arith.constant 1 : index
    %c0_190 = arith.constant 0 : index
    %396 = memref.load %arg4[%c1_189, %c0_190] : memref<12x16xf32, #tpu.memory_space<smem>>
    %397 = vector.broadcast %396 : f32 to vector<8x128xf32>
    %398 = arith.mulf %27, %397 : vector<8x128xf32>
    %c1_191 = arith.constant 1 : index
    %399 = memref.load %arg5[%c1_191] : memref<12xf32, #tpu.memory_space<smem>>
    %400 = vector.broadcast %399 : f32 to vector<8x128xf32>
    %401 = arith.addf %398, %400 : vector<8x128xf32>
    %c1_192 = arith.constant 1 : index
    %c1_193 = arith.constant 1 : index
    %402 = memref.load %arg4[%c1_192, %c1_193] : memref<12x16xf32, #tpu.memory_space<smem>>
    %403 = vector.broadcast %402 : f32 to vector<8x128xf32>
    %404 = arith.mulf %47, %403 : vector<8x128xf32>
    %405 = arith.addf %401, %404 : vector<8x128xf32>
    %c1_194 = arith.constant 1 : index
    %c2_195 = arith.constant 2 : index
    %406 = memref.load %arg4[%c1_194, %c2_195] : memref<12x16xf32, #tpu.memory_space<smem>>
    %407 = vector.broadcast %406 : f32 to vector<8x128xf32>
    %408 = arith.mulf %67, %407 : vector<8x128xf32>
    %409 = arith.addf %405, %408 : vector<8x128xf32>
    %c1_196 = arith.constant 1 : index
    %c3_197 = arith.constant 3 : index
    %410 = memref.load %arg4[%c1_196, %c3_197] : memref<12x16xf32, #tpu.memory_space<smem>>
    %411 = vector.broadcast %410 : f32 to vector<8x128xf32>
    %412 = arith.mulf %87, %411 : vector<8x128xf32>
    %413 = arith.addf %409, %412 : vector<8x128xf32>
    %c1_198 = arith.constant 1 : index
    %c4_199 = arith.constant 4 : index
    %414 = memref.load %arg4[%c1_198, %c4_199] : memref<12x16xf32, #tpu.memory_space<smem>>
    %415 = vector.broadcast %414 : f32 to vector<8x128xf32>
    %416 = arith.mulf %107, %415 : vector<8x128xf32>
    %417 = arith.addf %413, %416 : vector<8x128xf32>
    %c1_200 = arith.constant 1 : index
    %c5_201 = arith.constant 5 : index
    %418 = memref.load %arg4[%c1_200, %c5_201] : memref<12x16xf32, #tpu.memory_space<smem>>
    %419 = vector.broadcast %418 : f32 to vector<8x128xf32>
    %420 = arith.mulf %127, %419 : vector<8x128xf32>
    %421 = arith.addf %417, %420 : vector<8x128xf32>
    %c1_202 = arith.constant 1 : index
    %c6_203 = arith.constant 6 : index
    %422 = memref.load %arg4[%c1_202, %c6_203] : memref<12x16xf32, #tpu.memory_space<smem>>
    %423 = vector.broadcast %422 : f32 to vector<8x128xf32>
    %424 = arith.mulf %147, %423 : vector<8x128xf32>
    %425 = arith.addf %421, %424 : vector<8x128xf32>
    %c1_204 = arith.constant 1 : index
    %c7_205 = arith.constant 7 : index
    %426 = memref.load %arg4[%c1_204, %c7_205] : memref<12x16xf32, #tpu.memory_space<smem>>
    %427 = vector.broadcast %426 : f32 to vector<8x128xf32>
    %428 = arith.mulf %167, %427 : vector<8x128xf32>
    %429 = arith.addf %425, %428 : vector<8x128xf32>
    %c1_206 = arith.constant 1 : index
    %c8_207 = arith.constant 8 : index
    %430 = memref.load %arg4[%c1_206, %c8_207] : memref<12x16xf32, #tpu.memory_space<smem>>
    %431 = vector.broadcast %430 : f32 to vector<8x128xf32>
    %432 = arith.mulf %187, %431 : vector<8x128xf32>
    %433 = arith.addf %429, %432 : vector<8x128xf32>
    %c1_208 = arith.constant 1 : index
    %c9_209 = arith.constant 9 : index
    %434 = memref.load %arg4[%c1_208, %c9_209] : memref<12x16xf32, #tpu.memory_space<smem>>
    %435 = vector.broadcast %434 : f32 to vector<8x128xf32>
    %436 = arith.mulf %207, %435 : vector<8x128xf32>
    %437 = arith.addf %433, %436 : vector<8x128xf32>
    %c1_210 = arith.constant 1 : index
    %c10_211 = arith.constant 10 : index
    %438 = memref.load %arg4[%c1_210, %c10_211] : memref<12x16xf32, #tpu.memory_space<smem>>
    %439 = vector.broadcast %438 : f32 to vector<8x128xf32>
    %440 = arith.mulf %227, %439 : vector<8x128xf32>
    %441 = arith.addf %437, %440 : vector<8x128xf32>
    %c1_212 = arith.constant 1 : index
    %c11_213 = arith.constant 11 : index
    %442 = memref.load %arg4[%c1_212, %c11_213] : memref<12x16xf32, #tpu.memory_space<smem>>
    %443 = vector.broadcast %442 : f32 to vector<8x128xf32>
    %444 = arith.mulf %247, %443 : vector<8x128xf32>
    %445 = arith.addf %441, %444 : vector<8x128xf32>
    %c1_214 = arith.constant 1 : index
    %c12_215 = arith.constant 12 : index
    %446 = memref.load %arg4[%c1_214, %c12_215] : memref<12x16xf32, #tpu.memory_space<smem>>
    %447 = vector.broadcast %446 : f32 to vector<8x128xf32>
    %448 = arith.mulf %267, %447 : vector<8x128xf32>
    %449 = arith.addf %445, %448 : vector<8x128xf32>
    %c1_216 = arith.constant 1 : index
    %c13_217 = arith.constant 13 : index
    %450 = memref.load %arg4[%c1_216, %c13_217] : memref<12x16xf32, #tpu.memory_space<smem>>
    %451 = vector.broadcast %450 : f32 to vector<8x128xf32>
    %452 = arith.mulf %287, %451 : vector<8x128xf32>
    %453 = arith.addf %449, %452 : vector<8x128xf32>
    %c1_218 = arith.constant 1 : index
    %c14_219 = arith.constant 14 : index
    %454 = memref.load %arg4[%c1_218, %c14_219] : memref<12x16xf32, #tpu.memory_space<smem>>
    %455 = vector.broadcast %454 : f32 to vector<8x128xf32>
    %456 = arith.mulf %307, %455 : vector<8x128xf32>
    %457 = arith.addf %453, %456 : vector<8x128xf32>
    %c1_220 = arith.constant 1 : index
    %c15_221 = arith.constant 15 : index
    %458 = memref.load %arg4[%c1_220, %c15_221] : memref<12x16xf32, #tpu.memory_space<smem>>
    %459 = vector.broadcast %458 : f32 to vector<8x128xf32>
    %460 = arith.mulf %327, %459 : vector<8x128xf32>
    %461 = arith.addf %457, %460 : vector<8x128xf32>
    %cst_222 = arith.constant 0.000000e+00 : f32
    %462 = vector.broadcast %cst_222 : f32 to vector<8x128xf32>
    %463 = arith.maximumf %461, %462 : vector<8x128xf32>
    %c2_223 = arith.constant 2 : index
    %c0_224 = arith.constant 0 : index
    %464 = memref.load %arg4[%c2_223, %c0_224] : memref<12x16xf32, #tpu.memory_space<smem>>
    %465 = vector.broadcast %464 : f32 to vector<8x128xf32>
    %466 = arith.mulf %27, %465 : vector<8x128xf32>
    %c2_225 = arith.constant 2 : index
    %467 = memref.load %arg5[%c2_225] : memref<12xf32, #tpu.memory_space<smem>>
    %468 = vector.broadcast %467 : f32 to vector<8x128xf32>
    %469 = arith.addf %466, %468 : vector<8x128xf32>
    %c2_226 = arith.constant 2 : index
    %c1_227 = arith.constant 1 : index
    %470 = memref.load %arg4[%c2_226, %c1_227] : memref<12x16xf32, #tpu.memory_space<smem>>
    %471 = vector.broadcast %470 : f32 to vector<8x128xf32>
    %472 = arith.mulf %47, %471 : vector<8x128xf32>
    %473 = arith.addf %469, %472 : vector<8x128xf32>
    %c2_228 = arith.constant 2 : index
    %c2_229 = arith.constant 2 : index
    %474 = memref.load %arg4[%c2_228, %c2_229] : memref<12x16xf32, #tpu.memory_space<smem>>
    %475 = vector.broadcast %474 : f32 to vector<8x128xf32>
    %476 = arith.mulf %67, %475 : vector<8x128xf32>
    %477 = arith.addf %473, %476 : vector<8x128xf32>
    %c2_230 = arith.constant 2 : index
    %c3_231 = arith.constant 3 : index
    %478 = memref.load %arg4[%c2_230, %c3_231] : memref<12x16xf32, #tpu.memory_space<smem>>
    %479 = vector.broadcast %478 : f32 to vector<8x128xf32>
    %480 = arith.mulf %87, %479 : vector<8x128xf32>
    %481 = arith.addf %477, %480 : vector<8x128xf32>
    %c2_232 = arith.constant 2 : index
    %c4_233 = arith.constant 4 : index
    %482 = memref.load %arg4[%c2_232, %c4_233] : memref<12x16xf32, #tpu.memory_space<smem>>
    %483 = vector.broadcast %482 : f32 to vector<8x128xf32>
    %484 = arith.mulf %107, %483 : vector<8x128xf32>
    %485 = arith.addf %481, %484 : vector<8x128xf32>
    %c2_234 = arith.constant 2 : index
    %c5_235 = arith.constant 5 : index
    %486 = memref.load %arg4[%c2_234, %c5_235] : memref<12x16xf32, #tpu.memory_space<smem>>
    %487 = vector.broadcast %486 : f32 to vector<8x128xf32>
    %488 = arith.mulf %127, %487 : vector<8x128xf32>
    %489 = arith.addf %485, %488 : vector<8x128xf32>
    %c2_236 = arith.constant 2 : index
    %c6_237 = arith.constant 6 : index
    %490 = memref.load %arg4[%c2_236, %c6_237] : memref<12x16xf32, #tpu.memory_space<smem>>
    %491 = vector.broadcast %490 : f32 to vector<8x128xf32>
    %492 = arith.mulf %147, %491 : vector<8x128xf32>
    %493 = arith.addf %489, %492 : vector<8x128xf32>
    %c2_238 = arith.constant 2 : index
    %c7_239 = arith.constant 7 : index
    %494 = memref.load %arg4[%c2_238, %c7_239] : memref<12x16xf32, #tpu.memory_space<smem>>
    %495 = vector.broadcast %494 : f32 to vector<8x128xf32>
    %496 = arith.mulf %167, %495 : vector<8x128xf32>
    %497 = arith.addf %493, %496 : vector<8x128xf32>
    %c2_240 = arith.constant 2 : index
    %c8_241 = arith.constant 8 : index
    %498 = memref.load %arg4[%c2_240, %c8_241] : memref<12x16xf32, #tpu.memory_space<smem>>
    %499 = vector.broadcast %498 : f32 to vector<8x128xf32>
    %500 = arith.mulf %187, %499 : vector<8x128xf32>
    %501 = arith.addf %497, %500 : vector<8x128xf32>
    %c2_242 = arith.constant 2 : index
    %c9_243 = arith.constant 9 : index
    %502 = memref.load %arg4[%c2_242, %c9_243] : memref<12x16xf32, #tpu.memory_space<smem>>
    %503 = vector.broadcast %502 : f32 to vector<8x128xf32>
    %504 = arith.mulf %207, %503 : vector<8x128xf32>
    %505 = arith.addf %501, %504 : vector<8x128xf32>
    %c2_244 = arith.constant 2 : index
    %c10_245 = arith.constant 10 : index
    %506 = memref.load %arg4[%c2_244, %c10_245] : memref<12x16xf32, #tpu.memory_space<smem>>
    %507 = vector.broadcast %506 : f32 to vector<8x128xf32>
    %508 = arith.mulf %227, %507 : vector<8x128xf32>
    %509 = arith.addf %505, %508 : vector<8x128xf32>
    %c2_246 = arith.constant 2 : index
    %c11_247 = arith.constant 11 : index
    %510 = memref.load %arg4[%c2_246, %c11_247] : memref<12x16xf32, #tpu.memory_space<smem>>
    %511 = vector.broadcast %510 : f32 to vector<8x128xf32>
    %512 = arith.mulf %247, %511 : vector<8x128xf32>
    %513 = arith.addf %509, %512 : vector<8x128xf32>
    %c2_248 = arith.constant 2 : index
    %c12_249 = arith.constant 12 : index
    %514 = memref.load %arg4[%c2_248, %c12_249] : memref<12x16xf32, #tpu.memory_space<smem>>
    %515 = vector.broadcast %514 : f32 to vector<8x128xf32>
    %516 = arith.mulf %267, %515 : vector<8x128xf32>
    %517 = arith.addf %513, %516 : vector<8x128xf32>
    %c2_250 = arith.constant 2 : index
    %c13_251 = arith.constant 13 : index
    %518 = memref.load %arg4[%c2_250, %c13_251] : memref<12x16xf32, #tpu.memory_space<smem>>
    %519 = vector.broadcast %518 : f32 to vector<8x128xf32>
    %520 = arith.mulf %287, %519 : vector<8x128xf32>
    %521 = arith.addf %517, %520 : vector<8x128xf32>
    %c2_252 = arith.constant 2 : index
    %c14_253 = arith.constant 14 : index
    %522 = memref.load %arg4[%c2_252, %c14_253] : memref<12x16xf32, #tpu.memory_space<smem>>
    %523 = vector.broadcast %522 : f32 to vector<8x128xf32>
    %524 = arith.mulf %307, %523 : vector<8x128xf32>
    %525 = arith.addf %521, %524 : vector<8x128xf32>
    %c2_254 = arith.constant 2 : index
    %c15_255 = arith.constant 15 : index
    %526 = memref.load %arg4[%c2_254, %c15_255] : memref<12x16xf32, #tpu.memory_space<smem>>
    %527 = vector.broadcast %526 : f32 to vector<8x128xf32>
    %528 = arith.mulf %327, %527 : vector<8x128xf32>
    %529 = arith.addf %525, %528 : vector<8x128xf32>
    %cst_256 = arith.constant 0.000000e+00 : f32
    %530 = vector.broadcast %cst_256 : f32 to vector<8x128xf32>
    %531 = arith.maximumf %529, %530 : vector<8x128xf32>
    %c3_257 = arith.constant 3 : index
    %c0_258 = arith.constant 0 : index
    %532 = memref.load %arg4[%c3_257, %c0_258] : memref<12x16xf32, #tpu.memory_space<smem>>
    %533 = vector.broadcast %532 : f32 to vector<8x128xf32>
    %534 = arith.mulf %27, %533 : vector<8x128xf32>
    %c3_259 = arith.constant 3 : index
    %535 = memref.load %arg5[%c3_259] : memref<12xf32, #tpu.memory_space<smem>>
    %536 = vector.broadcast %535 : f32 to vector<8x128xf32>
    %537 = arith.addf %534, %536 : vector<8x128xf32>
    %c3_260 = arith.constant 3 : index
    %c1_261 = arith.constant 1 : index
    %538 = memref.load %arg4[%c3_260, %c1_261] : memref<12x16xf32, #tpu.memory_space<smem>>
    %539 = vector.broadcast %538 : f32 to vector<8x128xf32>
    %540 = arith.mulf %47, %539 : vector<8x128xf32>
    %541 = arith.addf %537, %540 : vector<8x128xf32>
    %c3_262 = arith.constant 3 : index
    %c2_263 = arith.constant 2 : index
    %542 = memref.load %arg4[%c3_262, %c2_263] : memref<12x16xf32, #tpu.memory_space<smem>>
    %543 = vector.broadcast %542 : f32 to vector<8x128xf32>
    %544 = arith.mulf %67, %543 : vector<8x128xf32>
    %545 = arith.addf %541, %544 : vector<8x128xf32>
    %c3_264 = arith.constant 3 : index
    %c3_265 = arith.constant 3 : index
    %546 = memref.load %arg4[%c3_264, %c3_265] : memref<12x16xf32, #tpu.memory_space<smem>>
    %547 = vector.broadcast %546 : f32 to vector<8x128xf32>
    %548 = arith.mulf %87, %547 : vector<8x128xf32>
    %549 = arith.addf %545, %548 : vector<8x128xf32>
    %c3_266 = arith.constant 3 : index
    %c4_267 = arith.constant 4 : index
    %550 = memref.load %arg4[%c3_266, %c4_267] : memref<12x16xf32, #tpu.memory_space<smem>>
    %551 = vector.broadcast %550 : f32 to vector<8x128xf32>
    %552 = arith.mulf %107, %551 : vector<8x128xf32>
    %553 = arith.addf %549, %552 : vector<8x128xf32>
    %c3_268 = arith.constant 3 : index
    %c5_269 = arith.constant 5 : index
    %554 = memref.load %arg4[%c3_268, %c5_269] : memref<12x16xf32, #tpu.memory_space<smem>>
    %555 = vector.broadcast %554 : f32 to vector<8x128xf32>
    %556 = arith.mulf %127, %555 : vector<8x128xf32>
    %557 = arith.addf %553, %556 : vector<8x128xf32>
    %c3_270 = arith.constant 3 : index
    %c6_271 = arith.constant 6 : index
    %558 = memref.load %arg4[%c3_270, %c6_271] : memref<12x16xf32, #tpu.memory_space<smem>>
    %559 = vector.broadcast %558 : f32 to vector<8x128xf32>
    %560 = arith.mulf %147, %559 : vector<8x128xf32>
    %561 = arith.addf %557, %560 : vector<8x128xf32>
    %c3_272 = arith.constant 3 : index
    %c7_273 = arith.constant 7 : index
    %562 = memref.load %arg4[%c3_272, %c7_273] : memref<12x16xf32, #tpu.memory_space<smem>>
    %563 = vector.broadcast %562 : f32 to vector<8x128xf32>
    %564 = arith.mulf %167, %563 : vector<8x128xf32>
    %565 = arith.addf %561, %564 : vector<8x128xf32>
    %c3_274 = arith.constant 3 : index
    %c8_275 = arith.constant 8 : index
    %566 = memref.load %arg4[%c3_274, %c8_275] : memref<12x16xf32, #tpu.memory_space<smem>>
    %567 = vector.broadcast %566 : f32 to vector<8x128xf32>
    %568 = arith.mulf %187, %567 : vector<8x128xf32>
    %569 = arith.addf %565, %568 : vector<8x128xf32>
    %c3_276 = arith.constant 3 : index
    %c9_277 = arith.constant 9 : index
    %570 = memref.load %arg4[%c3_276, %c9_277] : memref<12x16xf32, #tpu.memory_space<smem>>
    %571 = vector.broadcast %570 : f32 to vector<8x128xf32>
    %572 = arith.mulf %207, %571 : vector<8x128xf32>
    %573 = arith.addf %569, %572 : vector<8x128xf32>
    %c3_278 = arith.constant 3 : index
    %c10_279 = arith.constant 10 : index
    %574 = memref.load %arg4[%c3_278, %c10_279] : memref<12x16xf32, #tpu.memory_space<smem>>
    %575 = vector.broadcast %574 : f32 to vector<8x128xf32>
    %576 = arith.mulf %227, %575 : vector<8x128xf32>
    %577 = arith.addf %573, %576 : vector<8x128xf32>
    %c3_280 = arith.constant 3 : index
    %c11_281 = arith.constant 11 : index
    %578 = memref.load %arg4[%c3_280, %c11_281] : memref<12x16xf32, #tpu.memory_space<smem>>
    %579 = vector.broadcast %578 : f32 to vector<8x128xf32>
    %580 = arith.mulf %247, %579 : vector<8x128xf32>
    %581 = arith.addf %577, %580 : vector<8x128xf32>
    %c3_282 = arith.constant 3 : index
    %c12_283 = arith.constant 12 : index
    %582 = memref.load %arg4[%c3_282, %c12_283] : memref<12x16xf32, #tpu.memory_space<smem>>
    %583 = vector.broadcast %582 : f32 to vector<8x128xf32>
    %584 = arith.mulf %267, %583 : vector<8x128xf32>
    %585 = arith.addf %581, %584 : vector<8x128xf32>
    %c3_284 = arith.constant 3 : index
    %c13_285 = arith.constant 13 : index
    %586 = memref.load %arg4[%c3_284, %c13_285] : memref<12x16xf32, #tpu.memory_space<smem>>
    %587 = vector.broadcast %586 : f32 to vector<8x128xf32>
    %588 = arith.mulf %287, %587 : vector<8x128xf32>
    %589 = arith.addf %585, %588 : vector<8x128xf32>
    %c3_286 = arith.constant 3 : index
    %c14_287 = arith.constant 14 : index
    %590 = memref.load %arg4[%c3_286, %c14_287] : memref<12x16xf32, #tpu.memory_space<smem>>
    %591 = vector.broadcast %590 : f32 to vector<8x128xf32>
    %592 = arith.mulf %307, %591 : vector<8x128xf32>
    %593 = arith.addf %589, %592 : vector<8x128xf32>
    %c3_288 = arith.constant 3 : index
    %c15_289 = arith.constant 15 : index
    %594 = memref.load %arg4[%c3_288, %c15_289] : memref<12x16xf32, #tpu.memory_space<smem>>
    %595 = vector.broadcast %594 : f32 to vector<8x128xf32>
    %596 = arith.mulf %327, %595 : vector<8x128xf32>
    %597 = arith.addf %593, %596 : vector<8x128xf32>
    %cst_290 = arith.constant 0.000000e+00 : f32
    %598 = vector.broadcast %cst_290 : f32 to vector<8x128xf32>
    %599 = arith.maximumf %597, %598 : vector<8x128xf32>
    %c4_291 = arith.constant 4 : index
    %c0_292 = arith.constant 0 : index
    %600 = memref.load %arg4[%c4_291, %c0_292] : memref<12x16xf32, #tpu.memory_space<smem>>
    %601 = vector.broadcast %600 : f32 to vector<8x128xf32>
    %602 = arith.mulf %27, %601 : vector<8x128xf32>
    %c4_293 = arith.constant 4 : index
    %603 = memref.load %arg5[%c4_293] : memref<12xf32, #tpu.memory_space<smem>>
    %604 = vector.broadcast %603 : f32 to vector<8x128xf32>
    %605 = arith.addf %602, %604 : vector<8x128xf32>
    %c4_294 = arith.constant 4 : index
    %c1_295 = arith.constant 1 : index
    %606 = memref.load %arg4[%c4_294, %c1_295] : memref<12x16xf32, #tpu.memory_space<smem>>
    %607 = vector.broadcast %606 : f32 to vector<8x128xf32>
    %608 = arith.mulf %47, %607 : vector<8x128xf32>
    %609 = arith.addf %605, %608 : vector<8x128xf32>
    %c4_296 = arith.constant 4 : index
    %c2_297 = arith.constant 2 : index
    %610 = memref.load %arg4[%c4_296, %c2_297] : memref<12x16xf32, #tpu.memory_space<smem>>
    %611 = vector.broadcast %610 : f32 to vector<8x128xf32>
    %612 = arith.mulf %67, %611 : vector<8x128xf32>
    %613 = arith.addf %609, %612 : vector<8x128xf32>
    %c4_298 = arith.constant 4 : index
    %c3_299 = arith.constant 3 : index
    %614 = memref.load %arg4[%c4_298, %c3_299] : memref<12x16xf32, #tpu.memory_space<smem>>
    %615 = vector.broadcast %614 : f32 to vector<8x128xf32>
    %616 = arith.mulf %87, %615 : vector<8x128xf32>
    %617 = arith.addf %613, %616 : vector<8x128xf32>
    %c4_300 = arith.constant 4 : index
    %c4_301 = arith.constant 4 : index
    %618 = memref.load %arg4[%c4_300, %c4_301] : memref<12x16xf32, #tpu.memory_space<smem>>
    %619 = vector.broadcast %618 : f32 to vector<8x128xf32>
    %620 = arith.mulf %107, %619 : vector<8x128xf32>
    %621 = arith.addf %617, %620 : vector<8x128xf32>
    %c4_302 = arith.constant 4 : index
    %c5_303 = arith.constant 5 : index
    %622 = memref.load %arg4[%c4_302, %c5_303] : memref<12x16xf32, #tpu.memory_space<smem>>
    %623 = vector.broadcast %622 : f32 to vector<8x128xf32>
    %624 = arith.mulf %127, %623 : vector<8x128xf32>
    %625 = arith.addf %621, %624 : vector<8x128xf32>
    %c4_304 = arith.constant 4 : index
    %c6_305 = arith.constant 6 : index
    %626 = memref.load %arg4[%c4_304, %c6_305] : memref<12x16xf32, #tpu.memory_space<smem>>
    %627 = vector.broadcast %626 : f32 to vector<8x128xf32>
    %628 = arith.mulf %147, %627 : vector<8x128xf32>
    %629 = arith.addf %625, %628 : vector<8x128xf32>
    %c4_306 = arith.constant 4 : index
    %c7_307 = arith.constant 7 : index
    %630 = memref.load %arg4[%c4_306, %c7_307] : memref<12x16xf32, #tpu.memory_space<smem>>
    %631 = vector.broadcast %630 : f32 to vector<8x128xf32>
    %632 = arith.mulf %167, %631 : vector<8x128xf32>
    %633 = arith.addf %629, %632 : vector<8x128xf32>
    %c4_308 = arith.constant 4 : index
    %c8_309 = arith.constant 8 : index
    %634 = memref.load %arg4[%c4_308, %c8_309] : memref<12x16xf32, #tpu.memory_space<smem>>
    %635 = vector.broadcast %634 : f32 to vector<8x128xf32>
    %636 = arith.mulf %187, %635 : vector<8x128xf32>
    %637 = arith.addf %633, %636 : vector<8x128xf32>
    %c4_310 = arith.constant 4 : index
    %c9_311 = arith.constant 9 : index
    %638 = memref.load %arg4[%c4_310, %c9_311] : memref<12x16xf32, #tpu.memory_space<smem>>
    %639 = vector.broadcast %638 : f32 to vector<8x128xf32>
    %640 = arith.mulf %207, %639 : vector<8x128xf32>
    %641 = arith.addf %637, %640 : vector<8x128xf32>
    %c4_312 = arith.constant 4 : index
    %c10_313 = arith.constant 10 : index
    %642 = memref.load %arg4[%c4_312, %c10_313] : memref<12x16xf32, #tpu.memory_space<smem>>
    %643 = vector.broadcast %642 : f32 to vector<8x128xf32>
    %644 = arith.mulf %227, %643 : vector<8x128xf32>
    %645 = arith.addf %641, %644 : vector<8x128xf32>
    %c4_314 = arith.constant 4 : index
    %c11_315 = arith.constant 11 : index
    %646 = memref.load %arg4[%c4_314, %c11_315] : memref<12x16xf32, #tpu.memory_space<smem>>
    %647 = vector.broadcast %646 : f32 to vector<8x128xf32>
    %648 = arith.mulf %247, %647 : vector<8x128xf32>
    %649 = arith.addf %645, %648 : vector<8x128xf32>
    %c4_316 = arith.constant 4 : index
    %c12_317 = arith.constant 12 : index
    %650 = memref.load %arg4[%c4_316, %c12_317] : memref<12x16xf32, #tpu.memory_space<smem>>
    %651 = vector.broadcast %650 : f32 to vector<8x128xf32>
    %652 = arith.mulf %267, %651 : vector<8x128xf32>
    %653 = arith.addf %649, %652 : vector<8x128xf32>
    %c4_318 = arith.constant 4 : index
    %c13_319 = arith.constant 13 : index
    %654 = memref.load %arg4[%c4_318, %c13_319] : memref<12x16xf32, #tpu.memory_space<smem>>
    %655 = vector.broadcast %654 : f32 to vector<8x128xf32>
    %656 = arith.mulf %287, %655 : vector<8x128xf32>
    %657 = arith.addf %653, %656 : vector<8x128xf32>
    %c4_320 = arith.constant 4 : index
    %c14_321 = arith.constant 14 : index
    %658 = memref.load %arg4[%c4_320, %c14_321] : memref<12x16xf32, #tpu.memory_space<smem>>
    %659 = vector.broadcast %658 : f32 to vector<8x128xf32>
    %660 = arith.mulf %307, %659 : vector<8x128xf32>
    %661 = arith.addf %657, %660 : vector<8x128xf32>
    %c4_322 = arith.constant 4 : index
    %c15_323 = arith.constant 15 : index
    %662 = memref.load %arg4[%c4_322, %c15_323] : memref<12x16xf32, #tpu.memory_space<smem>>
    %663 = vector.broadcast %662 : f32 to vector<8x128xf32>
    %664 = arith.mulf %327, %663 : vector<8x128xf32>
    %665 = arith.addf %661, %664 : vector<8x128xf32>
    %cst_324 = arith.constant 0.000000e+00 : f32
    %666 = vector.broadcast %cst_324 : f32 to vector<8x128xf32>
    %667 = arith.maximumf %665, %666 : vector<8x128xf32>
    %c5_325 = arith.constant 5 : index
    %c0_326 = arith.constant 0 : index
    %668 = memref.load %arg4[%c5_325, %c0_326] : memref<12x16xf32, #tpu.memory_space<smem>>
    %669 = vector.broadcast %668 : f32 to vector<8x128xf32>
    %670 = arith.mulf %27, %669 : vector<8x128xf32>
    %c5_327 = arith.constant 5 : index
    %671 = memref.load %arg5[%c5_327] : memref<12xf32, #tpu.memory_space<smem>>
    %672 = vector.broadcast %671 : f32 to vector<8x128xf32>
    %673 = arith.addf %670, %672 : vector<8x128xf32>
    %c5_328 = arith.constant 5 : index
    %c1_329 = arith.constant 1 : index
    %674 = memref.load %arg4[%c5_328, %c1_329] : memref<12x16xf32, #tpu.memory_space<smem>>
    %675 = vector.broadcast %674 : f32 to vector<8x128xf32>
    %676 = arith.mulf %47, %675 : vector<8x128xf32>
    %677 = arith.addf %673, %676 : vector<8x128xf32>
    %c5_330 = arith.constant 5 : index
    %c2_331 = arith.constant 2 : index
    %678 = memref.load %arg4[%c5_330, %c2_331] : memref<12x16xf32, #tpu.memory_space<smem>>
    %679 = vector.broadcast %678 : f32 to vector<8x128xf32>
    %680 = arith.mulf %67, %679 : vector<8x128xf32>
    %681 = arith.addf %677, %680 : vector<8x128xf32>
    %c5_332 = arith.constant 5 : index
    %c3_333 = arith.constant 3 : index
    %682 = memref.load %arg4[%c5_332, %c3_333] : memref<12x16xf32, #tpu.memory_space<smem>>
    %683 = vector.broadcast %682 : f32 to vector<8x128xf32>
    %684 = arith.mulf %87, %683 : vector<8x128xf32>
    %685 = arith.addf %681, %684 : vector<8x128xf32>
    %c5_334 = arith.constant 5 : index
    %c4_335 = arith.constant 4 : index
    %686 = memref.load %arg4[%c5_334, %c4_335] : memref<12x16xf32, #tpu.memory_space<smem>>
    %687 = vector.broadcast %686 : f32 to vector<8x128xf32>
    %688 = arith.mulf %107, %687 : vector<8x128xf32>
    %689 = arith.addf %685, %688 : vector<8x128xf32>
    %c5_336 = arith.constant 5 : index
    %c5_337 = arith.constant 5 : index
    %690 = memref.load %arg4[%c5_336, %c5_337] : memref<12x16xf32, #tpu.memory_space<smem>>
    %691 = vector.broadcast %690 : f32 to vector<8x128xf32>
    %692 = arith.mulf %127, %691 : vector<8x128xf32>
    %693 = arith.addf %689, %692 : vector<8x128xf32>
    %c5_338 = arith.constant 5 : index
    %c6_339 = arith.constant 6 : index
    %694 = memref.load %arg4[%c5_338, %c6_339] : memref<12x16xf32, #tpu.memory_space<smem>>
    %695 = vector.broadcast %694 : f32 to vector<8x128xf32>
    %696 = arith.mulf %147, %695 : vector<8x128xf32>
    %697 = arith.addf %693, %696 : vector<8x128xf32>
    %c5_340 = arith.constant 5 : index
    %c7_341 = arith.constant 7 : index
    %698 = memref.load %arg4[%c5_340, %c7_341] : memref<12x16xf32, #tpu.memory_space<smem>>
    %699 = vector.broadcast %698 : f32 to vector<8x128xf32>
    %700 = arith.mulf %167, %699 : vector<8x128xf32>
    %701 = arith.addf %697, %700 : vector<8x128xf32>
    %c5_342 = arith.constant 5 : index
    %c8_343 = arith.constant 8 : index
    %702 = memref.load %arg4[%c5_342, %c8_343] : memref<12x16xf32, #tpu.memory_space<smem>>
    %703 = vector.broadcast %702 : f32 to vector<8x128xf32>
    %704 = arith.mulf %187, %703 : vector<8x128xf32>
    %705 = arith.addf %701, %704 : vector<8x128xf32>
    %c5_344 = arith.constant 5 : index
    %c9_345 = arith.constant 9 : index
    %706 = memref.load %arg4[%c5_344, %c9_345] : memref<12x16xf32, #tpu.memory_space<smem>>
    %707 = vector.broadcast %706 : f32 to vector<8x128xf32>
    %708 = arith.mulf %207, %707 : vector<8x128xf32>
    %709 = arith.addf %705, %708 : vector<8x128xf32>
    %c5_346 = arith.constant 5 : index
    %c10_347 = arith.constant 10 : index
    %710 = memref.load %arg4[%c5_346, %c10_347] : memref<12x16xf32, #tpu.memory_space<smem>>
    %711 = vector.broadcast %710 : f32 to vector<8x128xf32>
    %712 = arith.mulf %227, %711 : vector<8x128xf32>
    %713 = arith.addf %709, %712 : vector<8x128xf32>
    %c5_348 = arith.constant 5 : index
    %c11_349 = arith.constant 11 : index
    %714 = memref.load %arg4[%c5_348, %c11_349] : memref<12x16xf32, #tpu.memory_space<smem>>
    %715 = vector.broadcast %714 : f32 to vector<8x128xf32>
    %716 = arith.mulf %247, %715 : vector<8x128xf32>
    %717 = arith.addf %713, %716 : vector<8x128xf32>
    %c5_350 = arith.constant 5 : index
    %c12_351 = arith.constant 12 : index
    %718 = memref.load %arg4[%c5_350, %c12_351] : memref<12x16xf32, #tpu.memory_space<smem>>
    %719 = vector.broadcast %718 : f32 to vector<8x128xf32>
    %720 = arith.mulf %267, %719 : vector<8x128xf32>
    %721 = arith.addf %717, %720 : vector<8x128xf32>
    %c5_352 = arith.constant 5 : index
    %c13_353 = arith.constant 13 : index
    %722 = memref.load %arg4[%c5_352, %c13_353] : memref<12x16xf32, #tpu.memory_space<smem>>
    %723 = vector.broadcast %722 : f32 to vector<8x128xf32>
    %724 = arith.mulf %287, %723 : vector<8x128xf32>
    %725 = arith.addf %721, %724 : vector<8x128xf32>
    %c5_354 = arith.constant 5 : index
    %c14_355 = arith.constant 14 : index
    %726 = memref.load %arg4[%c5_354, %c14_355] : memref<12x16xf32, #tpu.memory_space<smem>>
    %727 = vector.broadcast %726 : f32 to vector<8x128xf32>
    %728 = arith.mulf %307, %727 : vector<8x128xf32>
    %729 = arith.addf %725, %728 : vector<8x128xf32>
    %c5_356 = arith.constant 5 : index
    %c15_357 = arith.constant 15 : index
    %730 = memref.load %arg4[%c5_356, %c15_357] : memref<12x16xf32, #tpu.memory_space<smem>>
    %731 = vector.broadcast %730 : f32 to vector<8x128xf32>
    %732 = arith.mulf %327, %731 : vector<8x128xf32>
    %733 = arith.addf %729, %732 : vector<8x128xf32>
    %cst_358 = arith.constant 0.000000e+00 : f32
    %734 = vector.broadcast %cst_358 : f32 to vector<8x128xf32>
    %735 = arith.maximumf %733, %734 : vector<8x128xf32>
    %c6_359 = arith.constant 6 : index
    %c0_360 = arith.constant 0 : index
    %736 = memref.load %arg4[%c6_359, %c0_360] : memref<12x16xf32, #tpu.memory_space<smem>>
    %737 = vector.broadcast %736 : f32 to vector<8x128xf32>
    %738 = arith.mulf %27, %737 : vector<8x128xf32>
    %c6_361 = arith.constant 6 : index
    %739 = memref.load %arg5[%c6_361] : memref<12xf32, #tpu.memory_space<smem>>
    %740 = vector.broadcast %739 : f32 to vector<8x128xf32>
    %741 = arith.addf %738, %740 : vector<8x128xf32>
    %c6_362 = arith.constant 6 : index
    %c1_363 = arith.constant 1 : index
    %742 = memref.load %arg4[%c6_362, %c1_363] : memref<12x16xf32, #tpu.memory_space<smem>>
    %743 = vector.broadcast %742 : f32 to vector<8x128xf32>
    %744 = arith.mulf %47, %743 : vector<8x128xf32>
    %745 = arith.addf %741, %744 : vector<8x128xf32>
    %c6_364 = arith.constant 6 : index
    %c2_365 = arith.constant 2 : index
    %746 = memref.load %arg4[%c6_364, %c2_365] : memref<12x16xf32, #tpu.memory_space<smem>>
    %747 = vector.broadcast %746 : f32 to vector<8x128xf32>
    %748 = arith.mulf %67, %747 : vector<8x128xf32>
    %749 = arith.addf %745, %748 : vector<8x128xf32>
    %c6_366 = arith.constant 6 : index
    %c3_367 = arith.constant 3 : index
    %750 = memref.load %arg4[%c6_366, %c3_367] : memref<12x16xf32, #tpu.memory_space<smem>>
    %751 = vector.broadcast %750 : f32 to vector<8x128xf32>
    %752 = arith.mulf %87, %751 : vector<8x128xf32>
    %753 = arith.addf %749, %752 : vector<8x128xf32>
    %c6_368 = arith.constant 6 : index
    %c4_369 = arith.constant 4 : index
    %754 = memref.load %arg4[%c6_368, %c4_369] : memref<12x16xf32, #tpu.memory_space<smem>>
    %755 = vector.broadcast %754 : f32 to vector<8x128xf32>
    %756 = arith.mulf %107, %755 : vector<8x128xf32>
    %757 = arith.addf %753, %756 : vector<8x128xf32>
    %c6_370 = arith.constant 6 : index
    %c5_371 = arith.constant 5 : index
    %758 = memref.load %arg4[%c6_370, %c5_371] : memref<12x16xf32, #tpu.memory_space<smem>>
    %759 = vector.broadcast %758 : f32 to vector<8x128xf32>
    %760 = arith.mulf %127, %759 : vector<8x128xf32>
    %761 = arith.addf %757, %760 : vector<8x128xf32>
    %c6_372 = arith.constant 6 : index
    %c6_373 = arith.constant 6 : index
    %762 = memref.load %arg4[%c6_372, %c6_373] : memref<12x16xf32, #tpu.memory_space<smem>>
    %763 = vector.broadcast %762 : f32 to vector<8x128xf32>
    %764 = arith.mulf %147, %763 : vector<8x128xf32>
    %765 = arith.addf %761, %764 : vector<8x128xf32>
    %c6_374 = arith.constant 6 : index
    %c7_375 = arith.constant 7 : index
    %766 = memref.load %arg4[%c6_374, %c7_375] : memref<12x16xf32, #tpu.memory_space<smem>>
    %767 = vector.broadcast %766 : f32 to vector<8x128xf32>
    %768 = arith.mulf %167, %767 : vector<8x128xf32>
    %769 = arith.addf %765, %768 : vector<8x128xf32>
    %c6_376 = arith.constant 6 : index
    %c8_377 = arith.constant 8 : index
    %770 = memref.load %arg4[%c6_376, %c8_377] : memref<12x16xf32, #tpu.memory_space<smem>>
    %771 = vector.broadcast %770 : f32 to vector<8x128xf32>
    %772 = arith.mulf %187, %771 : vector<8x128xf32>
    %773 = arith.addf %769, %772 : vector<8x128xf32>
    %c6_378 = arith.constant 6 : index
    %c9_379 = arith.constant 9 : index
    %774 = memref.load %arg4[%c6_378, %c9_379] : memref<12x16xf32, #tpu.memory_space<smem>>
    %775 = vector.broadcast %774 : f32 to vector<8x128xf32>
    %776 = arith.mulf %207, %775 : vector<8x128xf32>
    %777 = arith.addf %773, %776 : vector<8x128xf32>
    %c6_380 = arith.constant 6 : index
    %c10_381 = arith.constant 10 : index
    %778 = memref.load %arg4[%c6_380, %c10_381] : memref<12x16xf32, #tpu.memory_space<smem>>
    %779 = vector.broadcast %778 : f32 to vector<8x128xf32>
    %780 = arith.mulf %227, %779 : vector<8x128xf32>
    %781 = arith.addf %777, %780 : vector<8x128xf32>
    %c6_382 = arith.constant 6 : index
    %c11_383 = arith.constant 11 : index
    %782 = memref.load %arg4[%c6_382, %c11_383] : memref<12x16xf32, #tpu.memory_space<smem>>
    %783 = vector.broadcast %782 : f32 to vector<8x128xf32>
    %784 = arith.mulf %247, %783 : vector<8x128xf32>
    %785 = arith.addf %781, %784 : vector<8x128xf32>
    %c6_384 = arith.constant 6 : index
    %c12_385 = arith.constant 12 : index
    %786 = memref.load %arg4[%c6_384, %c12_385] : memref<12x16xf32, #tpu.memory_space<smem>>
    %787 = vector.broadcast %786 : f32 to vector<8x128xf32>
    %788 = arith.mulf %267, %787 : vector<8x128xf32>
    %789 = arith.addf %785, %788 : vector<8x128xf32>
    %c6_386 = arith.constant 6 : index
    %c13_387 = arith.constant 13 : index
    %790 = memref.load %arg4[%c6_386, %c13_387] : memref<12x16xf32, #tpu.memory_space<smem>>
    %791 = vector.broadcast %790 : f32 to vector<8x128xf32>
    %792 = arith.mulf %287, %791 : vector<8x128xf32>
    %793 = arith.addf %789, %792 : vector<8x128xf32>
    %c6_388 = arith.constant 6 : index
    %c14_389 = arith.constant 14 : index
    %794 = memref.load %arg4[%c6_388, %c14_389] : memref<12x16xf32, #tpu.memory_space<smem>>
    %795 = vector.broadcast %794 : f32 to vector<8x128xf32>
    %796 = arith.mulf %307, %795 : vector<8x128xf32>
    %797 = arith.addf %793, %796 : vector<8x128xf32>
    %c6_390 = arith.constant 6 : index
    %c15_391 = arith.constant 15 : index
    %798 = memref.load %arg4[%c6_390, %c15_391] : memref<12x16xf32, #tpu.memory_space<smem>>
    %799 = vector.broadcast %798 : f32 to vector<8x128xf32>
    %800 = arith.mulf %327, %799 : vector<8x128xf32>
    %801 = arith.addf %797, %800 : vector<8x128xf32>
    %cst_392 = arith.constant 0.000000e+00 : f32
    %802 = vector.broadcast %cst_392 : f32 to vector<8x128xf32>
    %803 = arith.maximumf %801, %802 : vector<8x128xf32>
    %c7_393 = arith.constant 7 : index
    %c0_394 = arith.constant 0 : index
    %804 = memref.load %arg4[%c7_393, %c0_394] : memref<12x16xf32, #tpu.memory_space<smem>>
    %805 = vector.broadcast %804 : f32 to vector<8x128xf32>
    %806 = arith.mulf %27, %805 : vector<8x128xf32>
    %c7_395 = arith.constant 7 : index
    %807 = memref.load %arg5[%c7_395] : memref<12xf32, #tpu.memory_space<smem>>
    %808 = vector.broadcast %807 : f32 to vector<8x128xf32>
    %809 = arith.addf %806, %808 : vector<8x128xf32>
    %c7_396 = arith.constant 7 : index
    %c1_397 = arith.constant 1 : index
    %810 = memref.load %arg4[%c7_396, %c1_397] : memref<12x16xf32, #tpu.memory_space<smem>>
    %811 = vector.broadcast %810 : f32 to vector<8x128xf32>
    %812 = arith.mulf %47, %811 : vector<8x128xf32>
    %813 = arith.addf %809, %812 : vector<8x128xf32>
    %c7_398 = arith.constant 7 : index
    %c2_399 = arith.constant 2 : index
    %814 = memref.load %arg4[%c7_398, %c2_399] : memref<12x16xf32, #tpu.memory_space<smem>>
    %815 = vector.broadcast %814 : f32 to vector<8x128xf32>
    %816 = arith.mulf %67, %815 : vector<8x128xf32>
    %817 = arith.addf %813, %816 : vector<8x128xf32>
    %c7_400 = arith.constant 7 : index
    %c3_401 = arith.constant 3 : index
    %818 = memref.load %arg4[%c7_400, %c3_401] : memref<12x16xf32, #tpu.memory_space<smem>>
    %819 = vector.broadcast %818 : f32 to vector<8x128xf32>
    %820 = arith.mulf %87, %819 : vector<8x128xf32>
    %821 = arith.addf %817, %820 : vector<8x128xf32>
    %c7_402 = arith.constant 7 : index
    %c4_403 = arith.constant 4 : index
    %822 = memref.load %arg4[%c7_402, %c4_403] : memref<12x16xf32, #tpu.memory_space<smem>>
    %823 = vector.broadcast %822 : f32 to vector<8x128xf32>
    %824 = arith.mulf %107, %823 : vector<8x128xf32>
    %825 = arith.addf %821, %824 : vector<8x128xf32>
    %c7_404 = arith.constant 7 : index
    %c5_405 = arith.constant 5 : index
    %826 = memref.load %arg4[%c7_404, %c5_405] : memref<12x16xf32, #tpu.memory_space<smem>>
    %827 = vector.broadcast %826 : f32 to vector<8x128xf32>
    %828 = arith.mulf %127, %827 : vector<8x128xf32>
    %829 = arith.addf %825, %828 : vector<8x128xf32>
    %c7_406 = arith.constant 7 : index
    %c6_407 = arith.constant 6 : index
    %830 = memref.load %arg4[%c7_406, %c6_407] : memref<12x16xf32, #tpu.memory_space<smem>>
    %831 = vector.broadcast %830 : f32 to vector<8x128xf32>
    %832 = arith.mulf %147, %831 : vector<8x128xf32>
    %833 = arith.addf %829, %832 : vector<8x128xf32>
    %c7_408 = arith.constant 7 : index
    %c7_409 = arith.constant 7 : index
    %834 = memref.load %arg4[%c7_408, %c7_409] : memref<12x16xf32, #tpu.memory_space<smem>>
    %835 = vector.broadcast %834 : f32 to vector<8x128xf32>
    %836 = arith.mulf %167, %835 : vector<8x128xf32>
    %837 = arith.addf %833, %836 : vector<8x128xf32>
    %c7_410 = arith.constant 7 : index
    %c8_411 = arith.constant 8 : index
    %838 = memref.load %arg4[%c7_410, %c8_411] : memref<12x16xf32, #tpu.memory_space<smem>>
    %839 = vector.broadcast %838 : f32 to vector<8x128xf32>
    %840 = arith.mulf %187, %839 : vector<8x128xf32>
    %841 = arith.addf %837, %840 : vector<8x128xf32>
    %c7_412 = arith.constant 7 : index
    %c9_413 = arith.constant 9 : index
    %842 = memref.load %arg4[%c7_412, %c9_413] : memref<12x16xf32, #tpu.memory_space<smem>>
    %843 = vector.broadcast %842 : f32 to vector<8x128xf32>
    %844 = arith.mulf %207, %843 : vector<8x128xf32>
    %845 = arith.addf %841, %844 : vector<8x128xf32>
    %c7_414 = arith.constant 7 : index
    %c10_415 = arith.constant 10 : index
    %846 = memref.load %arg4[%c7_414, %c10_415] : memref<12x16xf32, #tpu.memory_space<smem>>
    %847 = vector.broadcast %846 : f32 to vector<8x128xf32>
    %848 = arith.mulf %227, %847 : vector<8x128xf32>
    %849 = arith.addf %845, %848 : vector<8x128xf32>
    %c7_416 = arith.constant 7 : index
    %c11_417 = arith.constant 11 : index
    %850 = memref.load %arg4[%c7_416, %c11_417] : memref<12x16xf32, #tpu.memory_space<smem>>
    %851 = vector.broadcast %850 : f32 to vector<8x128xf32>
    %852 = arith.mulf %247, %851 : vector<8x128xf32>
    %853 = arith.addf %849, %852 : vector<8x128xf32>
    %c7_418 = arith.constant 7 : index
    %c12_419 = arith.constant 12 : index
    %854 = memref.load %arg4[%c7_418, %c12_419] : memref<12x16xf32, #tpu.memory_space<smem>>
    %855 = vector.broadcast %854 : f32 to vector<8x128xf32>
    %856 = arith.mulf %267, %855 : vector<8x128xf32>
    %857 = arith.addf %853, %856 : vector<8x128xf32>
    %c7_420 = arith.constant 7 : index
    %c13_421 = arith.constant 13 : index
    %858 = memref.load %arg4[%c7_420, %c13_421] : memref<12x16xf32, #tpu.memory_space<smem>>
    %859 = vector.broadcast %858 : f32 to vector<8x128xf32>
    %860 = arith.mulf %287, %859 : vector<8x128xf32>
    %861 = arith.addf %857, %860 : vector<8x128xf32>
    %c7_422 = arith.constant 7 : index
    %c14_423 = arith.constant 14 : index
    %862 = memref.load %arg4[%c7_422, %c14_423] : memref<12x16xf32, #tpu.memory_space<smem>>
    %863 = vector.broadcast %862 : f32 to vector<8x128xf32>
    %864 = arith.mulf %307, %863 : vector<8x128xf32>
    %865 = arith.addf %861, %864 : vector<8x128xf32>
    %c7_424 = arith.constant 7 : index
    %c15_425 = arith.constant 15 : index
    %866 = memref.load %arg4[%c7_424, %c15_425] : memref<12x16xf32, #tpu.memory_space<smem>>
    %867 = vector.broadcast %866 : f32 to vector<8x128xf32>
    %868 = arith.mulf %327, %867 : vector<8x128xf32>
    %869 = arith.addf %865, %868 : vector<8x128xf32>
    %cst_426 = arith.constant 0.000000e+00 : f32
    %870 = vector.broadcast %cst_426 : f32 to vector<8x128xf32>
    %871 = arith.maximumf %869, %870 : vector<8x128xf32>
    %c8_427 = arith.constant 8 : index
    %c0_428 = arith.constant 0 : index
    %872 = memref.load %arg4[%c8_427, %c0_428] : memref<12x16xf32, #tpu.memory_space<smem>>
    %873 = vector.broadcast %872 : f32 to vector<8x128xf32>
    %874 = arith.mulf %27, %873 : vector<8x128xf32>
    %c8_429 = arith.constant 8 : index
    %875 = memref.load %arg5[%c8_429] : memref<12xf32, #tpu.memory_space<smem>>
    %876 = vector.broadcast %875 : f32 to vector<8x128xf32>
    %877 = arith.addf %874, %876 : vector<8x128xf32>
    %c8_430 = arith.constant 8 : index
    %c1_431 = arith.constant 1 : index
    %878 = memref.load %arg4[%c8_430, %c1_431] : memref<12x16xf32, #tpu.memory_space<smem>>
    %879 = vector.broadcast %878 : f32 to vector<8x128xf32>
    %880 = arith.mulf %47, %879 : vector<8x128xf32>
    %881 = arith.addf %877, %880 : vector<8x128xf32>
    %c8_432 = arith.constant 8 : index
    %c2_433 = arith.constant 2 : index
    %882 = memref.load %arg4[%c8_432, %c2_433] : memref<12x16xf32, #tpu.memory_space<smem>>
    %883 = vector.broadcast %882 : f32 to vector<8x128xf32>
    %884 = arith.mulf %67, %883 : vector<8x128xf32>
    %885 = arith.addf %881, %884 : vector<8x128xf32>
    %c8_434 = arith.constant 8 : index
    %c3_435 = arith.constant 3 : index
    %886 = memref.load %arg4[%c8_434, %c3_435] : memref<12x16xf32, #tpu.memory_space<smem>>
    %887 = vector.broadcast %886 : f32 to vector<8x128xf32>
    %888 = arith.mulf %87, %887 : vector<8x128xf32>
    %889 = arith.addf %885, %888 : vector<8x128xf32>
    %c8_436 = arith.constant 8 : index
    %c4_437 = arith.constant 4 : index
    %890 = memref.load %arg4[%c8_436, %c4_437] : memref<12x16xf32, #tpu.memory_space<smem>>
    %891 = vector.broadcast %890 : f32 to vector<8x128xf32>
    %892 = arith.mulf %107, %891 : vector<8x128xf32>
    %893 = arith.addf %889, %892 : vector<8x128xf32>
    %c8_438 = arith.constant 8 : index
    %c5_439 = arith.constant 5 : index
    %894 = memref.load %arg4[%c8_438, %c5_439] : memref<12x16xf32, #tpu.memory_space<smem>>
    %895 = vector.broadcast %894 : f32 to vector<8x128xf32>
    %896 = arith.mulf %127, %895 : vector<8x128xf32>
    %897 = arith.addf %893, %896 : vector<8x128xf32>
    %c8_440 = arith.constant 8 : index
    %c6_441 = arith.constant 6 : index
    %898 = memref.load %arg4[%c8_440, %c6_441] : memref<12x16xf32, #tpu.memory_space<smem>>
    %899 = vector.broadcast %898 : f32 to vector<8x128xf32>
    %900 = arith.mulf %147, %899 : vector<8x128xf32>
    %901 = arith.addf %897, %900 : vector<8x128xf32>
    %c8_442 = arith.constant 8 : index
    %c7_443 = arith.constant 7 : index
    %902 = memref.load %arg4[%c8_442, %c7_443] : memref<12x16xf32, #tpu.memory_space<smem>>
    %903 = vector.broadcast %902 : f32 to vector<8x128xf32>
    %904 = arith.mulf %167, %903 : vector<8x128xf32>
    %905 = arith.addf %901, %904 : vector<8x128xf32>
    %c8_444 = arith.constant 8 : index
    %c8_445 = arith.constant 8 : index
    %906 = memref.load %arg4[%c8_444, %c8_445] : memref<12x16xf32, #tpu.memory_space<smem>>
    %907 = vector.broadcast %906 : f32 to vector<8x128xf32>
    %908 = arith.mulf %187, %907 : vector<8x128xf32>
    %909 = arith.addf %905, %908 : vector<8x128xf32>
    %c8_446 = arith.constant 8 : index
    %c9_447 = arith.constant 9 : index
    %910 = memref.load %arg4[%c8_446, %c9_447] : memref<12x16xf32, #tpu.memory_space<smem>>
    %911 = vector.broadcast %910 : f32 to vector<8x128xf32>
    %912 = arith.mulf %207, %911 : vector<8x128xf32>
    %913 = arith.addf %909, %912 : vector<8x128xf32>
    %c8_448 = arith.constant 8 : index
    %c10_449 = arith.constant 10 : index
    %914 = memref.load %arg4[%c8_448, %c10_449] : memref<12x16xf32, #tpu.memory_space<smem>>
    %915 = vector.broadcast %914 : f32 to vector<8x128xf32>
    %916 = arith.mulf %227, %915 : vector<8x128xf32>
    %917 = arith.addf %913, %916 : vector<8x128xf32>
    %c8_450 = arith.constant 8 : index
    %c11_451 = arith.constant 11 : index
    %918 = memref.load %arg4[%c8_450, %c11_451] : memref<12x16xf32, #tpu.memory_space<smem>>
    %919 = vector.broadcast %918 : f32 to vector<8x128xf32>
    %920 = arith.mulf %247, %919 : vector<8x128xf32>
    %921 = arith.addf %917, %920 : vector<8x128xf32>
    %c8_452 = arith.constant 8 : index
    %c12_453 = arith.constant 12 : index
    %922 = memref.load %arg4[%c8_452, %c12_453] : memref<12x16xf32, #tpu.memory_space<smem>>
    %923 = vector.broadcast %922 : f32 to vector<8x128xf32>
    %924 = arith.mulf %267, %923 : vector<8x128xf32>
    %925 = arith.addf %921, %924 : vector<8x128xf32>
    %c8_454 = arith.constant 8 : index
    %c13_455 = arith.constant 13 : index
    %926 = memref.load %arg4[%c8_454, %c13_455] : memref<12x16xf32, #tpu.memory_space<smem>>
    %927 = vector.broadcast %926 : f32 to vector<8x128xf32>
    %928 = arith.mulf %287, %927 : vector<8x128xf32>
    %929 = arith.addf %925, %928 : vector<8x128xf32>
    %c8_456 = arith.constant 8 : index
    %c14_457 = arith.constant 14 : index
    %930 = memref.load %arg4[%c8_456, %c14_457] : memref<12x16xf32, #tpu.memory_space<smem>>
    %931 = vector.broadcast %930 : f32 to vector<8x128xf32>
    %932 = arith.mulf %307, %931 : vector<8x128xf32>
    %933 = arith.addf %929, %932 : vector<8x128xf32>
    %c8_458 = arith.constant 8 : index
    %c15_459 = arith.constant 15 : index
    %934 = memref.load %arg4[%c8_458, %c15_459] : memref<12x16xf32, #tpu.memory_space<smem>>
    %935 = vector.broadcast %934 : f32 to vector<8x128xf32>
    %936 = arith.mulf %327, %935 : vector<8x128xf32>
    %937 = arith.addf %933, %936 : vector<8x128xf32>
    %cst_460 = arith.constant 0.000000e+00 : f32
    %938 = vector.broadcast %cst_460 : f32 to vector<8x128xf32>
    %939 = arith.maximumf %937, %938 : vector<8x128xf32>
    %c9_461 = arith.constant 9 : index
    %c0_462 = arith.constant 0 : index
    %940 = memref.load %arg4[%c9_461, %c0_462] : memref<12x16xf32, #tpu.memory_space<smem>>
    %941 = vector.broadcast %940 : f32 to vector<8x128xf32>
    %942 = arith.mulf %27, %941 : vector<8x128xf32>
    %c9_463 = arith.constant 9 : index
    %943 = memref.load %arg5[%c9_463] : memref<12xf32, #tpu.memory_space<smem>>
    %944 = vector.broadcast %943 : f32 to vector<8x128xf32>
    %945 = arith.addf %942, %944 : vector<8x128xf32>
    %c9_464 = arith.constant 9 : index
    %c1_465 = arith.constant 1 : index
    %946 = memref.load %arg4[%c9_464, %c1_465] : memref<12x16xf32, #tpu.memory_space<smem>>
    %947 = vector.broadcast %946 : f32 to vector<8x128xf32>
    %948 = arith.mulf %47, %947 : vector<8x128xf32>
    %949 = arith.addf %945, %948 : vector<8x128xf32>
    %c9_466 = arith.constant 9 : index
    %c2_467 = arith.constant 2 : index
    %950 = memref.load %arg4[%c9_466, %c2_467] : memref<12x16xf32, #tpu.memory_space<smem>>
    %951 = vector.broadcast %950 : f32 to vector<8x128xf32>
    %952 = arith.mulf %67, %951 : vector<8x128xf32>
    %953 = arith.addf %949, %952 : vector<8x128xf32>
    %c9_468 = arith.constant 9 : index
    %c3_469 = arith.constant 3 : index
    %954 = memref.load %arg4[%c9_468, %c3_469] : memref<12x16xf32, #tpu.memory_space<smem>>
    %955 = vector.broadcast %954 : f32 to vector<8x128xf32>
    %956 = arith.mulf %87, %955 : vector<8x128xf32>
    %957 = arith.addf %953, %956 : vector<8x128xf32>
    %c9_470 = arith.constant 9 : index
    %c4_471 = arith.constant 4 : index
    %958 = memref.load %arg4[%c9_470, %c4_471] : memref<12x16xf32, #tpu.memory_space<smem>>
    %959 = vector.broadcast %958 : f32 to vector<8x128xf32>
    %960 = arith.mulf %107, %959 : vector<8x128xf32>
    %961 = arith.addf %957, %960 : vector<8x128xf32>
    %c9_472 = arith.constant 9 : index
    %c5_473 = arith.constant 5 : index
    %962 = memref.load %arg4[%c9_472, %c5_473] : memref<12x16xf32, #tpu.memory_space<smem>>
    %963 = vector.broadcast %962 : f32 to vector<8x128xf32>
    %964 = arith.mulf %127, %963 : vector<8x128xf32>
    %965 = arith.addf %961, %964 : vector<8x128xf32>
    %c9_474 = arith.constant 9 : index
    %c6_475 = arith.constant 6 : index
    %966 = memref.load %arg4[%c9_474, %c6_475] : memref<12x16xf32, #tpu.memory_space<smem>>
    %967 = vector.broadcast %966 : f32 to vector<8x128xf32>
    %968 = arith.mulf %147, %967 : vector<8x128xf32>
    %969 = arith.addf %965, %968 : vector<8x128xf32>
    %c9_476 = arith.constant 9 : index
    %c7_477 = arith.constant 7 : index
    %970 = memref.load %arg4[%c9_476, %c7_477] : memref<12x16xf32, #tpu.memory_space<smem>>
    %971 = vector.broadcast %970 : f32 to vector<8x128xf32>
    %972 = arith.mulf %167, %971 : vector<8x128xf32>
    %973 = arith.addf %969, %972 : vector<8x128xf32>
    %c9_478 = arith.constant 9 : index
    %c8_479 = arith.constant 8 : index
    %974 = memref.load %arg4[%c9_478, %c8_479] : memref<12x16xf32, #tpu.memory_space<smem>>
    %975 = vector.broadcast %974 : f32 to vector<8x128xf32>
    %976 = arith.mulf %187, %975 : vector<8x128xf32>
    %977 = arith.addf %973, %976 : vector<8x128xf32>
    %c9_480 = arith.constant 9 : index
    %c9_481 = arith.constant 9 : index
    %978 = memref.load %arg4[%c9_480, %c9_481] : memref<12x16xf32, #tpu.memory_space<smem>>
    %979 = vector.broadcast %978 : f32 to vector<8x128xf32>
    %980 = arith.mulf %207, %979 : vector<8x128xf32>
    %981 = arith.addf %977, %980 : vector<8x128xf32>
    %c9_482 = arith.constant 9 : index
    %c10_483 = arith.constant 10 : index
    %982 = memref.load %arg4[%c9_482, %c10_483] : memref<12x16xf32, #tpu.memory_space<smem>>
    %983 = vector.broadcast %982 : f32 to vector<8x128xf32>
    %984 = arith.mulf %227, %983 : vector<8x128xf32>
    %985 = arith.addf %981, %984 : vector<8x128xf32>
    %c9_484 = arith.constant 9 : index
    %c11_485 = arith.constant 11 : index
    %986 = memref.load %arg4[%c9_484, %c11_485] : memref<12x16xf32, #tpu.memory_space<smem>>
    %987 = vector.broadcast %986 : f32 to vector<8x128xf32>
    %988 = arith.mulf %247, %987 : vector<8x128xf32>
    %989 = arith.addf %985, %988 : vector<8x128xf32>
    %c9_486 = arith.constant 9 : index
    %c12_487 = arith.constant 12 : index
    %990 = memref.load %arg4[%c9_486, %c12_487] : memref<12x16xf32, #tpu.memory_space<smem>>
    %991 = vector.broadcast %990 : f32 to vector<8x128xf32>
    %992 = arith.mulf %267, %991 : vector<8x128xf32>
    %993 = arith.addf %989, %992 : vector<8x128xf32>
    %c9_488 = arith.constant 9 : index
    %c13_489 = arith.constant 13 : index
    %994 = memref.load %arg4[%c9_488, %c13_489] : memref<12x16xf32, #tpu.memory_space<smem>>
    %995 = vector.broadcast %994 : f32 to vector<8x128xf32>
    %996 = arith.mulf %287, %995 : vector<8x128xf32>
    %997 = arith.addf %993, %996 : vector<8x128xf32>
    %c9_490 = arith.constant 9 : index
    %c14_491 = arith.constant 14 : index
    %998 = memref.load %arg4[%c9_490, %c14_491] : memref<12x16xf32, #tpu.memory_space<smem>>
    %999 = vector.broadcast %998 : f32 to vector<8x128xf32>
    %1000 = arith.mulf %307, %999 : vector<8x128xf32>
    %1001 = arith.addf %997, %1000 : vector<8x128xf32>
    %c9_492 = arith.constant 9 : index
    %c15_493 = arith.constant 15 : index
    %1002 = memref.load %arg4[%c9_492, %c15_493] : memref<12x16xf32, #tpu.memory_space<smem>>
    %1003 = vector.broadcast %1002 : f32 to vector<8x128xf32>
    %1004 = arith.mulf %327, %1003 : vector<8x128xf32>
    %1005 = arith.addf %1001, %1004 : vector<8x128xf32>
    %cst_494 = arith.constant 0.000000e+00 : f32
    %1006 = vector.broadcast %cst_494 : f32 to vector<8x128xf32>
    %1007 = arith.maximumf %1005, %1006 : vector<8x128xf32>
    %c10_495 = arith.constant 10 : index
    %c0_496 = arith.constant 0 : index
    %1008 = memref.load %arg4[%c10_495, %c0_496] : memref<12x16xf32, #tpu.memory_space<smem>>
    %1009 = vector.broadcast %1008 : f32 to vector<8x128xf32>
    %1010 = arith.mulf %27, %1009 : vector<8x128xf32>
    %c10_497 = arith.constant 10 : index
    %1011 = memref.load %arg5[%c10_497] : memref<12xf32, #tpu.memory_space<smem>>
    %1012 = vector.broadcast %1011 : f32 to vector<8x128xf32>
    %1013 = arith.addf %1010, %1012 : vector<8x128xf32>
    %c10_498 = arith.constant 10 : index
    %c1_499 = arith.constant 1 : index
    %1014 = memref.load %arg4[%c10_498, %c1_499] : memref<12x16xf32, #tpu.memory_space<smem>>
    %1015 = vector.broadcast %1014 : f32 to vector<8x128xf32>
    %1016 = arith.mulf %47, %1015 : vector<8x128xf32>
    %1017 = arith.addf %1013, %1016 : vector<8x128xf32>
    %c10_500 = arith.constant 10 : index
    %c2_501 = arith.constant 2 : index
    %1018 = memref.load %arg4[%c10_500, %c2_501] : memref<12x16xf32, #tpu.memory_space<smem>>
    %1019 = vector.broadcast %1018 : f32 to vector<8x128xf32>
    %1020 = arith.mulf %67, %1019 : vector<8x128xf32>
    %1021 = arith.addf %1017, %1020 : vector<8x128xf32>
    %c10_502 = arith.constant 10 : index
    %c3_503 = arith.constant 3 : index
    %1022 = memref.load %arg4[%c10_502, %c3_503] : memref<12x16xf32, #tpu.memory_space<smem>>
    %1023 = vector.broadcast %1022 : f32 to vector<8x128xf32>
    %1024 = arith.mulf %87, %1023 : vector<8x128xf32>
    %1025 = arith.addf %1021, %1024 : vector<8x128xf32>
    %c10_504 = arith.constant 10 : index
    %c4_505 = arith.constant 4 : index
    %1026 = memref.load %arg4[%c10_504, %c4_505] : memref<12x16xf32, #tpu.memory_space<smem>>
    %1027 = vector.broadcast %1026 : f32 to vector<8x128xf32>
    %1028 = arith.mulf %107, %1027 : vector<8x128xf32>
    %1029 = arith.addf %1025, %1028 : vector<8x128xf32>
    %c10_506 = arith.constant 10 : index
    %c5_507 = arith.constant 5 : index
    %1030 = memref.load %arg4[%c10_506, %c5_507] : memref<12x16xf32, #tpu.memory_space<smem>>
    %1031 = vector.broadcast %1030 : f32 to vector<8x128xf32>
    %1032 = arith.mulf %127, %1031 : vector<8x128xf32>
    %1033 = arith.addf %1029, %1032 : vector<8x128xf32>
    %c10_508 = arith.constant 10 : index
    %c6_509 = arith.constant 6 : index
    %1034 = memref.load %arg4[%c10_508, %c6_509] : memref<12x16xf32, #tpu.memory_space<smem>>
    %1035 = vector.broadcast %1034 : f32 to vector<8x128xf32>
    %1036 = arith.mulf %147, %1035 : vector<8x128xf32>
    %1037 = arith.addf %1033, %1036 : vector<8x128xf32>
    %c10_510 = arith.constant 10 : index
    %c7_511 = arith.constant 7 : index
    %1038 = memref.load %arg4[%c10_510, %c7_511] : memref<12x16xf32, #tpu.memory_space<smem>>
    %1039 = vector.broadcast %1038 : f32 to vector<8x128xf32>
    %1040 = arith.mulf %167, %1039 : vector<8x128xf32>
    %1041 = arith.addf %1037, %1040 : vector<8x128xf32>
    %c10_512 = arith.constant 10 : index
    %c8_513 = arith.constant 8 : index
    %1042 = memref.load %arg4[%c10_512, %c8_513] : memref<12x16xf32, #tpu.memory_space<smem>>
    %1043 = vector.broadcast %1042 : f32 to vector<8x128xf32>
    %1044 = arith.mulf %187, %1043 : vector<8x128xf32>
    %1045 = arith.addf %1041, %1044 : vector<8x128xf32>
    %c10_514 = arith.constant 10 : index
    %c9_515 = arith.constant 9 : index
    %1046 = memref.load %arg4[%c10_514, %c9_515] : memref<12x16xf32, #tpu.memory_space<smem>>
    %1047 = vector.broadcast %1046 : f32 to vector<8x128xf32>
    %1048 = arith.mulf %207, %1047 : vector<8x128xf32>
    %1049 = arith.addf %1045, %1048 : vector<8x128xf32>
    %c10_516 = arith.constant 10 : index
    %c10_517 = arith.constant 10 : index
    %1050 = memref.load %arg4[%c10_516, %c10_517] : memref<12x16xf32, #tpu.memory_space<smem>>
    %1051 = vector.broadcast %1050 : f32 to vector<8x128xf32>
    %1052 = arith.mulf %227, %1051 : vector<8x128xf32>
    %1053 = arith.addf %1049, %1052 : vector<8x128xf32>
    %c10_518 = arith.constant 10 : index
    %c11_519 = arith.constant 11 : index
    %1054 = memref.load %arg4[%c10_518, %c11_519] : memref<12x16xf32, #tpu.memory_space<smem>>
    %1055 = vector.broadcast %1054 : f32 to vector<8x128xf32>
    %1056 = arith.mulf %247, %1055 : vector<8x128xf32>
    %1057 = arith.addf %1053, %1056 : vector<8x128xf32>
    %c10_520 = arith.constant 10 : index
    %c12_521 = arith.constant 12 : index
    %1058 = memref.load %arg4[%c10_520, %c12_521] : memref<12x16xf32, #tpu.memory_space<smem>>
    %1059 = vector.broadcast %1058 : f32 to vector<8x128xf32>
    %1060 = arith.mulf %267, %1059 : vector<8x128xf32>
    %1061 = arith.addf %1057, %1060 : vector<8x128xf32>
    %c10_522 = arith.constant 10 : index
    %c13_523 = arith.constant 13 : index
    %1062 = memref.load %arg4[%c10_522, %c13_523] : memref<12x16xf32, #tpu.memory_space<smem>>
    %1063 = vector.broadcast %1062 : f32 to vector<8x128xf32>
    %1064 = arith.mulf %287, %1063 : vector<8x128xf32>
    %1065 = arith.addf %1061, %1064 : vector<8x128xf32>
    %c10_524 = arith.constant 10 : index
    %c14_525 = arith.constant 14 : index
    %1066 = memref.load %arg4[%c10_524, %c14_525] : memref<12x16xf32, #tpu.memory_space<smem>>
    %1067 = vector.broadcast %1066 : f32 to vector<8x128xf32>
    %1068 = arith.mulf %307, %1067 : vector<8x128xf32>
    %1069 = arith.addf %1065, %1068 : vector<8x128xf32>
    %c10_526 = arith.constant 10 : index
    %c15_527 = arith.constant 15 : index
    %1070 = memref.load %arg4[%c10_526, %c15_527] : memref<12x16xf32, #tpu.memory_space<smem>>
    %1071 = vector.broadcast %1070 : f32 to vector<8x128xf32>
    %1072 = arith.mulf %327, %1071 : vector<8x128xf32>
    %1073 = arith.addf %1069, %1072 : vector<8x128xf32>
    %cst_528 = arith.constant 0.000000e+00 : f32
    %1074 = vector.broadcast %cst_528 : f32 to vector<8x128xf32>
    %1075 = arith.maximumf %1073, %1074 : vector<8x128xf32>
    %c11_529 = arith.constant 11 : index
    %c0_530 = arith.constant 0 : index
    %1076 = memref.load %arg4[%c11_529, %c0_530] : memref<12x16xf32, #tpu.memory_space<smem>>
    %1077 = vector.broadcast %1076 : f32 to vector<8x128xf32>
    %1078 = arith.mulf %27, %1077 : vector<8x128xf32>
    %c11_531 = arith.constant 11 : index
    %1079 = memref.load %arg5[%c11_531] : memref<12xf32, #tpu.memory_space<smem>>
    %1080 = vector.broadcast %1079 : f32 to vector<8x128xf32>
    %1081 = arith.addf %1078, %1080 : vector<8x128xf32>
    %c11_532 = arith.constant 11 : index
    %c1_533 = arith.constant 1 : index
    %1082 = memref.load %arg4[%c11_532, %c1_533] : memref<12x16xf32, #tpu.memory_space<smem>>
    %1083 = vector.broadcast %1082 : f32 to vector<8x128xf32>
    %1084 = arith.mulf %47, %1083 : vector<8x128xf32>
    %1085 = arith.addf %1081, %1084 : vector<8x128xf32>
    %c11_534 = arith.constant 11 : index
    %c2_535 = arith.constant 2 : index
    %1086 = memref.load %arg4[%c11_534, %c2_535] : memref<12x16xf32, #tpu.memory_space<smem>>
    %1087 = vector.broadcast %1086 : f32 to vector<8x128xf32>
    %1088 = arith.mulf %67, %1087 : vector<8x128xf32>
    %1089 = arith.addf %1085, %1088 : vector<8x128xf32>
    %c11_536 = arith.constant 11 : index
    %c3_537 = arith.constant 3 : index
    %1090 = memref.load %arg4[%c11_536, %c3_537] : memref<12x16xf32, #tpu.memory_space<smem>>
    %1091 = vector.broadcast %1090 : f32 to vector<8x128xf32>
    %1092 = arith.mulf %87, %1091 : vector<8x128xf32>
    %1093 = arith.addf %1089, %1092 : vector<8x128xf32>
    %c11_538 = arith.constant 11 : index
    %c4_539 = arith.constant 4 : index
    %1094 = memref.load %arg4[%c11_538, %c4_539] : memref<12x16xf32, #tpu.memory_space<smem>>
    %1095 = vector.broadcast %1094 : f32 to vector<8x128xf32>
    %1096 = arith.mulf %107, %1095 : vector<8x128xf32>
    %1097 = arith.addf %1093, %1096 : vector<8x128xf32>
    %c11_540 = arith.constant 11 : index
    %c5_541 = arith.constant 5 : index
    %1098 = memref.load %arg4[%c11_540, %c5_541] : memref<12x16xf32, #tpu.memory_space<smem>>
    %1099 = vector.broadcast %1098 : f32 to vector<8x128xf32>
    %1100 = arith.mulf %127, %1099 : vector<8x128xf32>
    %1101 = arith.addf %1097, %1100 : vector<8x128xf32>
    %c11_542 = arith.constant 11 : index
    %c6_543 = arith.constant 6 : index
    %1102 = memref.load %arg4[%c11_542, %c6_543] : memref<12x16xf32, #tpu.memory_space<smem>>
    %1103 = vector.broadcast %1102 : f32 to vector<8x128xf32>
    %1104 = arith.mulf %147, %1103 : vector<8x128xf32>
    %1105 = arith.addf %1101, %1104 : vector<8x128xf32>
    %c11_544 = arith.constant 11 : index
    %c7_545 = arith.constant 7 : index
    %1106 = memref.load %arg4[%c11_544, %c7_545] : memref<12x16xf32, #tpu.memory_space<smem>>
    %1107 = vector.broadcast %1106 : f32 to vector<8x128xf32>
    %1108 = arith.mulf %167, %1107 : vector<8x128xf32>
    %1109 = arith.addf %1105, %1108 : vector<8x128xf32>
    %c11_546 = arith.constant 11 : index
    %c8_547 = arith.constant 8 : index
    %1110 = memref.load %arg4[%c11_546, %c8_547] : memref<12x16xf32, #tpu.memory_space<smem>>
    %1111 = vector.broadcast %1110 : f32 to vector<8x128xf32>
    %1112 = arith.mulf %187, %1111 : vector<8x128xf32>
    %1113 = arith.addf %1109, %1112 : vector<8x128xf32>
    %c11_548 = arith.constant 11 : index
    %c9_549 = arith.constant 9 : index
    %1114 = memref.load %arg4[%c11_548, %c9_549] : memref<12x16xf32, #tpu.memory_space<smem>>
    %1115 = vector.broadcast %1114 : f32 to vector<8x128xf32>
    %1116 = arith.mulf %207, %1115 : vector<8x128xf32>
    %1117 = arith.addf %1113, %1116 : vector<8x128xf32>
    %c11_550 = arith.constant 11 : index
    %c10_551 = arith.constant 10 : index
    %1118 = memref.load %arg4[%c11_550, %c10_551] : memref<12x16xf32, #tpu.memory_space<smem>>
    %1119 = vector.broadcast %1118 : f32 to vector<8x128xf32>
    %1120 = arith.mulf %227, %1119 : vector<8x128xf32>
    %1121 = arith.addf %1117, %1120 : vector<8x128xf32>
    %c11_552 = arith.constant 11 : index
    %c11_553 = arith.constant 11 : index
    %1122 = memref.load %arg4[%c11_552, %c11_553] : memref<12x16xf32, #tpu.memory_space<smem>>
    %1123 = vector.broadcast %1122 : f32 to vector<8x128xf32>
    %1124 = arith.mulf %247, %1123 : vector<8x128xf32>
    %1125 = arith.addf %1121, %1124 : vector<8x128xf32>
    %c11_554 = arith.constant 11 : index
    %c12_555 = arith.constant 12 : index
    %1126 = memref.load %arg4[%c11_554, %c12_555] : memref<12x16xf32, #tpu.memory_space<smem>>
    %1127 = vector.broadcast %1126 : f32 to vector<8x128xf32>
    %1128 = arith.mulf %267, %1127 : vector<8x128xf32>
    %1129 = arith.addf %1125, %1128 : vector<8x128xf32>
    %c11_556 = arith.constant 11 : index
    %c13_557 = arith.constant 13 : index
    %1130 = memref.load %arg4[%c11_556, %c13_557] : memref<12x16xf32, #tpu.memory_space<smem>>
    %1131 = vector.broadcast %1130 : f32 to vector<8x128xf32>
    %1132 = arith.mulf %287, %1131 : vector<8x128xf32>
    %1133 = arith.addf %1129, %1132 : vector<8x128xf32>
    %c11_558 = arith.constant 11 : index
    %c14_559 = arith.constant 14 : index
    %1134 = memref.load %arg4[%c11_558, %c14_559] : memref<12x16xf32, #tpu.memory_space<smem>>
    %1135 = vector.broadcast %1134 : f32 to vector<8x128xf32>
    %1136 = arith.mulf %307, %1135 : vector<8x128xf32>
    %1137 = arith.addf %1133, %1136 : vector<8x128xf32>
    %c11_560 = arith.constant 11 : index
    %c15_561 = arith.constant 15 : index
    %1138 = memref.load %arg4[%c11_560, %c15_561] : memref<12x16xf32, #tpu.memory_space<smem>>
    %1139 = vector.broadcast %1138 : f32 to vector<8x128xf32>
    %1140 = arith.mulf %327, %1139 : vector<8x128xf32>
    %1141 = arith.addf %1137, %1140 : vector<8x128xf32>
    %cst_562 = arith.constant 0.000000e+00 : f32
    %1142 = vector.broadcast %cst_562 : f32 to vector<8x128xf32>
    %1143 = arith.maximumf %1141, %1142 : vector<8x128xf32>
    %c0_563 = arith.constant 0 : index
    %c0_564 = arith.constant 0 : index
    %1144 = memref.load %arg6[%c0_563, %c0_564] : memref<8x12xf32, #tpu.memory_space<smem>>
    %1145 = vector.broadcast %1144 : f32 to vector<8x128xf32>
    %1146 = arith.mulf %395, %1145 : vector<8x128xf32>
    %c0_565 = arith.constant 0 : index
    %1147 = memref.load %arg7[%c0_565] : memref<8xf32, #tpu.memory_space<smem>>
    %1148 = vector.broadcast %1147 : f32 to vector<8x128xf32>
    %1149 = arith.addf %1146, %1148 : vector<8x128xf32>
    %c0_566 = arith.constant 0 : index
    %c1_567 = arith.constant 1 : index
    %1150 = memref.load %arg6[%c0_566, %c1_567] : memref<8x12xf32, #tpu.memory_space<smem>>
    %1151 = vector.broadcast %1150 : f32 to vector<8x128xf32>
    %1152 = arith.mulf %463, %1151 : vector<8x128xf32>
    %1153 = arith.addf %1149, %1152 : vector<8x128xf32>
    %c0_568 = arith.constant 0 : index
    %c2_569 = arith.constant 2 : index
    %1154 = memref.load %arg6[%c0_568, %c2_569] : memref<8x12xf32, #tpu.memory_space<smem>>
    %1155 = vector.broadcast %1154 : f32 to vector<8x128xf32>
    %1156 = arith.mulf %531, %1155 : vector<8x128xf32>
    %1157 = arith.addf %1153, %1156 : vector<8x128xf32>
    %c0_570 = arith.constant 0 : index
    %c3_571 = arith.constant 3 : index
    %1158 = memref.load %arg6[%c0_570, %c3_571] : memref<8x12xf32, #tpu.memory_space<smem>>
    %1159 = vector.broadcast %1158 : f32 to vector<8x128xf32>
    %1160 = arith.mulf %599, %1159 : vector<8x128xf32>
    %1161 = arith.addf %1157, %1160 : vector<8x128xf32>
    %c0_572 = arith.constant 0 : index
    %c4_573 = arith.constant 4 : index
    %1162 = memref.load %arg6[%c0_572, %c4_573] : memref<8x12xf32, #tpu.memory_space<smem>>
    %1163 = vector.broadcast %1162 : f32 to vector<8x128xf32>
    %1164 = arith.mulf %667, %1163 : vector<8x128xf32>
    %1165 = arith.addf %1161, %1164 : vector<8x128xf32>
    %c0_574 = arith.constant 0 : index
    %c5_575 = arith.constant 5 : index
    %1166 = memref.load %arg6[%c0_574, %c5_575] : memref<8x12xf32, #tpu.memory_space<smem>>
    %1167 = vector.broadcast %1166 : f32 to vector<8x128xf32>
    %1168 = arith.mulf %735, %1167 : vector<8x128xf32>
    %1169 = arith.addf %1165, %1168 : vector<8x128xf32>
    %c0_576 = arith.constant 0 : index
    %c6_577 = arith.constant 6 : index
    %1170 = memref.load %arg6[%c0_576, %c6_577] : memref<8x12xf32, #tpu.memory_space<smem>>
    %1171 = vector.broadcast %1170 : f32 to vector<8x128xf32>
    %1172 = arith.mulf %803, %1171 : vector<8x128xf32>
    %1173 = arith.addf %1169, %1172 : vector<8x128xf32>
    %c0_578 = arith.constant 0 : index
    %c7_579 = arith.constant 7 : index
    %1174 = memref.load %arg6[%c0_578, %c7_579] : memref<8x12xf32, #tpu.memory_space<smem>>
    %1175 = vector.broadcast %1174 : f32 to vector<8x128xf32>
    %1176 = arith.mulf %871, %1175 : vector<8x128xf32>
    %1177 = arith.addf %1173, %1176 : vector<8x128xf32>
    %c0_580 = arith.constant 0 : index
    %c8_581 = arith.constant 8 : index
    %1178 = memref.load %arg6[%c0_580, %c8_581] : memref<8x12xf32, #tpu.memory_space<smem>>
    %1179 = vector.broadcast %1178 : f32 to vector<8x128xf32>
    %1180 = arith.mulf %939, %1179 : vector<8x128xf32>
    %1181 = arith.addf %1177, %1180 : vector<8x128xf32>
    %c0_582 = arith.constant 0 : index
    %c9_583 = arith.constant 9 : index
    %1182 = memref.load %arg6[%c0_582, %c9_583] : memref<8x12xf32, #tpu.memory_space<smem>>
    %1183 = vector.broadcast %1182 : f32 to vector<8x128xf32>
    %1184 = arith.mulf %1007, %1183 : vector<8x128xf32>
    %1185 = arith.addf %1181, %1184 : vector<8x128xf32>
    %c0_584 = arith.constant 0 : index
    %c10_585 = arith.constant 10 : index
    %1186 = memref.load %arg6[%c0_584, %c10_585] : memref<8x12xf32, #tpu.memory_space<smem>>
    %1187 = vector.broadcast %1186 : f32 to vector<8x128xf32>
    %1188 = arith.mulf %1075, %1187 : vector<8x128xf32>
    %1189 = arith.addf %1185, %1188 : vector<8x128xf32>
    %c0_586 = arith.constant 0 : index
    %c11_587 = arith.constant 11 : index
    %1190 = memref.load %arg6[%c0_586, %c11_587] : memref<8x12xf32, #tpu.memory_space<smem>>
    %1191 = vector.broadcast %1190 : f32 to vector<8x128xf32>
    %1192 = arith.mulf %1143, %1191 : vector<8x128xf32>
    %1193 = arith.addf %1189, %1192 : vector<8x128xf32>
    %cst_588 = arith.constant 0.000000e+00 : f32
    %1194 = vector.broadcast %cst_588 : f32 to vector<8x128xf32>
    %1195 = arith.maximumf %1193, %1194 : vector<8x128xf32>
    %c1_589 = arith.constant 1 : index
    %c0_590 = arith.constant 0 : index
    %1196 = memref.load %arg6[%c1_589, %c0_590] : memref<8x12xf32, #tpu.memory_space<smem>>
    %1197 = vector.broadcast %1196 : f32 to vector<8x128xf32>
    %1198 = arith.mulf %395, %1197 : vector<8x128xf32>
    %c1_591 = arith.constant 1 : index
    %1199 = memref.load %arg7[%c1_591] : memref<8xf32, #tpu.memory_space<smem>>
    %1200 = vector.broadcast %1199 : f32 to vector<8x128xf32>
    %1201 = arith.addf %1198, %1200 : vector<8x128xf32>
    %c1_592 = arith.constant 1 : index
    %c1_593 = arith.constant 1 : index
    %1202 = memref.load %arg6[%c1_592, %c1_593] : memref<8x12xf32, #tpu.memory_space<smem>>
    %1203 = vector.broadcast %1202 : f32 to vector<8x128xf32>
    %1204 = arith.mulf %463, %1203 : vector<8x128xf32>
    %1205 = arith.addf %1201, %1204 : vector<8x128xf32>
    %c1_594 = arith.constant 1 : index
    %c2_595 = arith.constant 2 : index
    %1206 = memref.load %arg6[%c1_594, %c2_595] : memref<8x12xf32, #tpu.memory_space<smem>>
    %1207 = vector.broadcast %1206 : f32 to vector<8x128xf32>
    %1208 = arith.mulf %531, %1207 : vector<8x128xf32>
    %1209 = arith.addf %1205, %1208 : vector<8x128xf32>
    %c1_596 = arith.constant 1 : index
    %c3_597 = arith.constant 3 : index
    %1210 = memref.load %arg6[%c1_596, %c3_597] : memref<8x12xf32, #tpu.memory_space<smem>>
    %1211 = vector.broadcast %1210 : f32 to vector<8x128xf32>
    %1212 = arith.mulf %599, %1211 : vector<8x128xf32>
    %1213 = arith.addf %1209, %1212 : vector<8x128xf32>
    %c1_598 = arith.constant 1 : index
    %c4_599 = arith.constant 4 : index
    %1214 = memref.load %arg6[%c1_598, %c4_599] : memref<8x12xf32, #tpu.memory_space<smem>>
    %1215 = vector.broadcast %1214 : f32 to vector<8x128xf32>
    %1216 = arith.mulf %667, %1215 : vector<8x128xf32>
    %1217 = arith.addf %1213, %1216 : vector<8x128xf32>
    %c1_600 = arith.constant 1 : index
    %c5_601 = arith.constant 5 : index
    %1218 = memref.load %arg6[%c1_600, %c5_601] : memref<8x12xf32, #tpu.memory_space<smem>>
    %1219 = vector.broadcast %1218 : f32 to vector<8x128xf32>
    %1220 = arith.mulf %735, %1219 : vector<8x128xf32>
    %1221 = arith.addf %1217, %1220 : vector<8x128xf32>
    %c1_602 = arith.constant 1 : index
    %c6_603 = arith.constant 6 : index
    %1222 = memref.load %arg6[%c1_602, %c6_603] : memref<8x12xf32, #tpu.memory_space<smem>>
    %1223 = vector.broadcast %1222 : f32 to vector<8x128xf32>
    %1224 = arith.mulf %803, %1223 : vector<8x128xf32>
    %1225 = arith.addf %1221, %1224 : vector<8x128xf32>
    %c1_604 = arith.constant 1 : index
    %c7_605 = arith.constant 7 : index
    %1226 = memref.load %arg6[%c1_604, %c7_605] : memref<8x12xf32, #tpu.memory_space<smem>>
    %1227 = vector.broadcast %1226 : f32 to vector<8x128xf32>
    %1228 = arith.mulf %871, %1227 : vector<8x128xf32>
    %1229 = arith.addf %1225, %1228 : vector<8x128xf32>
    %c1_606 = arith.constant 1 : index
    %c8_607 = arith.constant 8 : index
    %1230 = memref.load %arg6[%c1_606, %c8_607] : memref<8x12xf32, #tpu.memory_space<smem>>
    %1231 = vector.broadcast %1230 : f32 to vector<8x128xf32>
    %1232 = arith.mulf %939, %1231 : vector<8x128xf32>
    %1233 = arith.addf %1229, %1232 : vector<8x128xf32>
    %c1_608 = arith.constant 1 : index
    %c9_609 = arith.constant 9 : index
    %1234 = memref.load %arg6[%c1_608, %c9_609] : memref<8x12xf32, #tpu.memory_space<smem>>
    %1235 = vector.broadcast %1234 : f32 to vector<8x128xf32>
    %1236 = arith.mulf %1007, %1235 : vector<8x128xf32>
    %1237 = arith.addf %1233, %1236 : vector<8x128xf32>
    %c1_610 = arith.constant 1 : index
    %c10_611 = arith.constant 10 : index
    %1238 = memref.load %arg6[%c1_610, %c10_611] : memref<8x12xf32, #tpu.memory_space<smem>>
    %1239 = vector.broadcast %1238 : f32 to vector<8x128xf32>
    %1240 = arith.mulf %1075, %1239 : vector<8x128xf32>
    %1241 = arith.addf %1237, %1240 : vector<8x128xf32>
    %c1_612 = arith.constant 1 : index
    %c11_613 = arith.constant 11 : index
    %1242 = memref.load %arg6[%c1_612, %c11_613] : memref<8x12xf32, #tpu.memory_space<smem>>
    %1243 = vector.broadcast %1242 : f32 to vector<8x128xf32>
    %1244 = arith.mulf %1143, %1243 : vector<8x128xf32>
    %1245 = arith.addf %1241, %1244 : vector<8x128xf32>
    %cst_614 = arith.constant 0.000000e+00 : f32
    %1246 = vector.broadcast %cst_614 : f32 to vector<8x128xf32>
    %1247 = arith.maximumf %1245, %1246 : vector<8x128xf32>
    %c2_615 = arith.constant 2 : index
    %c0_616 = arith.constant 0 : index
    %1248 = memref.load %arg6[%c2_615, %c0_616] : memref<8x12xf32, #tpu.memory_space<smem>>
    %1249 = vector.broadcast %1248 : f32 to vector<8x128xf32>
    %1250 = arith.mulf %395, %1249 : vector<8x128xf32>
    %c2_617 = arith.constant 2 : index
    %1251 = memref.load %arg7[%c2_617] : memref<8xf32, #tpu.memory_space<smem>>
    %1252 = vector.broadcast %1251 : f32 to vector<8x128xf32>
    %1253 = arith.addf %1250, %1252 : vector<8x128xf32>
    %c2_618 = arith.constant 2 : index
    %c1_619 = arith.constant 1 : index
    %1254 = memref.load %arg6[%c2_618, %c1_619] : memref<8x12xf32, #tpu.memory_space<smem>>
    %1255 = vector.broadcast %1254 : f32 to vector<8x128xf32>
    %1256 = arith.mulf %463, %1255 : vector<8x128xf32>
    %1257 = arith.addf %1253, %1256 : vector<8x128xf32>
    %c2_620 = arith.constant 2 : index
    %c2_621 = arith.constant 2 : index
    %1258 = memref.load %arg6[%c2_620, %c2_621] : memref<8x12xf32, #tpu.memory_space<smem>>
    %1259 = vector.broadcast %1258 : f32 to vector<8x128xf32>
    %1260 = arith.mulf %531, %1259 : vector<8x128xf32>
    %1261 = arith.addf %1257, %1260 : vector<8x128xf32>
    %c2_622 = arith.constant 2 : index
    %c3_623 = arith.constant 3 : index
    %1262 = memref.load %arg6[%c2_622, %c3_623] : memref<8x12xf32, #tpu.memory_space<smem>>
    %1263 = vector.broadcast %1262 : f32 to vector<8x128xf32>
    %1264 = arith.mulf %599, %1263 : vector<8x128xf32>
    %1265 = arith.addf %1261, %1264 : vector<8x128xf32>
    %c2_624 = arith.constant 2 : index
    %c4_625 = arith.constant 4 : index
    %1266 = memref.load %arg6[%c2_624, %c4_625] : memref<8x12xf32, #tpu.memory_space<smem>>
    %1267 = vector.broadcast %1266 : f32 to vector<8x128xf32>
    %1268 = arith.mulf %667, %1267 : vector<8x128xf32>
    %1269 = arith.addf %1265, %1268 : vector<8x128xf32>
    %c2_626 = arith.constant 2 : index
    %c5_627 = arith.constant 5 : index
    %1270 = memref.load %arg6[%c2_626, %c5_627] : memref<8x12xf32, #tpu.memory_space<smem>>
    %1271 = vector.broadcast %1270 : f32 to vector<8x128xf32>
    %1272 = arith.mulf %735, %1271 : vector<8x128xf32>
    %1273 = arith.addf %1269, %1272 : vector<8x128xf32>
    %c2_628 = arith.constant 2 : index
    %c6_629 = arith.constant 6 : index
    %1274 = memref.load %arg6[%c2_628, %c6_629] : memref<8x12xf32, #tpu.memory_space<smem>>
    %1275 = vector.broadcast %1274 : f32 to vector<8x128xf32>
    %1276 = arith.mulf %803, %1275 : vector<8x128xf32>
    %1277 = arith.addf %1273, %1276 : vector<8x128xf32>
    %c2_630 = arith.constant 2 : index
    %c7_631 = arith.constant 7 : index
    %1278 = memref.load %arg6[%c2_630, %c7_631] : memref<8x12xf32, #tpu.memory_space<smem>>
    %1279 = vector.broadcast %1278 : f32 to vector<8x128xf32>
    %1280 = arith.mulf %871, %1279 : vector<8x128xf32>
    %1281 = arith.addf %1277, %1280 : vector<8x128xf32>
    %c2_632 = arith.constant 2 : index
    %c8_633 = arith.constant 8 : index
    %1282 = memref.load %arg6[%c2_632, %c8_633] : memref<8x12xf32, #tpu.memory_space<smem>>
    %1283 = vector.broadcast %1282 : f32 to vector<8x128xf32>
    %1284 = arith.mulf %939, %1283 : vector<8x128xf32>
    %1285 = arith.addf %1281, %1284 : vector<8x128xf32>
    %c2_634 = arith.constant 2 : index
    %c9_635 = arith.constant 9 : index
    %1286 = memref.load %arg6[%c2_634, %c9_635] : memref<8x12xf32, #tpu.memory_space<smem>>
    %1287 = vector.broadcast %1286 : f32 to vector<8x128xf32>
    %1288 = arith.mulf %1007, %1287 : vector<8x128xf32>
    %1289 = arith.addf %1285, %1288 : vector<8x128xf32>
    %c2_636 = arith.constant 2 : index
    %c10_637 = arith.constant 10 : index
    %1290 = memref.load %arg6[%c2_636, %c10_637] : memref<8x12xf32, #tpu.memory_space<smem>>
    %1291 = vector.broadcast %1290 : f32 to vector<8x128xf32>
    %1292 = arith.mulf %1075, %1291 : vector<8x128xf32>
    %1293 = arith.addf %1289, %1292 : vector<8x128xf32>
    %c2_638 = arith.constant 2 : index
    %c11_639 = arith.constant 11 : index
    %1294 = memref.load %arg6[%c2_638, %c11_639] : memref<8x12xf32, #tpu.memory_space<smem>>
    %1295 = vector.broadcast %1294 : f32 to vector<8x128xf32>
    %1296 = arith.mulf %1143, %1295 : vector<8x128xf32>
    %1297 = arith.addf %1293, %1296 : vector<8x128xf32>
    %cst_640 = arith.constant 0.000000e+00 : f32
    %1298 = vector.broadcast %cst_640 : f32 to vector<8x128xf32>
    %1299 = arith.maximumf %1297, %1298 : vector<8x128xf32>
    %c3_641 = arith.constant 3 : index
    %c0_642 = arith.constant 0 : index
    %1300 = memref.load %arg6[%c3_641, %c0_642] : memref<8x12xf32, #tpu.memory_space<smem>>
    %1301 = vector.broadcast %1300 : f32 to vector<8x128xf32>
    %1302 = arith.mulf %395, %1301 : vector<8x128xf32>
    %c3_643 = arith.constant 3 : index
    %1303 = memref.load %arg7[%c3_643] : memref<8xf32, #tpu.memory_space<smem>>
    %1304 = vector.broadcast %1303 : f32 to vector<8x128xf32>
    %1305 = arith.addf %1302, %1304 : vector<8x128xf32>
    %c3_644 = arith.constant 3 : index
    %c1_645 = arith.constant 1 : index
    %1306 = memref.load %arg6[%c3_644, %c1_645] : memref<8x12xf32, #tpu.memory_space<smem>>
    %1307 = vector.broadcast %1306 : f32 to vector<8x128xf32>
    %1308 = arith.mulf %463, %1307 : vector<8x128xf32>
    %1309 = arith.addf %1305, %1308 : vector<8x128xf32>
    %c3_646 = arith.constant 3 : index
    %c2_647 = arith.constant 2 : index
    %1310 = memref.load %arg6[%c3_646, %c2_647] : memref<8x12xf32, #tpu.memory_space<smem>>
    %1311 = vector.broadcast %1310 : f32 to vector<8x128xf32>
    %1312 = arith.mulf %531, %1311 : vector<8x128xf32>
    %1313 = arith.addf %1309, %1312 : vector<8x128xf32>
    %c3_648 = arith.constant 3 : index
    %c3_649 = arith.constant 3 : index
    %1314 = memref.load %arg6[%c3_648, %c3_649] : memref<8x12xf32, #tpu.memory_space<smem>>
    %1315 = vector.broadcast %1314 : f32 to vector<8x128xf32>
    %1316 = arith.mulf %599, %1315 : vector<8x128xf32>
    %1317 = arith.addf %1313, %1316 : vector<8x128xf32>
    %c3_650 = arith.constant 3 : index
    %c4_651 = arith.constant 4 : index
    %1318 = memref.load %arg6[%c3_650, %c4_651] : memref<8x12xf32, #tpu.memory_space<smem>>
    %1319 = vector.broadcast %1318 : f32 to vector<8x128xf32>
    %1320 = arith.mulf %667, %1319 : vector<8x128xf32>
    %1321 = arith.addf %1317, %1320 : vector<8x128xf32>
    %c3_652 = arith.constant 3 : index
    %c5_653 = arith.constant 5 : index
    %1322 = memref.load %arg6[%c3_652, %c5_653] : memref<8x12xf32, #tpu.memory_space<smem>>
    %1323 = vector.broadcast %1322 : f32 to vector<8x128xf32>
    %1324 = arith.mulf %735, %1323 : vector<8x128xf32>
    %1325 = arith.addf %1321, %1324 : vector<8x128xf32>
    %c3_654 = arith.constant 3 : index
    %c6_655 = arith.constant 6 : index
    %1326 = memref.load %arg6[%c3_654, %c6_655] : memref<8x12xf32, #tpu.memory_space<smem>>
    %1327 = vector.broadcast %1326 : f32 to vector<8x128xf32>
    %1328 = arith.mulf %803, %1327 : vector<8x128xf32>
    %1329 = arith.addf %1325, %1328 : vector<8x128xf32>
    %c3_656 = arith.constant 3 : index
    %c7_657 = arith.constant 7 : index
    %1330 = memref.load %arg6[%c3_656, %c7_657] : memref<8x12xf32, #tpu.memory_space<smem>>
    %1331 = vector.broadcast %1330 : f32 to vector<8x128xf32>
    %1332 = arith.mulf %871, %1331 : vector<8x128xf32>
    %1333 = arith.addf %1329, %1332 : vector<8x128xf32>
    %c3_658 = arith.constant 3 : index
    %c8_659 = arith.constant 8 : index
    %1334 = memref.load %arg6[%c3_658, %c8_659] : memref<8x12xf32, #tpu.memory_space<smem>>
    %1335 = vector.broadcast %1334 : f32 to vector<8x128xf32>
    %1336 = arith.mulf %939, %1335 : vector<8x128xf32>
    %1337 = arith.addf %1333, %1336 : vector<8x128xf32>
    %c3_660 = arith.constant 3 : index
    %c9_661 = arith.constant 9 : index
    %1338 = memref.load %arg6[%c3_660, %c9_661] : memref<8x12xf32, #tpu.memory_space<smem>>
    %1339 = vector.broadcast %1338 : f32 to vector<8x128xf32>
    %1340 = arith.mulf %1007, %1339 : vector<8x128xf32>
    %1341 = arith.addf %1337, %1340 : vector<8x128xf32>
    %c3_662 = arith.constant 3 : index
    %c10_663 = arith.constant 10 : index
    %1342 = memref.load %arg6[%c3_662, %c10_663] : memref<8x12xf32, #tpu.memory_space<smem>>
    %1343 = vector.broadcast %1342 : f32 to vector<8x128xf32>
    %1344 = arith.mulf %1075, %1343 : vector<8x128xf32>
    %1345 = arith.addf %1341, %1344 : vector<8x128xf32>
    %c3_664 = arith.constant 3 : index
    %c11_665 = arith.constant 11 : index
    %1346 = memref.load %arg6[%c3_664, %c11_665] : memref<8x12xf32, #tpu.memory_space<smem>>
    %1347 = vector.broadcast %1346 : f32 to vector<8x128xf32>
    %1348 = arith.mulf %1143, %1347 : vector<8x128xf32>
    %1349 = arith.addf %1345, %1348 : vector<8x128xf32>
    %cst_666 = arith.constant 0.000000e+00 : f32
    %1350 = vector.broadcast %cst_666 : f32 to vector<8x128xf32>
    %1351 = arith.maximumf %1349, %1350 : vector<8x128xf32>
    %c4_667 = arith.constant 4 : index
    %c0_668 = arith.constant 0 : index
    %1352 = memref.load %arg6[%c4_667, %c0_668] : memref<8x12xf32, #tpu.memory_space<smem>>
    %1353 = vector.broadcast %1352 : f32 to vector<8x128xf32>
    %1354 = arith.mulf %395, %1353 : vector<8x128xf32>
    %c4_669 = arith.constant 4 : index
    %1355 = memref.load %arg7[%c4_669] : memref<8xf32, #tpu.memory_space<smem>>
    %1356 = vector.broadcast %1355 : f32 to vector<8x128xf32>
    %1357 = arith.addf %1354, %1356 : vector<8x128xf32>
    %c4_670 = arith.constant 4 : index
    %c1_671 = arith.constant 1 : index
    %1358 = memref.load %arg6[%c4_670, %c1_671] : memref<8x12xf32, #tpu.memory_space<smem>>
    %1359 = vector.broadcast %1358 : f32 to vector<8x128xf32>
    %1360 = arith.mulf %463, %1359 : vector<8x128xf32>
    %1361 = arith.addf %1357, %1360 : vector<8x128xf32>
    %c4_672 = arith.constant 4 : index
    %c2_673 = arith.constant 2 : index
    %1362 = memref.load %arg6[%c4_672, %c2_673] : memref<8x12xf32, #tpu.memory_space<smem>>
    %1363 = vector.broadcast %1362 : f32 to vector<8x128xf32>
    %1364 = arith.mulf %531, %1363 : vector<8x128xf32>
    %1365 = arith.addf %1361, %1364 : vector<8x128xf32>
    %c4_674 = arith.constant 4 : index
    %c3_675 = arith.constant 3 : index
    %1366 = memref.load %arg6[%c4_674, %c3_675] : memref<8x12xf32, #tpu.memory_space<smem>>
    %1367 = vector.broadcast %1366 : f32 to vector<8x128xf32>
    %1368 = arith.mulf %599, %1367 : vector<8x128xf32>
    %1369 = arith.addf %1365, %1368 : vector<8x128xf32>
    %c4_676 = arith.constant 4 : index
    %c4_677 = arith.constant 4 : index
    %1370 = memref.load %arg6[%c4_676, %c4_677] : memref<8x12xf32, #tpu.memory_space<smem>>
    %1371 = vector.broadcast %1370 : f32 to vector<8x128xf32>
    %1372 = arith.mulf %667, %1371 : vector<8x128xf32>
    %1373 = arith.addf %1369, %1372 : vector<8x128xf32>
    %c4_678 = arith.constant 4 : index
    %c5_679 = arith.constant 5 : index
    %1374 = memref.load %arg6[%c4_678, %c5_679] : memref<8x12xf32, #tpu.memory_space<smem>>
    %1375 = vector.broadcast %1374 : f32 to vector<8x128xf32>
    %1376 = arith.mulf %735, %1375 : vector<8x128xf32>
    %1377 = arith.addf %1373, %1376 : vector<8x128xf32>
    %c4_680 = arith.constant 4 : index
    %c6_681 = arith.constant 6 : index
    %1378 = memref.load %arg6[%c4_680, %c6_681] : memref<8x12xf32, #tpu.memory_space<smem>>
    %1379 = vector.broadcast %1378 : f32 to vector<8x128xf32>
    %1380 = arith.mulf %803, %1379 : vector<8x128xf32>
    %1381 = arith.addf %1377, %1380 : vector<8x128xf32>
    %c4_682 = arith.constant 4 : index
    %c7_683 = arith.constant 7 : index
    %1382 = memref.load %arg6[%c4_682, %c7_683] : memref<8x12xf32, #tpu.memory_space<smem>>
    %1383 = vector.broadcast %1382 : f32 to vector<8x128xf32>
    %1384 = arith.mulf %871, %1383 : vector<8x128xf32>
    %1385 = arith.addf %1381, %1384 : vector<8x128xf32>
    %c4_684 = arith.constant 4 : index
    %c8_685 = arith.constant 8 : index
    %1386 = memref.load %arg6[%c4_684, %c8_685] : memref<8x12xf32, #tpu.memory_space<smem>>
    %1387 = vector.broadcast %1386 : f32 to vector<8x128xf32>
    %1388 = arith.mulf %939, %1387 : vector<8x128xf32>
    %1389 = arith.addf %1385, %1388 : vector<8x128xf32>
    %c4_686 = arith.constant 4 : index
    %c9_687 = arith.constant 9 : index
    %1390 = memref.load %arg6[%c4_686, %c9_687] : memref<8x12xf32, #tpu.memory_space<smem>>
    %1391 = vector.broadcast %1390 : f32 to vector<8x128xf32>
    %1392 = arith.mulf %1007, %1391 : vector<8x128xf32>
    %1393 = arith.addf %1389, %1392 : vector<8x128xf32>
    %c4_688 = arith.constant 4 : index
    %c10_689 = arith.constant 10 : index
    %1394 = memref.load %arg6[%c4_688, %c10_689] : memref<8x12xf32, #tpu.memory_space<smem>>
    %1395 = vector.broadcast %1394 : f32 to vector<8x128xf32>
    %1396 = arith.mulf %1075, %1395 : vector<8x128xf32>
    %1397 = arith.addf %1393, %1396 : vector<8x128xf32>
    %c4_690 = arith.constant 4 : index
    %c11_691 = arith.constant 11 : index
    %1398 = memref.load %arg6[%c4_690, %c11_691] : memref<8x12xf32, #tpu.memory_space<smem>>
    %1399 = vector.broadcast %1398 : f32 to vector<8x128xf32>
    %1400 = arith.mulf %1143, %1399 : vector<8x128xf32>
    %1401 = arith.addf %1397, %1400 : vector<8x128xf32>
    %cst_692 = arith.constant 0.000000e+00 : f32
    %1402 = vector.broadcast %cst_692 : f32 to vector<8x128xf32>
    %1403 = arith.maximumf %1401, %1402 : vector<8x128xf32>
    %c5_693 = arith.constant 5 : index
    %c0_694 = arith.constant 0 : index
    %1404 = memref.load %arg6[%c5_693, %c0_694] : memref<8x12xf32, #tpu.memory_space<smem>>
    %1405 = vector.broadcast %1404 : f32 to vector<8x128xf32>
    %1406 = arith.mulf %395, %1405 : vector<8x128xf32>
    %c5_695 = arith.constant 5 : index
    %1407 = memref.load %arg7[%c5_695] : memref<8xf32, #tpu.memory_space<smem>>
    %1408 = vector.broadcast %1407 : f32 to vector<8x128xf32>
    %1409 = arith.addf %1406, %1408 : vector<8x128xf32>
    %c5_696 = arith.constant 5 : index
    %c1_697 = arith.constant 1 : index
    %1410 = memref.load %arg6[%c5_696, %c1_697] : memref<8x12xf32, #tpu.memory_space<smem>>
    %1411 = vector.broadcast %1410 : f32 to vector<8x128xf32>
    %1412 = arith.mulf %463, %1411 : vector<8x128xf32>
    %1413 = arith.addf %1409, %1412 : vector<8x128xf32>
    %c5_698 = arith.constant 5 : index
    %c2_699 = arith.constant 2 : index
    %1414 = memref.load %arg6[%c5_698, %c2_699] : memref<8x12xf32, #tpu.memory_space<smem>>
    %1415 = vector.broadcast %1414 : f32 to vector<8x128xf32>
    %1416 = arith.mulf %531, %1415 : vector<8x128xf32>
    %1417 = arith.addf %1413, %1416 : vector<8x128xf32>
    %c5_700 = arith.constant 5 : index
    %c3_701 = arith.constant 3 : index
    %1418 = memref.load %arg6[%c5_700, %c3_701] : memref<8x12xf32, #tpu.memory_space<smem>>
    %1419 = vector.broadcast %1418 : f32 to vector<8x128xf32>
    %1420 = arith.mulf %599, %1419 : vector<8x128xf32>
    %1421 = arith.addf %1417, %1420 : vector<8x128xf32>
    %c5_702 = arith.constant 5 : index
    %c4_703 = arith.constant 4 : index
    %1422 = memref.load %arg6[%c5_702, %c4_703] : memref<8x12xf32, #tpu.memory_space<smem>>
    %1423 = vector.broadcast %1422 : f32 to vector<8x128xf32>
    %1424 = arith.mulf %667, %1423 : vector<8x128xf32>
    %1425 = arith.addf %1421, %1424 : vector<8x128xf32>
    %c5_704 = arith.constant 5 : index
    %c5_705 = arith.constant 5 : index
    %1426 = memref.load %arg6[%c5_704, %c5_705] : memref<8x12xf32, #tpu.memory_space<smem>>
    %1427 = vector.broadcast %1426 : f32 to vector<8x128xf32>
    %1428 = arith.mulf %735, %1427 : vector<8x128xf32>
    %1429 = arith.addf %1425, %1428 : vector<8x128xf32>
    %c5_706 = arith.constant 5 : index
    %c6_707 = arith.constant 6 : index
    %1430 = memref.load %arg6[%c5_706, %c6_707] : memref<8x12xf32, #tpu.memory_space<smem>>
    %1431 = vector.broadcast %1430 : f32 to vector<8x128xf32>
    %1432 = arith.mulf %803, %1431 : vector<8x128xf32>
    %1433 = arith.addf %1429, %1432 : vector<8x128xf32>
    %c5_708 = arith.constant 5 : index
    %c7_709 = arith.constant 7 : index
    %1434 = memref.load %arg6[%c5_708, %c7_709] : memref<8x12xf32, #tpu.memory_space<smem>>
    %1435 = vector.broadcast %1434 : f32 to vector<8x128xf32>
    %1436 = arith.mulf %871, %1435 : vector<8x128xf32>
    %1437 = arith.addf %1433, %1436 : vector<8x128xf32>
    %c5_710 = arith.constant 5 : index
    %c8_711 = arith.constant 8 : index
    %1438 = memref.load %arg6[%c5_710, %c8_711] : memref<8x12xf32, #tpu.memory_space<smem>>
    %1439 = vector.broadcast %1438 : f32 to vector<8x128xf32>
    %1440 = arith.mulf %939, %1439 : vector<8x128xf32>
    %1441 = arith.addf %1437, %1440 : vector<8x128xf32>
    %c5_712 = arith.constant 5 : index
    %c9_713 = arith.constant 9 : index
    %1442 = memref.load %arg6[%c5_712, %c9_713] : memref<8x12xf32, #tpu.memory_space<smem>>
    %1443 = vector.broadcast %1442 : f32 to vector<8x128xf32>
    %1444 = arith.mulf %1007, %1443 : vector<8x128xf32>
    %1445 = arith.addf %1441, %1444 : vector<8x128xf32>
    %c5_714 = arith.constant 5 : index
    %c10_715 = arith.constant 10 : index
    %1446 = memref.load %arg6[%c5_714, %c10_715] : memref<8x12xf32, #tpu.memory_space<smem>>
    %1447 = vector.broadcast %1446 : f32 to vector<8x128xf32>
    %1448 = arith.mulf %1075, %1447 : vector<8x128xf32>
    %1449 = arith.addf %1445, %1448 : vector<8x128xf32>
    %c5_716 = arith.constant 5 : index
    %c11_717 = arith.constant 11 : index
    %1450 = memref.load %arg6[%c5_716, %c11_717] : memref<8x12xf32, #tpu.memory_space<smem>>
    %1451 = vector.broadcast %1450 : f32 to vector<8x128xf32>
    %1452 = arith.mulf %1143, %1451 : vector<8x128xf32>
    %1453 = arith.addf %1449, %1452 : vector<8x128xf32>
    %cst_718 = arith.constant 0.000000e+00 : f32
    %1454 = vector.broadcast %cst_718 : f32 to vector<8x128xf32>
    %1455 = arith.maximumf %1453, %1454 : vector<8x128xf32>
    %c6_719 = arith.constant 6 : index
    %c0_720 = arith.constant 0 : index
    %1456 = memref.load %arg6[%c6_719, %c0_720] : memref<8x12xf32, #tpu.memory_space<smem>>
    %1457 = vector.broadcast %1456 : f32 to vector<8x128xf32>
    %1458 = arith.mulf %395, %1457 : vector<8x128xf32>
    %c6_721 = arith.constant 6 : index
    %1459 = memref.load %arg7[%c6_721] : memref<8xf32, #tpu.memory_space<smem>>
    %1460 = vector.broadcast %1459 : f32 to vector<8x128xf32>
    %1461 = arith.addf %1458, %1460 : vector<8x128xf32>
    %c6_722 = arith.constant 6 : index
    %c1_723 = arith.constant 1 : index
    %1462 = memref.load %arg6[%c6_722, %c1_723] : memref<8x12xf32, #tpu.memory_space<smem>>
    %1463 = vector.broadcast %1462 : f32 to vector<8x128xf32>
    %1464 = arith.mulf %463, %1463 : vector<8x128xf32>
    %1465 = arith.addf %1461, %1464 : vector<8x128xf32>
    %c6_724 = arith.constant 6 : index
    %c2_725 = arith.constant 2 : index
    %1466 = memref.load %arg6[%c6_724, %c2_725] : memref<8x12xf32, #tpu.memory_space<smem>>
    %1467 = vector.broadcast %1466 : f32 to vector<8x128xf32>
    %1468 = arith.mulf %531, %1467 : vector<8x128xf32>
    %1469 = arith.addf %1465, %1468 : vector<8x128xf32>
    %c6_726 = arith.constant 6 : index
    %c3_727 = arith.constant 3 : index
    %1470 = memref.load %arg6[%c6_726, %c3_727] : memref<8x12xf32, #tpu.memory_space<smem>>
    %1471 = vector.broadcast %1470 : f32 to vector<8x128xf32>
    %1472 = arith.mulf %599, %1471 : vector<8x128xf32>
    %1473 = arith.addf %1469, %1472 : vector<8x128xf32>
    %c6_728 = arith.constant 6 : index
    %c4_729 = arith.constant 4 : index
    %1474 = memref.load %arg6[%c6_728, %c4_729] : memref<8x12xf32, #tpu.memory_space<smem>>
    %1475 = vector.broadcast %1474 : f32 to vector<8x128xf32>
    %1476 = arith.mulf %667, %1475 : vector<8x128xf32>
    %1477 = arith.addf %1473, %1476 : vector<8x128xf32>
    %c6_730 = arith.constant 6 : index
    %c5_731 = arith.constant 5 : index
    %1478 = memref.load %arg6[%c6_730, %c5_731] : memref<8x12xf32, #tpu.memory_space<smem>>
    %1479 = vector.broadcast %1478 : f32 to vector<8x128xf32>
    %1480 = arith.mulf %735, %1479 : vector<8x128xf32>
    %1481 = arith.addf %1477, %1480 : vector<8x128xf32>
    %c6_732 = arith.constant 6 : index
    %c6_733 = arith.constant 6 : index
    %1482 = memref.load %arg6[%c6_732, %c6_733] : memref<8x12xf32, #tpu.memory_space<smem>>
    %1483 = vector.broadcast %1482 : f32 to vector<8x128xf32>
    %1484 = arith.mulf %803, %1483 : vector<8x128xf32>
    %1485 = arith.addf %1481, %1484 : vector<8x128xf32>
    %c6_734 = arith.constant 6 : index
    %c7_735 = arith.constant 7 : index
    %1486 = memref.load %arg6[%c6_734, %c7_735] : memref<8x12xf32, #tpu.memory_space<smem>>
    %1487 = vector.broadcast %1486 : f32 to vector<8x128xf32>
    %1488 = arith.mulf %871, %1487 : vector<8x128xf32>
    %1489 = arith.addf %1485, %1488 : vector<8x128xf32>
    %c6_736 = arith.constant 6 : index
    %c8_737 = arith.constant 8 : index
    %1490 = memref.load %arg6[%c6_736, %c8_737] : memref<8x12xf32, #tpu.memory_space<smem>>
    %1491 = vector.broadcast %1490 : f32 to vector<8x128xf32>
    %1492 = arith.mulf %939, %1491 : vector<8x128xf32>
    %1493 = arith.addf %1489, %1492 : vector<8x128xf32>
    %c6_738 = arith.constant 6 : index
    %c9_739 = arith.constant 9 : index
    %1494 = memref.load %arg6[%c6_738, %c9_739] : memref<8x12xf32, #tpu.memory_space<smem>>
    %1495 = vector.broadcast %1494 : f32 to vector<8x128xf32>
    %1496 = arith.mulf %1007, %1495 : vector<8x128xf32>
    %1497 = arith.addf %1493, %1496 : vector<8x128xf32>
    %c6_740 = arith.constant 6 : index
    %c10_741 = arith.constant 10 : index
    %1498 = memref.load %arg6[%c6_740, %c10_741] : memref<8x12xf32, #tpu.memory_space<smem>>
    %1499 = vector.broadcast %1498 : f32 to vector<8x128xf32>
    %1500 = arith.mulf %1075, %1499 : vector<8x128xf32>
    %1501 = arith.addf %1497, %1500 : vector<8x128xf32>
    %c6_742 = arith.constant 6 : index
    %c11_743 = arith.constant 11 : index
    %1502 = memref.load %arg6[%c6_742, %c11_743] : memref<8x12xf32, #tpu.memory_space<smem>>
    %1503 = vector.broadcast %1502 : f32 to vector<8x128xf32>
    %1504 = arith.mulf %1143, %1503 : vector<8x128xf32>
    %1505 = arith.addf %1501, %1504 : vector<8x128xf32>
    %cst_744 = arith.constant 0.000000e+00 : f32
    %1506 = vector.broadcast %cst_744 : f32 to vector<8x128xf32>
    %1507 = arith.maximumf %1505, %1506 : vector<8x128xf32>
    %c7_745 = arith.constant 7 : index
    %c0_746 = arith.constant 0 : index
    %1508 = memref.load %arg6[%c7_745, %c0_746] : memref<8x12xf32, #tpu.memory_space<smem>>
    %1509 = vector.broadcast %1508 : f32 to vector<8x128xf32>
    %1510 = arith.mulf %395, %1509 : vector<8x128xf32>
    %c7_747 = arith.constant 7 : index
    %1511 = memref.load %arg7[%c7_747] : memref<8xf32, #tpu.memory_space<smem>>
    %1512 = vector.broadcast %1511 : f32 to vector<8x128xf32>
    %1513 = arith.addf %1510, %1512 : vector<8x128xf32>
    %c7_748 = arith.constant 7 : index
    %c1_749 = arith.constant 1 : index
    %1514 = memref.load %arg6[%c7_748, %c1_749] : memref<8x12xf32, #tpu.memory_space<smem>>
    %1515 = vector.broadcast %1514 : f32 to vector<8x128xf32>
    %1516 = arith.mulf %463, %1515 : vector<8x128xf32>
    %1517 = arith.addf %1513, %1516 : vector<8x128xf32>
    %c7_750 = arith.constant 7 : index
    %c2_751 = arith.constant 2 : index
    %1518 = memref.load %arg6[%c7_750, %c2_751] : memref<8x12xf32, #tpu.memory_space<smem>>
    %1519 = vector.broadcast %1518 : f32 to vector<8x128xf32>
    %1520 = arith.mulf %531, %1519 : vector<8x128xf32>
    %1521 = arith.addf %1517, %1520 : vector<8x128xf32>
    %c7_752 = arith.constant 7 : index
    %c3_753 = arith.constant 3 : index
    %1522 = memref.load %arg6[%c7_752, %c3_753] : memref<8x12xf32, #tpu.memory_space<smem>>
    %1523 = vector.broadcast %1522 : f32 to vector<8x128xf32>
    %1524 = arith.mulf %599, %1523 : vector<8x128xf32>
    %1525 = arith.addf %1521, %1524 : vector<8x128xf32>
    %c7_754 = arith.constant 7 : index
    %c4_755 = arith.constant 4 : index
    %1526 = memref.load %arg6[%c7_754, %c4_755] : memref<8x12xf32, #tpu.memory_space<smem>>
    %1527 = vector.broadcast %1526 : f32 to vector<8x128xf32>
    %1528 = arith.mulf %667, %1527 : vector<8x128xf32>
    %1529 = arith.addf %1525, %1528 : vector<8x128xf32>
    %c7_756 = arith.constant 7 : index
    %c5_757 = arith.constant 5 : index
    %1530 = memref.load %arg6[%c7_756, %c5_757] : memref<8x12xf32, #tpu.memory_space<smem>>
    %1531 = vector.broadcast %1530 : f32 to vector<8x128xf32>
    %1532 = arith.mulf %735, %1531 : vector<8x128xf32>
    %1533 = arith.addf %1529, %1532 : vector<8x128xf32>
    %c7_758 = arith.constant 7 : index
    %c6_759 = arith.constant 6 : index
    %1534 = memref.load %arg6[%c7_758, %c6_759] : memref<8x12xf32, #tpu.memory_space<smem>>
    %1535 = vector.broadcast %1534 : f32 to vector<8x128xf32>
    %1536 = arith.mulf %803, %1535 : vector<8x128xf32>
    %1537 = arith.addf %1533, %1536 : vector<8x128xf32>
    %c7_760 = arith.constant 7 : index
    %c7_761 = arith.constant 7 : index
    %1538 = memref.load %arg6[%c7_760, %c7_761] : memref<8x12xf32, #tpu.memory_space<smem>>
    %1539 = vector.broadcast %1538 : f32 to vector<8x128xf32>
    %1540 = arith.mulf %871, %1539 : vector<8x128xf32>
    %1541 = arith.addf %1537, %1540 : vector<8x128xf32>
    %c7_762 = arith.constant 7 : index
    %c8_763 = arith.constant 8 : index
    %1542 = memref.load %arg6[%c7_762, %c8_763] : memref<8x12xf32, #tpu.memory_space<smem>>
    %1543 = vector.broadcast %1542 : f32 to vector<8x128xf32>
    %1544 = arith.mulf %939, %1543 : vector<8x128xf32>
    %1545 = arith.addf %1541, %1544 : vector<8x128xf32>
    %c7_764 = arith.constant 7 : index
    %c9_765 = arith.constant 9 : index
    %1546 = memref.load %arg6[%c7_764, %c9_765] : memref<8x12xf32, #tpu.memory_space<smem>>
    %1547 = vector.broadcast %1546 : f32 to vector<8x128xf32>
    %1548 = arith.mulf %1007, %1547 : vector<8x128xf32>
    %1549 = arith.addf %1545, %1548 : vector<8x128xf32>
    %c7_766 = arith.constant 7 : index
    %c10_767 = arith.constant 10 : index
    %1550 = memref.load %arg6[%c7_766, %c10_767] : memref<8x12xf32, #tpu.memory_space<smem>>
    %1551 = vector.broadcast %1550 : f32 to vector<8x128xf32>
    %1552 = arith.mulf %1075, %1551 : vector<8x128xf32>
    %1553 = arith.addf %1549, %1552 : vector<8x128xf32>
    %c7_768 = arith.constant 7 : index
    %c11_769 = arith.constant 11 : index
    %1554 = memref.load %arg6[%c7_768, %c11_769] : memref<8x12xf32, #tpu.memory_space<smem>>
    %1555 = vector.broadcast %1554 : f32 to vector<8x128xf32>
    %1556 = arith.mulf %1143, %1555 : vector<8x128xf32>
    %1557 = arith.addf %1553, %1556 : vector<8x128xf32>
    %cst_770 = arith.constant 0.000000e+00 : f32
    %1558 = vector.broadcast %cst_770 : f32 to vector<8x128xf32>
    %1559 = arith.maximumf %1557, %1558 : vector<8x128xf32>
    %c0_771 = arith.constant 0 : index
    %c0_772 = arith.constant 0 : index
    %1560 = memref.load %arg8[%c0_771, %c0_772] : memref<3x8xf32, #tpu.memory_space<smem>>
    %1561 = vector.broadcast %1560 : f32 to vector<8x128xf32>
    %1562 = arith.mulf %1195, %1561 : vector<8x128xf32>
    %c0_773 = arith.constant 0 : index
    %1563 = memref.load %arg9[%c0_773] : memref<3xf32, #tpu.memory_space<smem>>
    %1564 = vector.broadcast %1563 : f32 to vector<8x128xf32>
    %1565 = arith.addf %1562, %1564 : vector<8x128xf32>
    %c0_774 = arith.constant 0 : index
    %c1_775 = arith.constant 1 : index
    %1566 = memref.load %arg8[%c0_774, %c1_775] : memref<3x8xf32, #tpu.memory_space<smem>>
    %1567 = vector.broadcast %1566 : f32 to vector<8x128xf32>
    %1568 = arith.mulf %1247, %1567 : vector<8x128xf32>
    %1569 = arith.addf %1565, %1568 : vector<8x128xf32>
    %c0_776 = arith.constant 0 : index
    %c2_777 = arith.constant 2 : index
    %1570 = memref.load %arg8[%c0_776, %c2_777] : memref<3x8xf32, #tpu.memory_space<smem>>
    %1571 = vector.broadcast %1570 : f32 to vector<8x128xf32>
    %1572 = arith.mulf %1299, %1571 : vector<8x128xf32>
    %1573 = arith.addf %1569, %1572 : vector<8x128xf32>
    %c0_778 = arith.constant 0 : index
    %c3_779 = arith.constant 3 : index
    %1574 = memref.load %arg8[%c0_778, %c3_779] : memref<3x8xf32, #tpu.memory_space<smem>>
    %1575 = vector.broadcast %1574 : f32 to vector<8x128xf32>
    %1576 = arith.mulf %1351, %1575 : vector<8x128xf32>
    %1577 = arith.addf %1573, %1576 : vector<8x128xf32>
    %c0_780 = arith.constant 0 : index
    %c4_781 = arith.constant 4 : index
    %1578 = memref.load %arg8[%c0_780, %c4_781] : memref<3x8xf32, #tpu.memory_space<smem>>
    %1579 = vector.broadcast %1578 : f32 to vector<8x128xf32>
    %1580 = arith.mulf %1403, %1579 : vector<8x128xf32>
    %1581 = arith.addf %1577, %1580 : vector<8x128xf32>
    %c0_782 = arith.constant 0 : index
    %c5_783 = arith.constant 5 : index
    %1582 = memref.load %arg8[%c0_782, %c5_783] : memref<3x8xf32, #tpu.memory_space<smem>>
    %1583 = vector.broadcast %1582 : f32 to vector<8x128xf32>
    %1584 = arith.mulf %1455, %1583 : vector<8x128xf32>
    %1585 = arith.addf %1581, %1584 : vector<8x128xf32>
    %c0_784 = arith.constant 0 : index
    %c6_785 = arith.constant 6 : index
    %1586 = memref.load %arg8[%c0_784, %c6_785] : memref<3x8xf32, #tpu.memory_space<smem>>
    %1587 = vector.broadcast %1586 : f32 to vector<8x128xf32>
    %1588 = arith.mulf %1507, %1587 : vector<8x128xf32>
    %1589 = arith.addf %1585, %1588 : vector<8x128xf32>
    %c0_786 = arith.constant 0 : index
    %c7_787 = arith.constant 7 : index
    %1590 = memref.load %arg8[%c0_786, %c7_787] : memref<3x8xf32, #tpu.memory_space<smem>>
    %1591 = vector.broadcast %1590 : f32 to vector<8x128xf32>
    %1592 = arith.mulf %1559, %1591 : vector<8x128xf32>
    %1593 = arith.addf %1589, %1592 : vector<8x128xf32>
    %c1_788 = arith.constant 1 : index
    %c0_789 = arith.constant 0 : index
    %1594 = memref.load %arg8[%c1_788, %c0_789] : memref<3x8xf32, #tpu.memory_space<smem>>
    %1595 = vector.broadcast %1594 : f32 to vector<8x128xf32>
    %1596 = arith.mulf %1195, %1595 : vector<8x128xf32>
    %c1_790 = arith.constant 1 : index
    %1597 = memref.load %arg9[%c1_790] : memref<3xf32, #tpu.memory_space<smem>>
    %1598 = vector.broadcast %1597 : f32 to vector<8x128xf32>
    %1599 = arith.addf %1596, %1598 : vector<8x128xf32>
    %c1_791 = arith.constant 1 : index
    %c1_792 = arith.constant 1 : index
    %1600 = memref.load %arg8[%c1_791, %c1_792] : memref<3x8xf32, #tpu.memory_space<smem>>
    %1601 = vector.broadcast %1600 : f32 to vector<8x128xf32>
    %1602 = arith.mulf %1247, %1601 : vector<8x128xf32>
    %1603 = arith.addf %1599, %1602 : vector<8x128xf32>
    %c1_793 = arith.constant 1 : index
    %c2_794 = arith.constant 2 : index
    %1604 = memref.load %arg8[%c1_793, %c2_794] : memref<3x8xf32, #tpu.memory_space<smem>>
    %1605 = vector.broadcast %1604 : f32 to vector<8x128xf32>
    %1606 = arith.mulf %1299, %1605 : vector<8x128xf32>
    %1607 = arith.addf %1603, %1606 : vector<8x128xf32>
    %c1_795 = arith.constant 1 : index
    %c3_796 = arith.constant 3 : index
    %1608 = memref.load %arg8[%c1_795, %c3_796] : memref<3x8xf32, #tpu.memory_space<smem>>
    %1609 = vector.broadcast %1608 : f32 to vector<8x128xf32>
    %1610 = arith.mulf %1351, %1609 : vector<8x128xf32>
    %1611 = arith.addf %1607, %1610 : vector<8x128xf32>
    %c1_797 = arith.constant 1 : index
    %c4_798 = arith.constant 4 : index
    %1612 = memref.load %arg8[%c1_797, %c4_798] : memref<3x8xf32, #tpu.memory_space<smem>>
    %1613 = vector.broadcast %1612 : f32 to vector<8x128xf32>
    %1614 = arith.mulf %1403, %1613 : vector<8x128xf32>
    %1615 = arith.addf %1611, %1614 : vector<8x128xf32>
    %c1_799 = arith.constant 1 : index
    %c5_800 = arith.constant 5 : index
    %1616 = memref.load %arg8[%c1_799, %c5_800] : memref<3x8xf32, #tpu.memory_space<smem>>
    %1617 = vector.broadcast %1616 : f32 to vector<8x128xf32>
    %1618 = arith.mulf %1455, %1617 : vector<8x128xf32>
    %1619 = arith.addf %1615, %1618 : vector<8x128xf32>
    %c1_801 = arith.constant 1 : index
    %c6_802 = arith.constant 6 : index
    %1620 = memref.load %arg8[%c1_801, %c6_802] : memref<3x8xf32, #tpu.memory_space<smem>>
    %1621 = vector.broadcast %1620 : f32 to vector<8x128xf32>
    %1622 = arith.mulf %1507, %1621 : vector<8x128xf32>
    %1623 = arith.addf %1619, %1622 : vector<8x128xf32>
    %c1_803 = arith.constant 1 : index
    %c7_804 = arith.constant 7 : index
    %1624 = memref.load %arg8[%c1_803, %c7_804] : memref<3x8xf32, #tpu.memory_space<smem>>
    %1625 = vector.broadcast %1624 : f32 to vector<8x128xf32>
    %1626 = arith.mulf %1559, %1625 : vector<8x128xf32>
    %1627 = arith.addf %1623, %1626 : vector<8x128xf32>
    %c2_805 = arith.constant 2 : index
    %c0_806 = arith.constant 0 : index
    %1628 = memref.load %arg8[%c2_805, %c0_806] : memref<3x8xf32, #tpu.memory_space<smem>>
    %1629 = vector.broadcast %1628 : f32 to vector<8x128xf32>
    %1630 = arith.mulf %1195, %1629 : vector<8x128xf32>
    %c2_807 = arith.constant 2 : index
    %1631 = memref.load %arg9[%c2_807] : memref<3xf32, #tpu.memory_space<smem>>
    %1632 = vector.broadcast %1631 : f32 to vector<8x128xf32>
    %1633 = arith.addf %1630, %1632 : vector<8x128xf32>
    %c2_808 = arith.constant 2 : index
    %c1_809 = arith.constant 1 : index
    %1634 = memref.load %arg8[%c2_808, %c1_809] : memref<3x8xf32, #tpu.memory_space<smem>>
    %1635 = vector.broadcast %1634 : f32 to vector<8x128xf32>
    %1636 = arith.mulf %1247, %1635 : vector<8x128xf32>
    %1637 = arith.addf %1633, %1636 : vector<8x128xf32>
    %c2_810 = arith.constant 2 : index
    %c2_811 = arith.constant 2 : index
    %1638 = memref.load %arg8[%c2_810, %c2_811] : memref<3x8xf32, #tpu.memory_space<smem>>
    %1639 = vector.broadcast %1638 : f32 to vector<8x128xf32>
    %1640 = arith.mulf %1299, %1639 : vector<8x128xf32>
    %1641 = arith.addf %1637, %1640 : vector<8x128xf32>
    %c2_812 = arith.constant 2 : index
    %c3_813 = arith.constant 3 : index
    %1642 = memref.load %arg8[%c2_812, %c3_813] : memref<3x8xf32, #tpu.memory_space<smem>>
    %1643 = vector.broadcast %1642 : f32 to vector<8x128xf32>
    %1644 = arith.mulf %1351, %1643 : vector<8x128xf32>
    %1645 = arith.addf %1641, %1644 : vector<8x128xf32>
    %c2_814 = arith.constant 2 : index
    %c4_815 = arith.constant 4 : index
    %1646 = memref.load %arg8[%c2_814, %c4_815] : memref<3x8xf32, #tpu.memory_space<smem>>
    %1647 = vector.broadcast %1646 : f32 to vector<8x128xf32>
    %1648 = arith.mulf %1403, %1647 : vector<8x128xf32>
    %1649 = arith.addf %1645, %1648 : vector<8x128xf32>
    %c2_816 = arith.constant 2 : index
    %c5_817 = arith.constant 5 : index
    %1650 = memref.load %arg8[%c2_816, %c5_817] : memref<3x8xf32, #tpu.memory_space<smem>>
    %1651 = vector.broadcast %1650 : f32 to vector<8x128xf32>
    %1652 = arith.mulf %1455, %1651 : vector<8x128xf32>
    %1653 = arith.addf %1649, %1652 : vector<8x128xf32>
    %c2_818 = arith.constant 2 : index
    %c6_819 = arith.constant 6 : index
    %1654 = memref.load %arg8[%c2_818, %c6_819] : memref<3x8xf32, #tpu.memory_space<smem>>
    %1655 = vector.broadcast %1654 : f32 to vector<8x128xf32>
    %1656 = arith.mulf %1507, %1655 : vector<8x128xf32>
    %1657 = arith.addf %1653, %1656 : vector<8x128xf32>
    %c2_820 = arith.constant 2 : index
    %c7_821 = arith.constant 7 : index
    %1658 = memref.load %arg8[%c2_820, %c7_821] : memref<3x8xf32, #tpu.memory_space<smem>>
    %1659 = vector.broadcast %1658 : f32 to vector<8x128xf32>
    %1660 = arith.mulf %1559, %1659 : vector<8x128xf32>
    %1661 = arith.addf %1657, %1660 : vector<8x128xf32>
    %c0_822 = arith.constant 0 : index
    %c0_823 = arith.constant 0 : index
    %c0_824 = arith.constant 0 : index
    %1662 = vector.load %arg10[%c0_822, %c0_823, %c0_824] : memref<11x8x128xf32, #tpu.memory_space<vmem>>, vector<1x8x128xf32>
    %1663 = vector.shape_cast %1662 : vector<1x8x128xf32> to vector<8x128xf32>
    %1664 = vector.shape_cast %1195 : vector<8x128xf32> to vector<1x8x128xf32>
    tpu.vector_store %arg10[%c0_822, %c0_823, %c0_824], %1664 {strides = array<i32>} : memref<11x8x128xf32, #tpu.memory_space<vmem>>, vector<1x8x128xf32>,
    %c1_825 = arith.constant 1 : index
    %c0_826 = arith.constant 0 : index
    %c0_827 = arith.constant 0 : index
    %1665 = vector.load %arg10[%c1_825, %c0_826, %c0_827] : memref<11x8x128xf32, #tpu.memory_space<vmem>>, vector<1x8x128xf32>
    %1666 = vector.shape_cast %1665 : vector<1x8x128xf32> to vector<8x128xf32>
    %1667 = vector.shape_cast %1247 : vector<8x128xf32> to vector<1x8x128xf32>
    tpu.vector_store %arg10[%c1_825, %c0_826, %c0_827], %1667 {strides = array<i32>} : memref<11x8x128xf32, #tpu.memory_space<vmem>>, vector<1x8x128xf32>,
    %c2_828 = arith.constant 2 : index
    %c0_829 = arith.constant 0 : index
    %c0_830 = arith.constant 0 : index
    %1668 = vector.load %arg10[%c2_828, %c0_829, %c0_830] : memref<11x8x128xf32, #tpu.memory_space<vmem>>, vector<1x8x128xf32>
    %1669 = vector.shape_cast %1668 : vector<1x8x128xf32> to vector<8x128xf32>
    %1670 = vector.shape_cast %1299 : vector<8x128xf32> to vector<1x8x128xf32>
    tpu.vector_store %arg10[%c2_828, %c0_829, %c0_830], %1670 {strides = array<i32>} : memref<11x8x128xf32, #tpu.memory_space<vmem>>, vector<1x8x128xf32>,
    %c3_831 = arith.constant 3 : index
    %c0_832 = arith.constant 0 : index
    %c0_833 = arith.constant 0 : index
    %1671 = vector.load %arg10[%c3_831, %c0_832, %c0_833] : memref<11x8x128xf32, #tpu.memory_space<vmem>>, vector<1x8x128xf32>
    %1672 = vector.shape_cast %1671 : vector<1x8x128xf32> to vector<8x128xf32>
    %1673 = vector.shape_cast %1351 : vector<8x128xf32> to vector<1x8x128xf32>
    tpu.vector_store %arg10[%c3_831, %c0_832, %c0_833], %1673 {strides = array<i32>} : memref<11x8x128xf32, #tpu.memory_space<vmem>>, vector<1x8x128xf32>,
    %c4_834 = arith.constant 4 : index
    %c0_835 = arith.constant 0 : index
    %c0_836 = arith.constant 0 : index
    %1674 = vector.load %arg10[%c4_834, %c0_835, %c0_836] : memref<11x8x128xf32, #tpu.memory_space<vmem>>, vector<1x8x128xf32>
    %1675 = vector.shape_cast %1674 : vector<1x8x128xf32> to vector<8x128xf32>
    %1676 = vector.shape_cast %1403 : vector<8x128xf32> to vector<1x8x128xf32>
    tpu.vector_store %arg10[%c4_834, %c0_835, %c0_836], %1676 {strides = array<i32>} : memref<11x8x128xf32, #tpu.memory_space<vmem>>, vector<1x8x128xf32>,
    %c5_837 = arith.constant 5 : index
    %c0_838 = arith.constant 0 : index
    %c0_839 = arith.constant 0 : index
    %1677 = vector.load %arg10[%c5_837, %c0_838, %c0_839] : memref<11x8x128xf32, #tpu.memory_space<vmem>>, vector<1x8x128xf32>
    %1678 = vector.shape_cast %1677 : vector<1x8x128xf32> to vector<8x128xf32>
    %1679 = vector.shape_cast %1455 : vector<8x128xf32> to vector<1x8x128xf32>
    tpu.vector_store %arg10[%c5_837, %c0_838, %c0_839], %1679 {strides = array<i32>} : memref<11x8x128xf32, #tpu.memory_space<vmem>>, vector<1x8x128xf32>,
    %c6_840 = arith.constant 6 : index
    %c0_841 = arith.constant 0 : index
    %c0_842 = arith.constant 0 : index
    %1680 = vector.load %arg10[%c6_840, %c0_841, %c0_842] : memref<11x8x128xf32, #tpu.memory_space<vmem>>, vector<1x8x128xf32>
    %1681 = vector.shape_cast %1680 : vector<1x8x128xf32> to vector<8x128xf32>
    %1682 = vector.shape_cast %1507 : vector<8x128xf32> to vector<1x8x128xf32>
    tpu.vector_store %arg10[%c6_840, %c0_841, %c0_842], %1682 {strides = array<i32>} : memref<11x8x128xf32, #tpu.memory_space<vmem>>, vector<1x8x128xf32>,
    %c7_843 = arith.constant 7 : index
    %c0_844 = arith.constant 0 : index
    %c0_845 = arith.constant 0 : index
    %1683 = vector.load %arg10[%c7_843, %c0_844, %c0_845] : memref<11x8x128xf32, #tpu.memory_space<vmem>>, vector<1x8x128xf32>
    %1684 = vector.shape_cast %1683 : vector<1x8x128xf32> to vector<8x128xf32>
    %1685 = vector.shape_cast %1559 : vector<8x128xf32> to vector<1x8x128xf32>
    tpu.vector_store %arg10[%c7_843, %c0_844, %c0_845], %1685 {strides = array<i32>} : memref<11x8x128xf32, #tpu.memory_space<vmem>>, vector<1x8x128xf32>,
    %c8_846 = arith.constant 8 : index
    %c0_847 = arith.constant 0 : index
    %c0_848 = arith.constant 0 : index
    %1686 = vector.load %arg10[%c8_846, %c0_847, %c0_848] : memref<11x8x128xf32, #tpu.memory_space<vmem>>, vector<1x8x128xf32>
    %1687 = vector.shape_cast %1686 : vector<1x8x128xf32> to vector<8x128xf32>
    %1688 = vector.shape_cast %1593 : vector<8x128xf32> to vector<1x8x128xf32>
    tpu.vector_store %arg10[%c8_846, %c0_847, %c0_848], %1688 {strides = array<i32>} : memref<11x8x128xf32, #tpu.memory_space<vmem>>, vector<1x8x128xf32>,
    %c9_849 = arith.constant 9 : index
    %c0_850 = arith.constant 0 : index
    %c0_851 = arith.constant 0 : index
    %1689 = vector.load %arg10[%c9_849, %c0_850, %c0_851] : memref<11x8x128xf32, #tpu.memory_space<vmem>>, vector<1x8x128xf32>
    %1690 = vector.shape_cast %1689 : vector<1x8x128xf32> to vector<8x128xf32>
    %1691 = vector.shape_cast %1627 : vector<8x128xf32> to vector<1x8x128xf32>
    tpu.vector_store %arg10[%c9_849, %c0_850, %c0_851], %1691 {strides = array<i32>} : memref<11x8x128xf32, #tpu.memory_space<vmem>>, vector<1x8x128xf32>,
    %c10_852 = arith.constant 10 : index
    %c0_853 = arith.constant 0 : index
    %c0_854 = arith.constant 0 : index
    %1692 = vector.load %arg10[%c10_852, %c0_853, %c0_854] : memref<11x8x128xf32, #tpu.memory_space<vmem>>, vector<1x8x128xf32>
    %1693 = vector.shape_cast %1692 : vector<1x8x128xf32> to vector<8x128xf32>
    %1694 = vector.shape_cast %1661 : vector<8x128xf32> to vector<1x8x128xf32>
    tpu.vector_store %arg10[%c10_852, %c0_853, %c0_854], %1694 {strides = array<i32>} : memref<11x8x128xf32, #tpu.memory_space<vmem>>, vector<1x8x128xf32>,
    return
  }
  func.func @transform_0(%arg0: i32) -> (i32, i32, i32) {
    %c0_i32 = arith.constant 0 : i32
    %c0_i32_0 = arith.constant 0 : i32
    %c0_i32_1 = arith.constant 0 : i32
    return %c0_i32, %arg0, %c0_i32_0 : i32, i32, i32
  }
  func.func @transform_1(%arg0: i32) -> (i32, i32) {
    %c0_i32 = arith.constant 0 : i32
    %c0_i32_0 = arith.constant 0 : i32
    %c0_i32_1 = arith.constant 0 : i32
    return %c0_i32, %c0_i32_0 : i32, i32
  }
  func.func @transform_2(%arg0: i32) -> i32 {
    %c0_i32 = arith.constant 0 : i32
    %c0_i32_0 = arith.constant 0 : i32
    return %c0_i32 : i32
  }
  func.func @transform_3(%arg0: i32) -> (i32, i32) {
    %c0_i32 = arith.constant 0 : i32
    %c0_i32_0 = arith.constant 0 : i32
    %c0_i32_1 = arith.constant 0 : i32
    return %c0_i32, %c0_i32_0 : i32, i32
  }
  func.func @transform_4(%arg0: i32) -> i32 {
    %c0_i32 = arith.constant 0 : i32
    %c0_i32_0 = arith.constant 0 : i32
    return %c0_i32 : i32
  }
  func.func @transform_5(%arg0: i32) -> (i32, i32) {
    %c0_i32 = arith.constant 0 : i32
    %c0_i32_0 = arith.constant 0 : i32
    %c0_i32_1 = arith.constant 0 : i32
    return %c0_i32, %c0_i32_0 : i32, i32
  }
  func.func @transform_6(%arg0: i32) -> i32 {
    %c0_i32 = arith.constant 0 : i32
    %c0_i32_0 = arith.constant 0 : i32
    return %c0_i32 : i32
  }
  func.func @transform_7(%arg0: i32) -> (i32, i32) {
    %c0_i32 = arith.constant 0 : i32
    %c0_i32_0 = arith.constant 0 : i32
    %c0_i32_1 = arith.constant 0 : i32
    return %c0_i32, %c0_i32_0 : i32, i32
  }
  func.func @transform_8(%arg0: i32) -> i32 {
    %c0_i32 = arith.constant 0 : i32
    %c0_i32_0 = arith.constant 0 : i32
    return %c0_i32 : i32
  }
  func.func @transform_9(%arg0: i32) -> (i32, i32, i32) {
    %c0_i32 = arith.constant 0 : i32
    %c0_i32_0 = arith.constant 0 : i32
    %c0_i32_1 = arith.constant 0 : i32
    return %c0_i32, %arg0, %c0_i32_0 : i32, i32, i32
  }
}

</mosaic_0001>

<llo_original>
// kernel: tpu_custom_call.1
$region0: #{tpu_custom_call.1}
  #allocation0 [shape = 'u32[]', space=smem, size = 0x4, offset = 0x4, fixed_abs, tag = 'smem constant byte address 0x4 - core index']
  #allocation1 [shape = 'u32[144,128]{1,0:T(1,128)}', space=vmem, size = 0x12000, scoped, tag = 'internal scratch']
  %s0 = inlined_call_operand.hbm [shape: f32[4,8,128], index: 0, kind: input, shape index: {}]
  %s1 = inlined_call_operand.vmem [shape: f32[16,4], index: 1, kind: input, shape index: {}]
  %s2 = inlined_call_operand.vmem [shape: f32[16], index: 2, kind: input, shape index: {}]
  %s3 = inlined_call_operand.vmem [shape: f32[12,16], index: 3, kind: input, shape index: {}]
  %s4 = inlined_call_operand.hbm [shape: f32[12], index: 4, kind: input, shape index: {}]
  %s5 = inlined_call_operand.vmem [shape: f32[8,12], index: 5, kind: input, shape index: {}]
  %s6 = inlined_call_operand.vmem [shape: f32[8], index: 6, kind: input, shape index: {}]
  %s7 = inlined_call_operand.vmem [shape: f32[3,8], index: 7, kind: input, shape index: {}]
  %s8 = inlined_call_operand.vmem [shape: f32[3], index: 8, kind: input, shape index: {}]
  %s9 = inlined_call_operand.hbm [shape: f32[11,8,128], index: 9, kind: output, shape index: {}]
  %s10 = sld [smem:[#allocation0]]
  $region82: #{tpu_custom_call.1} parent=0
    _
  %s12 = ssub.s32 1, %s10
  %s13 = scalar_select 0, %s12, %s10
  $region1: #{tpu_custom_call.1} parent=0
    #allocation2 [shape = 'u8[16384]{0}', space=vmem, size = 0x4000, scoped, tag = 'input window, operand 0, single buffered']
    #allocation3 [shape = 's32[1]{0}', space=sflag, size = 0x4, scoped, tag = 'scoped memory for tpu_custom_call.1']
    #allocation4 [shape = 's32[1]{0}', space=sflag, size = 0x4, scoped, tag = 'scoped memory for tpu_custom_call.1']
    #allocation5 [shape = 's32[1]{0}', space=sflag, size = 0x4, scoped, tag = 'scoped memory for tpu_custom_call.1']
    #allocation6 [shape = 's32[1]{0}', space=sflag, size = 0x4, scoped, tag = 'scoped memory for tpu_custom_call.1']
    #allocation7 [shape = 'u8[8192]{0}', space=smem, size = 0x2000, scoped, tag = 'input window, operand 1, single buffered']
    #allocation8 [shape = 'u8[512]{0}', space=smem, size = 0x200, scoped, tag = 'input window, operand 2, single buffered']
    #allocation9 [shape = 's32[1]{0}', space=sflag, size = 0x4, scoped, tag = 'scoped memory for tpu_custom_call.1']
    #allocation10 [shape = 'u8[8192]{0}', space=smem, size = 0x2000, scoped, tag = 'input window, operand 3, single buffered']
    #allocation11 [shape = 'u8[512]{0}', space=smem, size = 0x200, scoped, tag = 'input window, operand 4, single buffered']
    #allocation12 [shape = 'u8[4096]{0}', space=smem, size = 0x1000, scoped, tag = 'input window, operand 5, single buffered']
    #allocation13 [shape = 's32[1]{0}', space=sflag, size = 0x4, scoped, tag = 'scoped memory for tpu_custom_call.1']
    #allocation14 [shape = 'u8[512]{0}', space=smem, size = 0x200, scoped, tag = 'input window, operand 6, single buffered']
    #allocation15 [shape = 'u8[2048]{0}', space=smem, size = 0x800, scoped, tag = 'input window, operand 7, single buffered']
    #allocation16 [shape = 's32[1]{0}', space=sflag, size = 0x4, scoped, tag = 'scoped memory for tpu_custom_call.1']
    #allocation17 [shape = 'u8[512]{0}', space=smem, size = 0x200, scoped, tag = 'input window, operand 8, single buffered']
    #allocation18 [shape = 'u8[45056]{0}', space=vmem, size = 0xb000, scoped, tag = 'output window, operand 0, single buffered']
    %14 = vsyncpa [#allocation3], 0
    %15 = vsyncpa [#allocation6], 0
    %16 = vsyncpa [#allocation9], 0
    %17 = vsyncpa [#allocation5], 0
    %18 = vsyncpa [#allocation13], 0
    %19 = vsyncpa [#allocation16], 0
    %20 = vsyncpa [#allocation4], 0
    // Predicated region
    $region2: #{tpu_custom_call.1} parent=1 // pred_check
      _
    $region3: #{tpu_custom_call.1} parent=1 // pred_check_branch
      %22 = sbr.rel (0) target = $region5
    $region4: #{tpu_custom_call.1} parent=1 // pred_region
      %s24 = ssub.s32 512, 512
      %25 = vsyncadd [#allocation3], %s24
      %s26 = sshll.u32 [#allocation2], 4
      %s27 = int_to_ptr.vmem [resolvable:$true] %s26
      %32 = dma.hbm_to_vmem [thread:$0]  %s0, 512, %s27, [#allocation3], 128, 128, 8
    $region5: #{tpu_custom_call.1} parent=1 // pred_fallthru
      _
    // Predicated region
    $region6: #{tpu_custom_call.1} parent=1 // pred_check
      _
    $region7: #{tpu_custom_call.1} parent=1 // pred_check_branch
      %34 = sbr.rel (0) target = $region9
    $region8: #{tpu_custom_call.1} parent=1 // pred_region
      %s36 = ssub.s32 256, 256
      %37 = vsyncadd [#allocation6], %s36
      %s38 = sshll.u32 %s1, 4
      %s39 = int_to_ptr.vmem [resolvable:$true] %s38
      %44 = dma.vmem_to_smem %s39, 256, [#allocation7], [#allocation6], 128, 128, 8
    $region9: #{tpu_custom_call.1} parent=1 // pred_fallthru
      _
    // Predicated region
    $region10: #{tpu_custom_call.1} parent=1 // pred_check
      _
    $region11: #{tpu_custom_call.1} parent=1 // pred_check_branch
      %46 = sbr.rel (0) target = $region13
    $region12: #{tpu_custom_call.1} parent=1 // pred_region
      %s48 = ssub.s32 16, 16
      %49 = vsyncadd [#allocation9], %s48
      %s51 = sshll.u32 %s2, 4
      %s52 = int_to_ptr.vmem [resolvable:$true] %s51
      %54 = dma.vmem_to_smem %s52, 16, [#allocation8], [#allocation9]
    $region13: #{tpu_custom_call.1} parent=1 // pred_fallthru
      _
    // Predicated region
    $region14: #{tpu_custom_call.1} parent=1 // pred_check
      _
    $region15: #{tpu_custom_call.1} parent=1 // pred_check_branch
      %56 = sbr.rel (0) target = $region17
    $region16: #{tpu_custom_call.1} parent=1 // pred_region
      %s58 = ssub.s32 256, 256
      %59 = vsyncadd [#allocation9], %s58
      %s60 = sshll.u32 %s3, 4
      %s61 = int_to_ptr.vmem [resolvable:$true] %s60
      %66 = dma.vmem_to_smem %s61, 256, [#allocation10], [#allocation9], 128, 128, 8
    $region17: #{tpu_custom_call.1} parent=1 // pred_fallthru
      _
    // Predicated region
    $region18: #{tpu_custom_call.1} parent=1 // pred_check
      _
    $region19: #{tpu_custom_call.1} parent=1 // pred_check_branch
      %68 = sbr.rel (0) target = $region21
    $region20: #{tpu_custom_call.1} parent=1 // pred_region
      %s70 = ssub.s32 16, 16
      %71 = vsyncadd [#allocation5], %s70
      %74 = dma.hbm_to_smem %s4, 16, [#allocation11], [#allocation5]
    $region21: #{tpu_custom_call.1} parent=1 // pred_fallthru
      _
    // Predicated region
    $region22: #{tpu_custom_call.1} parent=1 // pred_check
      _
    $region23: #{tpu_custom_call.1} parent=1 // pred_check_branch
      %76 = sbr.rel (0) target = $region25
    $region24: #{tpu_custom_call.1} parent=1 // pred_region
      %s78 = ssub.s32 128, 128
      %79 = vsyncadd [#allocation13], %s78
      %s81 = sshll.u32 %s5, 4
      %s82 = int_to_ptr.vmem [resolvable:$true] %s81
      %84 = dma.vmem_to_smem %s82, 128, [#allocation12], [#allocation13]
    $region25: #{tpu_custom_call.1} parent=1 // pred_fallthru
      _
    // Predicated region
    $region26: #{tpu_custom_call.1} parent=1 // pred_check
      _
    $region27: #{tpu_custom_call.1} parent=1 // pred_check_branch
      %86 = sbr.rel (0) target = $region29
    $region28: #{tpu_custom_call.1} parent=1 // pred_region
      %s88 = ssub.s32 16, 16
      %89 = vsyncadd [#allocation13], %s88
      %s91 = sshll.u32 %s6, 4
      %s92 = int_to_ptr.vmem [resolvable:$true] %s91
      %94 = dma.vmem_to_smem %s92, 16, [#allocation14], [#allocation13]
    $region29: #{tpu_custom_call.1} parent=1 // pred_fallthru
      _
    // Predicated region
    $region30: #{tpu_custom_call.1} parent=1 // pred_check
      _
    $region31: #{tpu_custom_call.1} parent=1 // pred_check_branch
      %96 = sbr.rel (0) target = $region33
    $region32: #{tpu_custom_call.1} parent=1 // pred_region
      %s98 = ssub.s32 64, 64
      %99 = vsyncadd [#allocation16], %s98
      %s101 = sshll.u32 %s7, 4
      %s102 = int_to_ptr.vmem [resolvable:$true] %s101
      %104 = dma.vmem_to_smem %s102, 64, [#allocation15], [#allocation16]
    $region33: #{tpu_custom_call.1} parent=1 // pred_fallthru
      _
    // Predicated region
    $region34: #{tpu_custom_call.1} parent=1 // pred_check
      _
    $region35: #{tpu_custom_call.1} parent=1 // pred_check_branch
      %106 = sbr.rel (0) target = $region37
    $region36: #{tpu_custom_call.1} parent=1 // pred_region
      %s108 = ssub.s32 16, 16
      %109 = vsyncadd [#allocation16], %s108
      %s111 = sshll.u32 %s8, 4
      %s112 = int_to_ptr.vmem [resolvable:$true] %s111
      %114 = dma.vmem_to_smem %s112, 16, [#allocation17], [#allocation16]
    $region37: #{tpu_custom_call.1} parent=1 // pred_fallthru
      _
    // Predicated region
    $region38: #{tpu_custom_call.1} parent=1 // pred_check
      _
    $region39: #{tpu_custom_call.1} parent=1 // pred_check_branch
      %116 = sbr.rel (0) target = $region41
    $region40: #{tpu_custom_call.1} parent=1 // pred_region
      %117 = dma.done [#allocation3], 512
    $region41: #{tpu_custom_call.1} parent=1 // pred_fallthru
      _
    // Predicated region
    $region42: #{tpu_custom_call.1} parent=1 // pred_check
      _
    $region43: #{tpu_custom_call.1} parent=1 // pred_check_branch
      %119 = sbr.rel (0) target = $region45
    $region44: #{tpu_custom_call.1} parent=1 // pred_region
      %120 = dma.done [#allocation6], 256
    $region45: #{tpu_custom_call.1} parent=1 // pred_fallthru
      _
    // Predicated region
    $region46: #{tpu_custom_call.1} parent=1 // pred_check
      _
    $region47: #{tpu_custom_call.1} parent=1 // pred_check_branch
      %122 = sbr.rel (0) target = $region49
    $region48: #{tpu_custom_call.1} parent=1 // pred_region
      %123 = dma.done [#allocation9], 16
    $region49: #{tpu_custom_call.1} parent=1 // pred_fallthru
      _
    // Predicated region
    $region50: #{tpu_custom_call.1} parent=1 // pred_check
      _
    $region51: #{tpu_custom_call.1} parent=1 // pred_check_branch
      %125 = sbr.rel (0) target = $region53
    $region52: #{tpu_custom_call.1} parent=1 // pred_region
      %126 = dma.done [#allocation9], 256
    $region53: #{tpu_custom_call.1} parent=1 // pred_fallthru
      _
    // Predicated region
    $region54: #{tpu_custom_call.1} parent=1 // pred_check
      _
    $region55: #{tpu_custom_call.1} parent=1 // pred_check_branch
      %128 = sbr.rel (0) target = $region57
    $region56: #{tpu_custom_call.1} parent=1 // pred_region
      %129 = dma.done [#allocation5], 16
    $region57: #{tpu_custom_call.1} parent=1 // pred_fallthru
      _
    // Predicated region
    $region58: #{tpu_custom_call.1} parent=1 // pred_check
      _
    $region59: #{tpu_custom_call.1} parent=1 // pred_check_branch
      %131 = sbr.rel (0) target = $region61
    $region60: #{tpu_custom_call.1} parent=1 // pred_region
      %132 = dma.done [#allocation13], 128
    $region61: #{tpu_custom_call.1} parent=1 // pred_fallthru
      _
    // Predicated region
    $region62: #{tpu_custom_call.1} parent=1 // pred_check
      _
    $region63: #{tpu_custom_call.1} parent=1 // pred_check_branch
      %134 = sbr.rel (0) target = $region65
    $region64: #{tpu_custom_call.1} parent=1 // pred_region
      %135 = dma.done [#allocation13], 16
    $region65: #{tpu_custom_call.1} parent=1 // pred_fallthru
      _
    // Predicated region
    $region66: #{tpu_custom_call.1} parent=1 // pred_check
      _
    $region67: #{tpu_custom_call.1} parent=1 // pred_check_branch
      %137 = sbr.rel (0) target = $region69
    $region68: #{tpu_custom_call.1} parent=1 // pred_region
      %138 = dma.done [#allocation16], 64
    $region69: #{tpu_custom_call.1} parent=1 // pred_fallthru
      _
    // Predicated region
    $region70: #{tpu_custom_call.1} parent=1 // pred_check
      _
    $region71: #{tpu_custom_call.1} parent=1 // pred_check_branch
      %140 = sbr.rel (0) target = $region73
    $region72: #{tpu_custom_call.1} parent=1 // pred_region
      %141 = dma.done [#allocation16], 16
    $region73: #{tpu_custom_call.1} parent=1 // pred_fallthru
      _
    %142 = sfence
    %v143 = vld [vmem:[#allocation2] sm:$0xff]
    %s144 = scalar_lea.vmem [#allocation2], 8
    %v145 = vld [vmem:[%s144] sm:$0xff]
    %s146 = scalar_lea.vmem [#allocation2], 16
    %v147 = vld [vmem:[%s146] sm:$0xff]
    %s148 = scalar_lea.vmem [#allocation2], 24
    %v149 = vld [vmem:[%s148] sm:$0xff]
    %s150 = sld [smem:[#allocation7]]
    %v151 = vstv %s150
    %v152 = vmul.f32 %v143, %v151
    %s153 = sld [smem:[#allocation8]]
    %v154 = vstv %s153
    %v155 = vadd.f32 %v152, %v154
    %s156 = sld [smem:[#allocation7 + $0x1]]
    %v157 = vstv %s156
    %v158 = vmul.f32 %v145, %v157
    %v159 = vadd.f32 %v155, %v158
    %s160 = sld [smem:[#allocation7 + $0x2]]
    %v161 = vstv %s160
    %v162 = vmul.f32 %v147, %v161
    %v163 = vadd.f32 %v159, %v162
    %s164 = sld [smem:[#allocation7 + $0x3]]
    %v165 = vstv %s164
    %v166 = vmul.f32 %v149, %v165
    %v167 = vadd.f32 %v163, %v166
    %v168 = vmax.f32 %v167, 0.0
    %s169 = sld [smem:[#allocation7 + $0x80]]
    %v170 = vstv %s169
    %v171 = vmul.f32 %v143, %v170
    %s172 = sld [smem:[#allocation8 + $0x1]]
    %v173 = vstv %s172
    %v174 = vadd.f32 %v171, %v173
    %s175 = sld [smem:[#allocation7 + $0x81]]
    %v176 = vstv %s175
    %v177 = vmul.f32 %v145, %v176
    %v178 = vadd.f32 %v174, %v177
    %s179 = sld [smem:[#allocation7 + $0x82]]
    %v180 = vstv %s179
    %v181 = vmul.f32 %v147, %v180
    %v182 = vadd.f32 %v178, %v181
    %s183 = sld [smem:[#allocation7 + $0x83]]
    %v184 = vstv %s183
    %v185 = vmul.f32 %v149, %v184
    %v186 = vadd.f32 %v182, %v185
    %v187 = vmax.f32 %v186, 0.0
    %s188 = sld [smem:[#allocation7 + $0x100]]
    %v189 = vstv %s188
    %v190 = vmul.f32 %v143, %v189
    %s191 = sld [smem:[#allocation8 + $0x2]]
    %v192 = vstv %s191
    %v193 = vadd.f32 %v190, %v192
    %s194 = sld [smem:[#allocation7 + $0x101]]
    %v195 = vstv %s194
    %v196 = vmul.f32 %v145, %v195
    %v197 = vadd.f32 %v193, %v196
    %s198 = sld [smem:[#allocation7 + $0x102]]
    %v199 = vstv %s198
    %v200 = vmul.f32 %v147, %v199
    %v201 = vadd.f32 %v197, %v200
    %s202 = sld [smem:[#allocation7 + $0x103]]
    %v203 = vstv %s202
    %v204 = vmul.f32 %v149, %v203
    %v205 = vadd.f32 %v201, %v204
    %v206 = vmax.f32 %v205, 0.0
    %s207 = sld [smem:[#allocation7 + $0x180]]
    %v208 = vstv %s207
    %v209 = vmul.f32 %v143, %v208
    %s210 = sld [smem:[#allocation8 + $0x3]]
    %v211 = vstv %s210
    %v212 = vadd.f32 %v209, %v211
    %s213 = sld [smem:[#allocation7 + $0x181]]
    %v214 = vstv %s213
    %v215 = vmul.f32 %v145, %v214
    %v216 = vadd.f32 %v212, %v215
    %s217 = sld [smem:[#allocation7 + $0x182]]
    %v218 = vstv %s217
    %v219 = vmul.f32 %v147, %v218
    %v220 = vadd.f32 %v216, %v219
    %s221 = sld [smem:[#allocation7 + $0x183]]
    %v222 = vstv %s221
    %v223 = vmul.f32 %v149, %v222
    %v224 = vadd.f32 %v220, %v223
    %v225 = vmax.f32 %v224, 0.0
    %s226 = sld [smem:[#allocation7 + $0x200]]
    %v227 = vstv %s226
    %v228 = vmul.f32 %v143, %v227
    %s229 = sld [smem:[#allocation8 + $0x4]]
    %v230 = vstv %s229
    %v231 = vadd.f32 %v228, %v230
    %s232 = sld [smem:[#allocation7 + $0x201]]
    %v233 = vstv %s232
    %v234 = vmul.f32 %v145, %v233
    %v235 = vadd.f32 %v231, %v234
    %s236 = sld [smem:[#allocation7 + $0x202]]
    %v237 = vstv %s236
    %v238 = vmul.f32 %v147, %v237
    %v239 = vadd.f32 %v235, %v238
    %s240 = sld [smem:[#allocation7 + $0x203]]
    %v241 = vstv %s240
    %v242 = vmul.f32 %v149, %v241
    %v243 = vadd.f32 %v239, %v242
    %v244 = vmax.f32 %v243, 0.0
    %s245 = sld [smem:[#allocation7 + $0x280]]
    %v246 = vstv %s245
    %v247 = vmul.f32 %v143, %v246
    %s248 = sld [smem:[#allocation8 + $0x5]]
    %v249 = vstv %s248
    %v250 = vadd.f32 %v247, %v249
    %s251 = sld [smem:[#allocation7 + $0x281]]
    %v252 = vstv %s251
    %v253 = vmul.f32 %v145, %v252
    %v254 = vadd.f32 %v250, %v253
    %s255 = sld [smem:[#allocation7 + $0x282]]
    %v256 = vstv %s255
    %v257 = vmul.f32 %v147, %v256
    %v258 = vadd.f32 %v254, %v257
    %s259 = sld [smem:[#allocation7 + $0x283]]
    %v260 = vstv %s259
    %v261 = vmul.f32 %v149, %v260
    %v262 = vadd.f32 %v258, %v261
    %v263 = vmax.f32 %v262, 0.0
    %s264 = sld [smem:[#allocation7 + $0x300]]
    %v265 = vstv %s264
    %v266 = vmul.f32 %v143, %v265
    %s267 = sld [smem:[#allocation8 + $0x6]]
    %v268 = vstv %s267
    %v269 = vadd.f32 %v266, %v268
    %s270 = sld [smem:[#allocation7 + $0x301]]
    %v271 = vstv %s270
    %v272 = vmul.f32 %v145, %v271
    %v273 = vadd.f32 %v269, %v272
    %s274 = sld [smem:[#allocation7 + $0x302]]
    %v275 = vstv %s274
    %v276 = vmul.f32 %v147, %v275
    %v277 = vadd.f32 %v273, %v276
    %s278 = sld [smem:[#allocation7 + $0x303]]
    %v279 = vstv %s278
    %v280 = vmul.f32 %v149, %v279
    %v281 = vadd.f32 %v277, %v280
    %v282 = vmax.f32 %v281, 0.0
    %s283 = sld [smem:[#allocation7 + $0x380]]
    %v284 = vstv %s283
    %v285 = vmul.f32 %v143, %v284
    %s286 = sld [smem:[#allocation8 + $0x7]]
    %v287 = vstv %s286
    %v288 = vadd.f32 %v285, %v287
    %s289 = sld [smem:[#allocation7 + $0x381]]
    %v290 = vstv %s289
    %v291 = vmul.f32 %v145, %v290
    %v292 = vadd.f32 %v288, %v291
    %s293 = sld [smem:[#allocation7 + $0x382]]
    %v294 = vstv %s293
    %v295 = vmul.f32 %v147, %v294
    %v296 = vadd.f32 %v292, %v295
    %s297 = sld [smem:[#allocation7 + $0x383]]
    %v298 = vstv %s297
    %v299 = vmul.f32 %v149, %v298
    %v300 = vadd.f32 %v296, %v299
    %v301 = vmax.f32 %v300, 0.0
    %s302 = sld [smem:[#allocation7 + $0x400]]
    %v303 = vstv %s302
    %v304 = vmul.f32 %v143, %v303
    %s305 = sld [smem:[#allocation8 + $0x8]]
    %v306 = vstv %s305
    %v307 = vadd.f32 %v304, %v306
    %s308 = sld [smem:[#allocation7 + $0x401]]
    %v309 = vstv %s308
    %v310 = vmul.f32 %v145, %v309
    %v311 = vadd.f32 %v307, %v310
    %s312 = sld [smem:[#allocation7 + $0x402]]
    %v313 = vstv %s312
    %v314 = vmul.f32 %v147, %v313
    %v315 = vadd.f32 %v311, %v314
    %s316 = sld [smem:[#allocation7 + $0x403]]
    %v317 = vstv %s316
    %v318 = vmul.f32 %v149, %v317
    %v319 = vadd.f32 %v315, %v318
    %v320 = vmax.f32 %v319, 0.0
    %s321 = sld [smem:[#allocation7 + $0x480]]
    %v322 = vstv %s321
    %v323 = vmul.f32 %v143, %v322
    %s324 = sld [smem:[#allocation8 + $0x9]]
    %v325 = vstv %s324
    %v326 = vadd.f32 %v323, %v325
    %s327 = sld [smem:[#allocation7 + $0x481]]
    %v328 = vstv %s327
    %v329 = vmul.f32 %v145, %v328
    %v330 = vadd.f32 %v326, %v329
    %s331 = sld [smem:[#allocation7 + $0x482]]
    %v332 = vstv %s331
    %v333 = vmul.f32 %v147, %v332
    %v334 = vadd.f32 %v330, %v333
    %s335 = sld [smem:[#allocation7 + $0x483]]
    %v336 = vstv %s335
    %v337 = vmul.f32 %v149, %v336
    %v338 = vadd.f32 %v334, %v337
    %v339 = vmax.f32 %v338, 0.0
    %s340 = sld [smem:[#allocation7 + $0x500]]
    %v341 = vstv %s340
    %v342 = vmul.f32 %v143, %v341
    %s343 = sld [smem:[#allocation8 + $0xa]]
    %v344 = vstv %s343
    %v345 = vadd.f32 %v342, %v344
    %s346 = sld [smem:[#allocation7 + $0x501]]
    %v347 = vstv %s346
    %v348 = vmul.f32 %v145, %v347
    %v349 = vadd.f32 %v345, %v348
    %s350 = sld [smem:[#allocation7 + $0x502]]
    %v351 = vstv %s350
    %v352 = vmul.f32 %v147, %v351
    %v353 = vadd.f32 %v349, %v352
    %s354 = sld [smem:[#allocation7 + $0x503]]
    %v355 = vstv %s354
    %v356 = vmul.f32 %v149, %v355
    %v357 = vadd.f32 %v353, %v356
    %v358 = vmax.f32 %v357, 0.0
    %s359 = sld [smem:[#allocation7 + $0x580]]
    %v360 = vstv %s359
    %v361 = vmul.f32 %v143, %v360
    %s362 = sld [smem:[#allocation8 + $0xb]]
    %v363 = vstv %s362
    %v364 = vadd.f32 %v361, %v363
    %s365 = sld [smem:[#allocation7 + $0x581]]
    %v366 = vstv %s365
    %v367 = vmul.f32 %v145, %v366
    %v368 = vadd.f32 %v364, %v367
    %s369 = sld [smem:[#allocation7 + $0x582]]
    %v370 = vstv %s369
    %v371 = vmul.f32 %v147, %v370
    %v372 = vadd.f32 %v368, %v371
    %s373 = sld [smem:[#allocation7 + $0x583]]
    %v374 = vstv %s373
    %v375 = vmul.f32 %v149, %v374
    %v376 = vadd.f32 %v372, %v375
    %v377 = vmax.f32 %v376, 0.0
    %s378 = sld [smem:[#allocation7 + $0x600]]
    %v379 = vstv %s378
    %v380 = vmul.f32 %v143, %v379
    %s381 = sld [smem:[#allocation8 + $0xc]]
    %v382 = vstv %s381
    %v383 = vadd.f32 %v380, %v382
    %s384 = sld [smem:[#allocation7 + $0x601]]
    %v385 = vstv %s384
    %v386 = vmul.f32 %v145, %v385
    %v387 = vadd.f32 %v383, %v386
    %s388 = sld [smem:[#allocation7 + $0x602]]
    %v389 = vstv %s388
    %v390 = vmul.f32 %v147, %v389
    %v391 = vadd.f32 %v387, %v390
    %s392 = sld [smem:[#allocation7 + $0x603]]
    %v393 = vstv %s392
    %v394 = vmul.f32 %v149, %v393
    %v395 = vadd.f32 %v391, %v394
    %v396 = vmax.f32 %v395, 0.0
    %s397 = sld [smem:[#allocation7 + $0x680]]
    %v398 = vstv %s397
    %v399 = vmul.f32 %v143, %v398
    %s400 = sld [smem:[#allocation8 + $0xd]]
    %v401 = vstv %s400
    %v402 = vadd.f32 %v399, %v401
    %s403 = sld [smem:[#allocation7 + $0x681]]
    %v404 = vstv %s403
    %v405 = vmul.f32 %v145, %v404
    %v406 = vadd.f32 %v402, %v405
    %s407 = sld [smem:[#allocation7 + $0x682]]
    %v408 = vstv %s407
    %v409 = vmul.f32 %v147, %v408
    %v410 = vadd.f32 %v406, %v409
    %s411 = sld [smem:[#allocation7 + $0x683]]
    %v412 = vstv %s411
    %v413 = vmul.f32 %v149, %v412
    %v414 = vadd.f32 %v410, %v413
    %v415 = vmax.f32 %v414, 0.0
    %s416 = sld [smem:[#allocation7 + $0x700]]
    %v417 = vstv %s416
    %v418 = vmul.f32 %v143, %v417
    %s419 = sld [smem:[#allocation8 + $0xe]]
    %v420 = vstv %s419
    %v421 = vadd.f32 %v418, %v420
    %s422 = sld [smem:[#allocation7 + $0x701]]
    %v423 = vstv %s422
    %v424 = vmul.f32 %v145, %v423
    %v425 = vadd.f32 %v421, %v424
    %s426 = sld [smem:[#allocation7 + $0x702]]
    %v427 = vstv %s426
    %v428 = vmul.f32 %v147, %v427
    %v429 = vadd.f32 %v425, %v428
    %s430 = sld [smem:[#allocation7 + $0x703]]
    %v431 = vstv %s430
    %v432 = vmul.f32 %v149, %v431
    %v433 = vadd.f32 %v429, %v432
    %v434 = vmax.f32 %v433, 0.0
    %s435 = sld [smem:[#allocation7 + $0x780]]
    %v436 = vstv %s435
    %v437 = vmul.f32 %v143, %v436
    %s438 = sld [smem:[#allocation8 + $0xf]]
    %v439 = vstv %s438
    %v440 = vadd.f32 %v437, %v439
    %s441 = sld [smem:[#allocation7 + $0x781]]
    %v442 = vstv %s441
    %v443 = vmul.f32 %v145, %v442
    %v444 = vadd.f32 %v440, %v443
    %s445 = sld [smem:[#allocation7 + $0x782]]
    %v446 = vstv %s445
    %v447 = vmul.f32 %v147, %v446
    %v448 = vadd.f32 %v444, %v447
    %s449 = sld [smem:[#allocation7 + $0x783]]
    %v450 = vstv %s449
    %v451 = vmul.f32 %v149, %v450
    %v452 = vadd.f32 %v448, %v451
    %v453 = vmax.f32 %v452, 0.0
    %s454 = sld [smem:[#allocation10]]
    %v455 = vstv %s454
    %v456 = vmul.f32 %v168, %v455
    %s457 = sld [smem:[#allocation11]]
    %v458 = vstv %s457
    %v459 = vadd.f32 %v456, %v458
    %s460 = sld [smem:[#allocation10 + $0x1]]
    %v461 = vstv %s460
    %v462 = vmul.f32 %v187, %v461
    %v463 = vadd.f32 %v459, %v462
    %s464 = sld [smem:[#allocation10 + $0x2]]
    %v465 = vstv %s464
    %v466 = vmul.f32 %v206, %v465
    %v467 = vadd.f32 %v463, %v466
    %s468 = sld [smem:[#allocation10 + $0x3]]
    %v469 = vstv %s468
    %v470 = vmul.f32 %v225, %v469
    %v471 = vadd.f32 %v467, %v470
    %s472 = sld [smem:[#allocation10 + $0x4]]
    %v473 = vstv %s472
    %v474 = vmul.f32 %v244, %v473
    %v475 = vadd.f32 %v471, %v474
    %s476 = sld [smem:[#allocation10 + $0x5]]
    %v477 = vstv %s476
    %v478 = vmul.f32 %v263, %v477
    %v479 = vadd.f32 %v475, %v478
    %s480 = sld [smem:[#allocation10 + $0x6]]
    %v481 = vstv %s480
    %v482 = vmul.f32 %v282, %v481
    %v483 = vadd.f32 %v479, %v482
    %s484 = sld [smem:[#allocation10 + $0x7]]
    %v485 = vstv %s484
    %v486 = vmul.f32 %v301, %v485
    %v487 = vadd.f32 %v483, %v486
    %s488 = sld [smem:[#allocation10 + $0x8]]
    %v489 = vstv %s488
    %v490 = vmul.f32 %v320, %v489
    %v491 = vadd.f32 %v487, %v490
    %s492 = sld [smem:[#allocation10 + $0x9]]
    %v493 = vstv %s492
    %v494 = vmul.f32 %v339, %v493
    %v495 = vadd.f32 %v491, %v494
    %s496 = sld [smem:[#allocation10 + $0xa]]
    %v497 = vstv %s496
    %v498 = vmul.f32 %v358, %v497
    %v499 = vadd.f32 %v495, %v498
    %s500 = sld [smem:[#allocation10 + $0xb]]
    %v501 = vstv %s500
    %v502 = vmul.f32 %v377, %v501
    %v503 = vadd.f32 %v499, %v502
    %s504 = sld [smem:[#allocation10 + $0xc]]
    %v505 = vstv %s504
    %v506 = vmul.f32 %v396, %v505
    %v507 = vadd.f32 %v503, %v506
    %s508 = sld [smem:[#allocation10 + $0xd]]
    %v509 = vstv %s508
    %v510 = vmul.f32 %v415, %v509
    %v511 = vadd.f32 %v507, %v510
    %s512 = sld [smem:[#allocation10 + $0xe]]
    %v513 = vstv %s512
    %v514 = vmul.f32 %v434, %v513
    %v515 = vadd.f32 %v511, %v514
    %s516 = sld [smem:[#allocation10 + $0xf]]
    %v517 = vstv %s516
    %v518 = vmul.f32 %v453, %v517
    %v519 = vadd.f32 %v515, %v518
    %v520 = vmax.f32 %v519, 0.0
    %s521 = sld [smem:[#allocation10 + $0x80]]
    %v522 = vstv %s521
    %v523 = vmul.f32 %v168, %v522
    %s524 = sld [smem:[#allocation11 + $0x1]]
    %v525 = vstv %s524
    %v526 = vadd.f32 %v523, %v525
    %s527 = sld [smem:[#allocation10 + $0x81]]
    %v528 = vstv %s527
    %v529 = vmul.f32 %v187, %v528
    %v530 = vadd.f32 %v526, %v529
    %s531 = sld [smem:[#allocation10 + $0x82]]
    %v532 = vstv %s531
    %v533 = vmul.f32 %v206, %v532
    %v534 = vadd.f32 %v530, %v533
    %s535 = sld [smem:[#allocation10 + $0x83]]
    %v536 = vstv %s535
    %v537 = vmul.f32 %v225, %v536
    %v538 = vadd.f32 %v534, %v537
    %s539 = sld [smem:[#allocation10 + $0x84]]
    %v540 = vstv %s539
    %v541 = vmul.f32 %v244, %v540
    %v542 = vadd.f32 %v538, %v541
    %s543 = sld [smem:[#allocation10 + $0x85]]
    %v544 = vstv %s543
    %v545 = vmul.f32 %v263, %v544
    %v546 = vadd.f32 %v542, %v545
    %s547 = sld [smem:[#allocation10 + $0x86]]
    %v548 = vstv %s547
    %v549 = vmul.f32 %v282, %v548
    %v550 = vadd.f32 %v546, %v549
    %s551 = sld [smem:[#allocation10 + $0x87]]
    %v552 = vstv %s551
    %v553 = vmul.f32 %v301, %v552
    %v554 = vadd.f32 %v550, %v553
    %s555 = sld [smem:[#allocation10 + $0x88]]
    %v556 = vstv %s555
    %v557 = vmul.f32 %v320, %v556
    %v558 = vadd.f32 %v554, %v557
    %s559 = sld [smem:[#allocation10 + $0x89]]
    %v560 = vstv %s559
    %v561 = vmul.f32 %v339, %v560
    %v562 = vadd.f32 %v558, %v561
    %s563 = sld [smem:[#allocation10 + $0x8a]]
    %v564 = vstv %s563
    %v565 = vmul.f32 %v358, %v564
    %v566 = vadd.f32 %v562, %v565
    %s567 = sld [smem:[#allocation10 + $0x8b]]
    %v568 = vstv %s567
    %v569 = vmul.f32 %v377, %v568
    %v570 = vadd.f32 %v566, %v569
    %s571 = sld [smem:[#allocation10 + $0x8c]]
    %v572 = vstv %s571
    %v573 = vmul.f32 %v396, %v572
    %v574 = vadd.f32 %v570, %v573
    %s575 = sld [smem:[#allocation10 + $0x8d]]
    %v576 = vstv %s575
    %v577 = vmul.f32 %v415, %v576
    %v578 = vadd.f32 %v574, %v577
    %s579 = sld [smem:[#allocation10 + $0x8e]]
    %v580 = vstv %s579
    %v581 = vmul.f32 %v434, %v580
    %v582 = vadd.f32 %v578, %v581
    %s583 = sld [smem:[#allocation10 + $0x8f]]
    %v584 = vstv %s583
    %v585 = vmul.f32 %v453, %v584
    %v586 = vadd.f32 %v582, %v585
    %v587 = vmax.f32 %v586, 0.0
    %s588 = sld [smem:[#allocation10 + $0x100]]
    %v589 = vstv %s588
    %v590 = vmul.f32 %v168, %v589
    %s591 = sld [smem:[#allocation11 + $0x2]]
    %v592 = vstv %s591
    %v593 = vadd.f32 %v590, %v592
    %s594 = sld [smem:[#allocation10 + $0x101]]
    %v595 = vstv %s594
    %v596 = vmul.f32 %v187, %v595
    %v597 = vadd.f32 %v593, %v596
    %s598 = sld [smem:[#allocation10 + $0x102]]
    %v599 = vstv %s598
    %v600 = vmul.f32 %v206, %v599
    %v601 = vadd.f32 %v597, %v600
    %s602 = sld [smem:[#allocation10 + $0x103]]
    %v603 = vstv %s602
    %v604 = vmul.f32 %v225, %v603
    %v605 = vadd.f32 %v601, %v604
    %s606 = sld [smem:[#allocation10 + $0x104]]
    %v607 = vstv %s606
    %v608 = vmul.f32 %v244, %v607
    %v609 = vadd.f32 %v605, %v608
    %s610 = sld [smem:[#allocation10 + $0x105]]
    %v611 = vstv %s610
    %v612 = vmul.f32 %v263, %v611
    %v613 = vadd.f32 %v609, %v612
    %s614 = sld [smem:[#allocation10 + $0x106]]
    %v615 = vstv %s614
    %v616 = vmul.f32 %v282, %v615
    %v617 = vadd.f32 %v613, %v616
    %s618 = sld [smem:[#allocation10 + $0x107]]
    %v619 = vstv %s618
    %v620 = vmul.f32 %v301, %v619
    %v621 = vadd.f32 %v617, %v620
    %s622 = sld [smem:[#allocation10 + $0x108]]
    %v623 = vstv %s622
    %v624 = vmul.f32 %v320, %v623
    %v625 = vadd.f32 %v621, %v624
    %s626 = sld [smem:[#allocation10 + $0x109]]
    %v627 = vstv %s626
    %v628 = vmul.f32 %v339, %v627
    %v629 = vadd.f32 %v625, %v628
    %s630 = sld [smem:[#allocation10 + $0x10a]]
    %v631 = vstv %s630
    %v632 = vmul.f32 %v358, %v631
    %v633 = vadd.f32 %v629, %v632
    %s634 = sld [smem:[#allocation10 + $0x10b]]
    %v635 = vstv %s634
    %v636 = vmul.f32 %v377, %v635
    %v637 = vadd.f32 %v633, %v636
    %s638 = sld [smem:[#allocation10 + $0x10c]]
    %v639 = vstv %s638
    %v640 = vmul.f32 %v396, %v639
    %v641 = vadd.f32 %v637, %v640
    %s642 = sld [smem:[#allocation10 + $0x10d]]
    %v643 = vstv %s642
    %v644 = vmul.f32 %v415, %v643
    %v645 = vadd.f32 %v641, %v644
    %s646 = sld [smem:[#allocation10 + $0x10e]]
    %v647 = vstv %s646
    %v648 = vmul.f32 %v434, %v647
    %v649 = vadd.f32 %v645, %v648
    %s650 = sld [smem:[#allocation10 + $0x10f]]
    %v651 = vstv %s650
    %v652 = vmul.f32 %v453, %v651
    %v653 = vadd.f32 %v649, %v652
    %v654 = vmax.f32 %v653, 0.0
    %s655 = sld [smem:[#allocation10 + $0x180]]
    %v656 = vstv %s655
    %v657 = vmul.f32 %v168, %v656
    %s658 = sld [smem:[#allocation11 + $0x3]]
    %v659 = vstv %s658
    %v660 = vadd.f32 %v657, %v659
    %s661 = sld [smem:[#allocation10 + $0x181]]
    %v662 = vstv %s661
    %v663 = vmul.f32 %v187, %v662
    %v664 = vadd.f32 %v660, %v663
    %s665 = sld [smem:[#allocation10 + $0x182]]
    %v666 = vstv %s665
    %v667 = vmul.f32 %v206, %v666
    %v668 = vadd.f32 %v664, %v667
    %s669 = sld [smem:[#allocation10 + $0x183]]
    %v670 = vstv %s669
    %v671 = vmul.f32 %v225, %v670
    %v672 = vadd.f32 %v668, %v671
    %s673 = sld [smem:[#allocation10 + $0x184]]
    %v674 = vstv %s673
    %v675 = vmul.f32 %v244, %v674
    %v676 = vadd.f32 %v672, %v675
    %s677 = sld [smem:[#allocation10 + $0x185]]
    %v678 = vstv %s677
    %v679 = vmul.f32 %v263, %v678
    %v680 = vadd.f32 %v676, %v679
    %s681 = sld [smem:[#allocation10 + $0x186]]
    %v682 = vstv %s681
    %v683 = vmul.f32 %v282, %v682
    %v684 = vadd.f32 %v680, %v683
    %s685 = sld [smem:[#allocation10 + $0x187]]
    %v686 = vstv %s685
    %v687 = vmul.f32 %v301, %v686
    %v688 = vadd.f32 %v684, %v687
    %s689 = sld [smem:[#allocation10 + $0x188]]
    %v690 = vstv %s689
    %v691 = vmul.f32 %v320, %v690
    %v692 = vadd.f32 %v688, %v691
    %s693 = sld [smem:[#allocation10 + $0x189]]
    %v694 = vstv %s693
    %v695 = vmul.f32 %v339, %v694
    %v696 = vadd.f32 %v692, %v695
    %s697 = sld [smem:[#allocation10 + $0x18a]]
    %v698 = vstv %s697
    %v699 = vmul.f32 %v358, %v698
    %v700 = vadd.f32 %v696, %v699
    %s701 = sld [smem:[#allocation10 + $0x18b]]
    %v702 = vstv %s701
    %v703 = vmul.f32 %v377, %v702
    %v704 = vadd.f32 %v700, %v703
    %s705 = sld [smem:[#allocation10 + $0x18c]]
    %v706 = vstv %s705
    %v707 = vmul.f32 %v396, %v706
    %v708 = vadd.f32 %v704, %v707
    %s709 = sld [smem:[#allocation10 + $0x18d]]
    %v710 = vstv %s709
    %v711 = vmul.f32 %v415, %v710
    %v712 = vadd.f32 %v708, %v711
    %s713 = sld [smem:[#allocation10 + $0x18e]]
    %v714 = vstv %s713
    %v715 = vmul.f32 %v434, %v714
    %v716 = vadd.f32 %v712, %v715
    %s717 = sld [smem:[#allocation10 + $0x18f]]
    %v718 = vstv %s717
    %v719 = vmul.f32 %v453, %v718
    %v720 = vadd.f32 %v716, %v719
    %v721 = vmax.f32 %v720, 0.0
    %s722 = sld [smem:[#allocation10 + $0x200]]
    %v723 = vstv %s722
    %v724 = vmul.f32 %v168, %v723
    %s725 = sld [smem:[#allocation11 + $0x4]]
    %v726 = vstv %s725
    %v727 = vadd.f32 %v724, %v726
    %s728 = sld [smem:[#allocation10 + $0x201]]
    %v729 = vstv %s728
    %v730 = vmul.f32 %v187, %v729
    %v731 = vadd.f32 %v727, %v730
    %s732 = sld [smem:[#allocation10 + $0x202]]
    %v733 = vstv %s732
    %v734 = vmul.f32 %v206, %v733
    %v735 = vadd.f32 %v731, %v734
    %s736 = sld [smem:[#allocation10 + $0x203]]
    %v737 = vstv %s736
    %v738 = vmul.f32 %v225, %v737
    %v739 = vadd.f32 %v735, %v738
    %s740 = sld [smem:[#allocation10 + $0x204]]
    %v741 = vstv %s740
    %v742 = vmul.f32 %v244, %v741
    %v743 = vadd.f32 %v739, %v742
    %s744 = sld [smem:[#allocation10 + $0x205]]
    %v745 = vstv %s744
    %v746 = vmul.f32 %v263, %v745
    %v747 = vadd.f32 %v743, %v746
    %s748 = sld [smem:[#allocation10 + $0x206]]
    %v749 = vstv %s748
    %v750 = vmul.f32 %v282, %v749
    %v751 = vadd.f32 %v747, %v750
    %s752 = sld [smem:[#allocation10 + $0x207]]
    %v753 = vstv %s752
    %v754 = vmul.f32 %v301, %v753
    %v755 = vadd.f32 %v751, %v754
    %s756 = sld [smem:[#allocation10 + $0x208]]
    %v757 = vstv %s756
    %v758 = vmul.f32 %v320, %v757
    %v759 = vadd.f32 %v755, %v758
    %s760 = sld [smem:[#allocation10 + $0x209]]
    %v761 = vstv %s760
    %v762 = vmul.f32 %v339, %v761
    %v763 = vadd.f32 %v759, %v762
    %s764 = sld [smem:[#allocation10 + $0x20a]]
    %v765 = vstv %s764
    %v766 = vmul.f32 %v358, %v765
    %v767 = vadd.f32 %v763, %v766
    %s768 = sld [smem:[#allocation10 + $0x20b]]
    %v769 = vstv %s768
    %v770 = vmul.f32 %v377, %v769
    %v771 = vadd.f32 %v767, %v770
    %s772 = sld [smem:[#allocation10 + $0x20c]]
    %v773 = vstv %s772
    %v774 = vmul.f32 %v396, %v773
    %v775 = vadd.f32 %v771, %v774
    %s776 = sld [smem:[#allocation10 + $0x20d]]
    %v777 = vstv %s776
    %v778 = vmul.f32 %v415, %v777
    %v779 = vadd.f32 %v775, %v778
    %s780 = sld [smem:[#allocation10 + $0x20e]]
    %v781 = vstv %s780
    %v782 = vmul.f32 %v434, %v781
    %v783 = vadd.f32 %v779, %v782
    %s784 = sld [smem:[#allocation10 + $0x20f]]
    %v785 = vstv %s784
    %v786 = vmul.f32 %v453, %v785
    %v787 = vadd.f32 %v783, %v786
    %v788 = vmax.f32 %v787, 0.0
    %s789 = sld [smem:[#allocation10 + $0x280]]
    %v790 = vstv %s789
    %v791 = vmul.f32 %v168, %v790
    %s792 = sld [smem:[#allocation11 + $0x5]]
    %v793 = vstv %s792
    %v794 = vadd.f32 %v791, %v793
    %s795 = sld [smem:[#allocation10 + $0x281]]
    %v796 = vstv %s795
    %v797 = vmul.f32 %v187, %v796
    %v798 = vadd.f32 %v794, %v797
    %s799 = sld [smem:[#allocation10 + $0x282]]
    %v800 = vstv %s799
    %v801 = vmul.f32 %v206, %v800
    %v802 = vadd.f32 %v798, %v801
    %s803 = sld [smem:[#allocation10 + $0x283]]
    %v804 = vstv %s803
    %v805 = vmul.f32 %v225, %v804
    %v806 = vadd.f32 %v802, %v805
    %s807 = sld [smem:[#allocation10 + $0x284]]
    %v808 = vstv %s807
    %v809 = vmul.f32 %v244, %v808
    %v810 = vadd.f32 %v806, %v809
    %s811 = sld [smem:[#allocation10 + $0x285]]
    %v812 = vstv %s811
    %v813 = vmul.f32 %v263, %v812
    %v814 = vadd.f32 %v810, %v813
    %s815 = sld [smem:[#allocation10 + $0x286]]
    %v816 = vstv %s815
    %v817 = vmul.f32 %v282, %v816
    %v818 = vadd.f32 %v814, %v817
    %s819 = sld [smem:[#allocation10 + $0x287]]
    %v820 = vstv %s819
    %v821 = vmul.f32 %v301, %v820
    %v822 = vadd.f32 %v818, %v821
    %s823 = sld [smem:[#allocation10 + $0x288]]
    %v824 = vstv %s823
    %v825 = vmul.f32 %v320, %v824
    %v826 = vadd.f32 %v822, %v825
    %s827 = sld [smem:[#allocation10 + $0x289]]
    %v828 = vstv %s827
    %v829 = vmul.f32 %v339, %v828
    %v830 = vadd.f32 %v826, %v829
    %s831 = sld [smem:[#allocation10 + $0x28a]]
    %v832 = vstv %s831
    %v833 = vmul.f32 %v358, %v832
    %v834 = vadd.f32 %v830, %v833
    %s835 = sld [smem:[#allocation10 + $0x28b]]
    %v836 = vstv %s835
    %v837 = vmul.f32 %v377, %v836
    %v838 = vadd.f32 %v834, %v837
    %s839 = sld [smem:[#allocation10 + $0x28c]]
    %v840 = vstv %s839
    %v841 = vmul.f32 %v396, %v840
    %v842 = vadd.f32 %v838, %v841
    %s843 = sld [smem:[#allocation10 + $0x28d]]
    %v844 = vstv %s843
    %v845 = vmul.f32 %v415, %v844
    %v846 = vadd.f32 %v842, %v845
    %s847 = sld [smem:[#allocation10 + $0x28e]]
    %v848 = vstv %s847
    %v849 = vmul.f32 %v434, %v848
    %v850 = vadd.f32 %v846, %v849
    %s851 = sld [smem:[#allocation10 + $0x28f]]
    %v852 = vstv %s851
    %v853 = vmul.f32 %v453, %v852
    %v854 = vadd.f32 %v850, %v853
    %v855 = vmax.f32 %v854, 0.0
    %s856 = sld [smem:[#allocation10 + $0x300]]
    %v857 = vstv %s856
    %v858 = vmul.f32 %v168, %v857
    %s859 = sld [smem:[#allocation11 + $0x6]]
    %v860 = vstv %s859
    %v861 = vadd.f32 %v858, %v860
    %s862 = sld [smem:[#allocation10 + $0x301]]
    %v863 = vstv %s862
    %v864 = vmul.f32 %v187, %v863
    %v865 = vadd.f32 %v861, %v864
    %s866 = sld [smem:[#allocation10 + $0x302]]
    %v867 = vstv %s866
    %v868 = vmul.f32 %v206, %v867
    %v869 = vadd.f32 %v865, %v868
    %s870 = sld [smem:[#allocation10 + $0x303]]
    %v871 = vstv %s870
    %v872 = vmul.f32 %v225, %v871
    %v873 = vadd.f32 %v869, %v872
    %s874 = sld [smem:[#allocation10 + $0x304]]
    %v875 = vstv %s874
    %v876 = vmul.f32 %v244, %v875
    %v877 = vadd.f32 %v873, %v876
    %s878 = sld [smem:[#allocation10 + $0x305]]
    %v879 = vstv %s878
    %v880 = vmul.f32 %v263, %v879
    %v881 = vadd.f32 %v877, %v880
    %s882 = sld [smem:[#allocation10 + $0x306]]
    %v883 = vstv %s882
    %v884 = vmul.f32 %v282, %v883
    %v885 = vadd.f32 %v881, %v884
    %s886 = sld [smem:[#allocation10 + $0x307]]
    %v887 = vstv %s886
    %v888 = vmul.f32 %v301, %v887
    %v889 = vadd.f32 %v885, %v888
    %s890 = sld [smem:[#allocation10 + $0x308]]
    %v891 = vstv %s890
    %v892 = vmul.f32 %v320, %v891
    %v893 = vadd.f32 %v889, %v892
    %s894 = sld [smem:[#allocation10 + $0x309]]
    %v895 = vstv %s894
    %v896 = vmul.f32 %v339, %v895
    %v897 = vadd.f32 %v893, %v896
    %s898 = sld [smem:[#allocation10 + $0x30a]]
    %v899 = vstv %s898
    %v900 = vmul.f32 %v358, %v899
    %v901 = vadd.f32 %v897, %v900
    %s902 = sld [smem:[#allocation10 + $0x30b]]
    %v903 = vstv %s902
    %v904 = vmul.f32 %v377, %v903
    %v905 = vadd.f32 %v901, %v904
    %s906 = sld [smem:[#allocation10 + $0x30c]]
    %v907 = vstv %s906
    %v908 = vmul.f32 %v396, %v907
    %v909 = vadd.f32 %v905, %v908
    %s910 = sld [smem:[#allocation10 + $0x30d]]
    %v911 = vstv %s910
    %v912 = vmul.f32 %v415, %v911
    %v913 = vadd.f32 %v909, %v912
    %s914 = sld [smem:[#allocation10 + $0x30e]]
    %v915 = vstv %s914
    %v916 = vmul.f32 %v434, %v915
    %v917 = vadd.f32 %v913, %v916
    %s918 = sld [smem:[#allocation10 + $0x30f]]
    %v919 = vstv %s918
    %v920 = vmul.f32 %v453, %v919
    %v921 = vadd.f32 %v917, %v920
    %v922 = vmax.f32 %v921, 0.0
    %s923 = sld [smem:[#allocation10 + $0x380]]
    %v924 = vstv %s923
    %v925 = vmul.f32 %v168, %v924
    %s926 = sld [smem:[#allocation11 + $0x7]]
    %v927 = vstv %s926
    %v928 = vadd.f32 %v925, %v927
    %s929 = sld [smem:[#allocation10 + $0x381]]
    %v930 = vstv %s929
    %v931 = vmul.f32 %v187, %v930
    %v932 = vadd.f32 %v928, %v931
    %s933 = sld [smem:[#allocation10 + $0x382]]
    %v934 = vstv %s933
    %v935 = vmul.f32 %v206, %v934
    %v936 = vadd.f32 %v932, %v935
    %s937 = sld [smem:[#allocation10 + $0x383]]
    %v938 = vstv %s937
    %v939 = vmul.f32 %v225, %v938
    %v940 = vadd.f32 %v936, %v939
    %s941 = sld [smem:[#allocation10 + $0x384]]
    %v942 = vstv %s941
    %v943 = vmul.f32 %v244, %v942
    %v944 = vadd.f32 %v940, %v943
    %s945 = sld [smem:[#allocation10 + $0x385]]
    %v946 = vstv %s945
    %v947 = vmul.f32 %v263, %v946
    %v948 = vadd.f32 %v944, %v947
    %s949 = sld [smem:[#allocation10 + $0x386]]
    %v950 = vstv %s949
    %v951 = vmul.f32 %v282, %v950
    %v952 = vadd.f32 %v948, %v951
    %s953 = sld [smem:[#allocation10 + $0x387]]
    %v954 = vstv %s953
    %v955 = vmul.f32 %v301, %v954
    %v956 = vadd.f32 %v952, %v955
    %s957 = sld [smem:[#allocation10 + $0x388]]
    %v958 = vstv %s957
    %v959 = vmul.f32 %v320, %v958
    %v960 = vadd.f32 %v956, %v959
    %s961 = sld [smem:[#allocation10 + $0x389]]
    %v962 = vstv %s961
    %v963 = vmul.f32 %v339, %v962
    %v964 = vadd.f32 %v960, %v963
    %s965 = sld [smem:[#allocation10 + $0x38a]]
    %v966 = vstv %s965
    %v967 = vmul.f32 %v358, %v966
    %v968 = vadd.f32 %v964, %v967
    %s969 = sld [smem:[#allocation10 + $0x38b]]
    %v970 = vstv %s969
    %v971 = vmul.f32 %v377, %v970
    %v972 = vadd.f32 %v968, %v971
    %s973 = sld [smem:[#allocation10 + $0x38c]]
    %v974 = vstv %s973
    %v975 = vmul.f32 %v396, %v974
    %v976 = vadd.f32 %v972, %v975
    %s977 = sld [smem:[#allocation10 + $0x38d]]
    %v978 = vstv %s977
    %v979 = vmul.f32 %v415, %v978
    %v980 = vadd.f32 %v976, %v979
    %s981 = sld [smem:[#allocation10 + $0x38e]]
    %v982 = vstv %s981
    %v983 = vmul.f32 %v434, %v982
    %v984 = vadd.f32 %v980, %v983
    %s985 = sld [smem:[#allocation10 + $0x38f]]
    %v986 = vstv %s985
    %v987 = vmul.f32 %v453, %v986
    %v988 = vadd.f32 %v984, %v987
    %v989 = vmax.f32 %v988, 0.0
    %s990 = sld [smem:[#allocation10 + $0x400]]
    %v991 = vstv %s990
    %v992 = vmul.f32 %v168, %v991
    %s993 = sld [smem:[#allocation11 + $0x8]]
    %v994 = vstv %s993
    %v995 = vadd.f32 %v992, %v994
    %s996 = sld [smem:[#allocation10 + $0x401]]
    %v997 = vstv %s996
    %v998 = vmul.f32 %v187, %v997
    %v999 = vadd.f32 %v995, %v998
    %s1000 = sld [smem:[#allocation10 + $0x402]]
    %v1001 = vstv %s1000
    %v1002 = vmul.f32 %v206, %v1001
    %v1003 = vadd.f32 %v999, %v1002
    %s1004 = sld [smem:[#allocation10 + $0x403]]
    %v1005 = vstv %s1004
    %v1006 = vmul.f32 %v225, %v1005
    %v1007 = vadd.f32 %v1003, %v1006
    %s1008 = sld [smem:[#allocation10 + $0x404]]
    %v1009 = vstv %s1008
    %v1010 = vmul.f32 %v244, %v1009
    %v1011 = vadd.f32 %v1007, %v1010
    %s1012 = sld [smem:[#allocation10 + $0x405]]
    %v1013 = vstv %s1012
    %v1014 = vmul.f32 %v263, %v1013
    %v1015 = vadd.f32 %v1011, %v1014
    %s1016 = sld [smem:[#allocation10 + $0x406]]
    %v1017 = vstv %s1016
    %v1018 = vmul.f32 %v282, %v1017
    %v1019 = vadd.f32 %v1015, %v1018
    %s1020 = sld [smem:[#allocation10 + $0x407]]
    %v1021 = vstv %s1020
    %v1022 = vmul.f32 %v301, %v1021
    %v1023 = vadd.f32 %v1019, %v1022
    %s1024 = sld [smem:[#allocation10 + $0x408]]
    %v1025 = vstv %s1024
    %v1026 = vmul.f32 %v320, %v1025
    %v1027 = vadd.f32 %v1023, %v1026
    %s1028 = sld [smem:[#allocation10 + $0x409]]
    %v1029 = vstv %s1028
    %v1030 = vmul.f32 %v339, %v1029
    %v1031 = vadd.f32 %v1027, %v1030
    %s1032 = sld [smem:[#allocation10 + $0x40a]]
    %v1033 = vstv %s1032
    %v1034 = vmul.f32 %v358, %v1033
    %v1035 = vadd.f32 %v1031, %v1034
    %s1036 = sld [smem:[#allocation10 + $0x40b]]
    %v1037 = vstv %s1036
    %v1038 = vmul.f32 %v377, %v1037
    %v1039 = vadd.f32 %v1035, %v1038
    %s1040 = sld [smem:[#allocation10 + $0x40c]]
    %v1041 = vstv %s1040
    %v1042 = vmul.f32 %v396, %v1041
    %v1043 = vadd.f32 %v1039, %v1042
    %s1044 = sld [smem:[#allocation10 + $0x40d]]
    %v1045 = vstv %s1044
    %v1046 = vmul.f32 %v415, %v1045
    %v1047 = vadd.f32 %v1043, %v1046
    %s1048 = sld [smem:[#allocation10 + $0x40e]]
    %v1049 = vstv %s1048
    %v1050 = vmul.f32 %v434, %v1049
    %v1051 = vadd.f32 %v1047, %v1050
    %s1052 = sld [smem:[#allocation10 + $0x40f]]
    %v1053 = vstv %s1052
    %v1054 = vmul.f32 %v453, %v1053
    %v1055 = vadd.f32 %v1051, %v1054
    %v1056 = vmax.f32 %v1055, 0.0
    %s1057 = sld [smem:[#allocation10 + $0x480]]
    %v1058 = vstv %s1057
    %v1059 = vmul.f32 %v168, %v1058
    %s1060 = sld [smem:[#allocation11 + $0x9]]
    %v1061 = vstv %s1060
    %v1062 = vadd.f32 %v1059, %v1061
    %s1063 = sld [smem:[#allocation10 + $0x481]]
    %v1064 = vstv %s1063
    %v1065 = vmul.f32 %v187, %v1064
    %v1066 = vadd.f32 %v1062, %v1065
    %s1067 = sld [smem:[#allocation10 + $0x482]]
    %v1068 = vstv %s1067
    %v1069 = vmul.f32 %v206, %v1068
    %v1070 = vadd.f32 %v1066, %v1069
    %s1071 = sld [smem:[#allocation10 + $0x483]]
    %v1072 = vstv %s1071
    %v1073 = vmul.f32 %v225, %v1072
    %v1074 = vadd.f32 %v1070, %v1073
    %s1075 = sld [smem:[#allocation10 + $0x484]]
    %v1076 = vstv %s1075
    %v1077 = vmul.f32 %v244, %v1076
    %v1078 = vadd.f32 %v1074, %v1077
    %s1079 = sld [smem:[#allocation10 + $0x485]]
    %v1080 = vstv %s1079
    %v1081 = vmul.f32 %v263, %v1080
    %v1082 = vadd.f32 %v1078, %v1081
    %s1083 = sld [smem:[#allocation10 + $0x486]]
    %v1084 = vstv %s1083
    %v1085 = vmul.f32 %v282, %v1084
    %v1086 = vadd.f32 %v1082, %v1085
    %s1087 = sld [smem:[#allocation10 + $0x487]]
    %v1088 = vstv %s1087
    %v1089 = vmul.f32 %v301, %v1088
    %v1090 = vadd.f32 %v1086, %v1089
    %s1091 = sld [smem:[#allocation10 + $0x488]]
    %v1092 = vstv %s1091
    %v1093 = vmul.f32 %v320, %v1092
    %v1094 = vadd.f32 %v1090, %v1093
    %s1095 = sld [smem:[#allocation10 + $0x489]]
    %v1096 = vstv %s1095
    %v1097 = vmul.f32 %v339, %v1096
    %v1098 = vadd.f32 %v1094, %v1097
    %s1099 = sld [smem:[#allocation10 + $0x48a]]
    %v1100 = vstv %s1099
    %v1101 = vmul.f32 %v358, %v1100
    %v1102 = vadd.f32 %v1098, %v1101
    %s1103 = sld [smem:[#allocation10 + $0x48b]]
    %v1104 = vstv %s1103
    %v1105 = vmul.f32 %v377, %v1104
    %v1106 = vadd.f32 %v1102, %v1105
    %s1107 = sld [smem:[#allocation10 + $0x48c]]
    %v1108 = vstv %s1107
    %v1109 = vmul.f32 %v396, %v1108
    %v1110 = vadd.f32 %v1106, %v1109
    %s1111 = sld [smem:[#allocation10 + $0x48d]]
    %v1112 = vstv %s1111
    %v1113 = vmul.f32 %v415, %v1112
    %v1114 = vadd.f32 %v1110, %v1113
    %s1115 = sld [smem:[#allocation10 + $0x48e]]
    %v1116 = vstv %s1115
    %v1117 = vmul.f32 %v434, %v1116
    %v1118 = vadd.f32 %v1114, %v1117
    %s1119 = sld [smem:[#allocation10 + $0x48f]]
    %v1120 = vstv %s1119
    %v1121 = vmul.f32 %v453, %v1120
    %v1122 = vadd.f32 %v1118, %v1121
    %v1123 = vmax.f32 %v1122, 0.0
    %s1124 = sld [smem:[#allocation10 + $0x500]]
    %v1125 = vstv %s1124
    %v1126 = vmul.f32 %v168, %v1125
    %s1127 = sld [smem:[#allocation11 + $0xa]]
    %v1128 = vstv %s1127
    %v1129 = vadd.f32 %v1126, %v1128
    %s1130 = sld [smem:[#allocation10 + $0x501]]
    %v1131 = vstv %s1130
    %v1132 = vmul.f32 %v187, %v1131
    %v1133 = vadd.f32 %v1129, %v1132
    %s1134 = sld [smem:[#allocation10 + $0x502]]
    %v1135 = vstv %s1134
    %v1136 = vmul.f32 %v206, %v1135
    %v1137 = vadd.f32 %v1133, %v1136
    %s1138 = sld [smem:[#allocation10 + $0x503]]
    %v1139 = vstv %s1138
    %v1140 = vmul.f32 %v225, %v1139
    %v1141 = vadd.f32 %v1137, %v1140
    %s1142 = sld [smem:[#allocation10 + $0x504]]
    %v1143 = vstv %s1142
    %v1144 = vmul.f32 %v244, %v1143
    %v1145 = vadd.f32 %v1141, %v1144
    %s1146 = sld [smem:[#allocation10 + $0x505]]
    %v1147 = vstv %s1146
    %v1148 = vmul.f32 %v263, %v1147
    %v1149 = vadd.f32 %v1145, %v1148
    %s1150 = sld [smem:[#allocation10 + $0x506]]
    %v1151 = vstv %s1150
    %v1152 = vmul.f32 %v282, %v1151
    %v1153 = vadd.f32 %v1149, %v1152
    %s1154 = sld [smem:[#allocation10 + $0x507]]
    %v1155 = vstv %s1154
    %v1156 = vmul.f32 %v301, %v1155
    %v1157 = vadd.f32 %v1153, %v1156
    %s1158 = sld [smem:[#allocation10 + $0x508]]
    %v1159 = vstv %s1158
    %v1160 = vmul.f32 %v320, %v1159
    %v1161 = vadd.f32 %v1157, %v1160
    %s1162 = sld [smem:[#allocation10 + $0x509]]
    %v1163 = vstv %s1162
    %v1164 = vmul.f32 %v339, %v1163
    %v1165 = vadd.f32 %v1161, %v1164
    %s1166 = sld [smem:[#allocation10 + $0x50a]]
    %v1167 = vstv %s1166
    %v1168 = vmul.f32 %v358, %v1167
    %v1169 = vadd.f32 %v1165, %v1168
    %s1170 = sld [smem:[#allocation10 + $0x50b]]
    %v1171 = vstv %s1170
    %v1172 = vmul.f32 %v377, %v1171
    %v1173 = vadd.f32 %v1169, %v1172
    %s1174 = sld [smem:[#allocation10 + $0x50c]]
    %v1175 = vstv %s1174
    %v1176 = vmul.f32 %v396, %v1175
    %v1177 = vadd.f32 %v1173, %v1176
    %s1178 = sld [smem:[#allocation10 + $0x50d]]
    %v1179 = vstv %s1178
    %v1180 = vmul.f32 %v415, %v1179
    %v1181 = vadd.f32 %v1177, %v1180
    %s1182 = sld [smem:[#allocation10 + $0x50e]]
    %v1183 = vstv %s1182
    %v1184 = vmul.f32 %v434, %v1183
    %v1185 = vadd.f32 %v1181, %v1184
    %s1186 = sld [smem:[#allocation10 + $0x50f]]
    %v1187 = vstv %s1186
    %v1188 = vmul.f32 %v453, %v1187
    %v1189 = vadd.f32 %v1185, %v1188
    %v1190 = vmax.f32 %v1189, 0.0
    %s1191 = sld [smem:[#allocation10 + $0x580]]
    %v1192 = vstv %s1191
    %v1193 = vmul.f32 %v168, %v1192
    %s1194 = sld [smem:[#allocation11 + $0xb]]
    %v1195 = vstv %s1194
    %v1196 = vadd.f32 %v1193, %v1195
    %s1197 = sld [smem:[#allocation10 + $0x581]]
    %v1198 = vstv %s1197
    %v1199 = vmul.f32 %v187, %v1198
    %v1200 = vadd.f32 %v1196, %v1199
    %s1201 = sld [smem:[#allocation10 + $0x582]]
    %v1202 = vstv %s1201
    %v1203 = vmul.f32 %v206, %v1202
    %v1204 = vadd.f32 %v1200, %v1203
    %s1205 = sld [smem:[#allocation10 + $0x583]]
    %v1206 = vstv %s1205
    %v1207 = vmul.f32 %v225, %v1206
    %v1208 = vadd.f32 %v1204, %v1207
    %s1209 = sld [smem:[#allocation10 + $0x584]]
    %v1210 = vstv %s1209
    %v1211 = vmul.f32 %v244, %v1210
    %v1212 = vadd.f32 %v1208, %v1211
    %s1213 = sld [smem:[#allocation10 + $0x585]]
    %v1214 = vstv %s1213
    %v1215 = vmul.f32 %v263, %v1214
    %v1216 = vadd.f32 %v1212, %v1215
    %s1217 = sld [smem:[#allocation10 + $0x586]]
    %v1218 = vstv %s1217
    %v1219 = vmul.f32 %v282, %v1218
    %v1220 = vadd.f32 %v1216, %v1219
    %s1221 = sld [smem:[#allocation10 + $0x587]]
    %v1222 = vstv %s1221
    %v1223 = vmul.f32 %v301, %v1222
    %v1224 = vadd.f32 %v1220, %v1223
    %s1225 = sld [smem:[#allocation10 + $0x588]]
    %v1226 = vstv %s1225
    %v1227 = vmul.f32 %v320, %v1226
    %v1228 = vadd.f32 %v1224, %v1227
    %s1229 = sld [smem:[#allocation10 + $0x589]]
    %v1230 = vstv %s1229
    %v1231 = vmul.f32 %v339, %v1230
    %v1232 = vadd.f32 %v1228, %v1231
    %s1233 = sld [smem:[#allocation10 + $0x58a]]
    %v1234 = vstv %s1233
    %v1235 = vmul.f32 %v358, %v1234
    %v1236 = vadd.f32 %v1232, %v1235
    %s1237 = sld [smem:[#allocation10 + $0x58b]]
    %v1238 = vstv %s1237
    %v1239 = vmul.f32 %v377, %v1238
    %v1240 = vadd.f32 %v1236, %v1239
    %s1241 = sld [smem:[#allocation10 + $0x58c]]
    %v1242 = vstv %s1241
    %v1243 = vmul.f32 %v396, %v1242
    %v1244 = vadd.f32 %v1240, %v1243
    %s1245 = sld [smem:[#allocation10 + $0x58d]]
    %v1246 = vstv %s1245
    %v1247 = vmul.f32 %v415, %v1246
    %v1248 = vadd.f32 %v1244, %v1247
    %s1249 = sld [smem:[#allocation10 + $0x58e]]
    %v1250 = vstv %s1249
    %v1251 = vmul.f32 %v434, %v1250
    %v1252 = vadd.f32 %v1248, %v1251
    %s1253 = sld [smem:[#allocation10 + $0x58f]]
    %v1254 = vstv %s1253
    %v1255 = vmul.f32 %v453, %v1254
    %v1256 = vadd.f32 %v1252, %v1255
    %v1257 = vmax.f32 %v1256, 0.0
    %s1258 = sld [smem:[#allocation12]]
    %v1259 = vstv %s1258
    %v1260 = vmul.f32 %v520, %v1259
    %s1261 = sld [smem:[#allocation14]]
    %v1262 = vstv %s1261
    %v1263 = vadd.f32 %v1260, %v1262
    %s1264 = sld [smem:[#allocation12 + $0x1]]
    %v1265 = vstv %s1264
    %v1266 = vmul.f32 %v587, %v1265
    %v1267 = vadd.f32 %v1263, %v1266
    %s1268 = sld [smem:[#allocation12 + $0x2]]
    %v1269 = vstv %s1268
    %v1270 = vmul.f32 %v654, %v1269
    %v1271 = vadd.f32 %v1267, %v1270
    %s1272 = sld [smem:[#allocation12 + $0x3]]
    %v1273 = vstv %s1272
    %v1274 = vmul.f32 %v721, %v1273
    %v1275 = vadd.f32 %v1271, %v1274
    %s1276 = sld [smem:[#allocation12 + $0x4]]
    %v1277 = vstv %s1276
    %v1278 = vmul.f32 %v788, %v1277
    %v1279 = vadd.f32 %v1275, %v1278
    %s1280 = sld [smem:[#allocation12 + $0x5]]
    %v1281 = vstv %s1280
    %v1282 = vmul.f32 %v855, %v1281
    %v1283 = vadd.f32 %v1279, %v1282
    %s1284 = sld [smem:[#allocation12 + $0x6]]
    %v1285 = vstv %s1284
    %v1286 = vmul.f32 %v922, %v1285
    %v1287 = vadd.f32 %v1283, %v1286
    %s1288 = sld [smem:[#allocation12 + $0x7]]
    %v1289 = vstv %s1288
    %v1290 = vmul.f32 %v989, %v1289
    %v1291 = vadd.f32 %v1287, %v1290
    %s1292 = sld [smem:[#allocation12 + $0x8]]
    %v1293 = vstv %s1292
    %v1294 = vmul.f32 %v1056, %v1293
    %v1295 = vadd.f32 %v1291, %v1294
    %s1296 = sld [smem:[#allocation12 + $0x9]]
    %v1297 = vstv %s1296
    %v1298 = vmul.f32 %v1123, %v1297
    %v1299 = vadd.f32 %v1295, %v1298
    %s1300 = sld [smem:[#allocation12 + $0xa]]
    %v1301 = vstv %s1300
    %v1302 = vmul.f32 %v1190, %v1301
    %v1303 = vadd.f32 %v1299, %v1302
    %s1304 = sld [smem:[#allocation12 + $0xb]]
    %v1305 = vstv %s1304
    %v1306 = vmul.f32 %v1257, %v1305
    %v1307 = vadd.f32 %v1303, %v1306
    %v1308 = vmax.f32 %v1307, 0.0
    %s1309 = sld [smem:[#allocation12 + $0x80]]
    %v1310 = vstv %s1309
    %v1311 = vmul.f32 %v520, %v1310
    %s1312 = sld [smem:[#allocation14 + $0x1]]
    %v1313 = vstv %s1312
    %v1314 = vadd.f32 %v1311, %v1313
    %s1315 = sld [smem:[#allocation12 + $0x81]]
    %v1316 = vstv %s1315
    %v1317 = vmul.f32 %v587, %v1316
    %v1318 = vadd.f32 %v1314, %v1317
    %s1319 = sld [smem:[#allocation12 + $0x82]]
    %v1320 = vstv %s1319
    %v1321 = vmul.f32 %v654, %v1320
    %v1322 = vadd.f32 %v1318, %v1321
    %s1323 = sld [smem:[#allocation12 + $0x83]]
    %v1324 = vstv %s1323
    %v1325 = vmul.f32 %v721, %v1324
    %v1326 = vadd.f32 %v1322, %v1325
    %s1327 = sld [smem:[#allocation12 + $0x84]]
    %v1328 = vstv %s1327
    %v1329 = vmul.f32 %v788, %v1328
    %v1330 = vadd.f32 %v1326, %v1329
    %s1331 = sld [smem:[#allocation12 + $0x85]]
    %v1332 = vstv %s1331
    %v1333 = vmul.f32 %v855, %v1332
    %v1334 = vadd.f32 %v1330, %v1333
    %s1335 = sld [smem:[#allocation12 + $0x86]]
    %v1336 = vstv %s1335
    %v1337 = vmul.f32 %v922, %v1336
    %v1338 = vadd.f32 %v1334, %v1337
    %s1339 = sld [smem:[#allocation12 + $0x87]]
    %v1340 = vstv %s1339
    %v1341 = vmul.f32 %v989, %v1340
    %v1342 = vadd.f32 %v1338, %v1341
    %s1343 = sld [smem:[#allocation12 + $0x88]]
    %v1344 = vstv %s1343
    %v1345 = vmul.f32 %v1056, %v1344
    %v1346 = vadd.f32 %v1342, %v1345
    %s1347 = sld [smem:[#allocation12 + $0x89]]
    %v1348 = vstv %s1347
    %v1349 = vmul.f32 %v1123, %v1348
    %v1350 = vadd.f32 %v1346, %v1349
    %s1351 = sld [smem:[#allocation12 + $0x8a]]
    %v1352 = vstv %s1351
    %v1353 = vmul.f32 %v1190, %v1352
    %v1354 = vadd.f32 %v1350, %v1353
    %s1355 = sld [smem:[#allocation12 + $0x8b]]
    %v1356 = vstv %s1355
    %v1357 = vmul.f32 %v1257, %v1356
    %v1358 = vadd.f32 %v1354, %v1357
    %v1359 = vmax.f32 %v1358, 0.0
    %s1360 = sld [smem:[#allocation12 + $0x100]]
    %v1361 = vstv %s1360
    %v1362 = vmul.f32 %v520, %v1361
    %s1363 = sld [smem:[#allocation14 + $0x2]]
    %v1364 = vstv %s1363
    %v1365 = vadd.f32 %v1362, %v1364
    %s1366 = sld [smem:[#allocation12 + $0x101]]
    %v1367 = vstv %s1366
    %v1368 = vmul.f32 %v587, %v1367
    %v1369 = vadd.f32 %v1365, %v1368
    %s1370 = sld [smem:[#allocation12 + $0x102]]
    %v1371 = vstv %s1370
    %v1372 = vmul.f32 %v654, %v1371
    %v1373 = vadd.f32 %v1369, %v1372
    %s1374 = sld [smem:[#allocation12 + $0x103]]
    %v1375 = vstv %s1374
    %v1376 = vmul.f32 %v721, %v1375
    %v1377 = vadd.f32 %v1373, %v1376
    %s1378 = sld [smem:[#allocation12 + $0x104]]
    %v1379 = vstv %s1378
    %v1380 = vmul.f32 %v788, %v1379
    %v1381 = vadd.f32 %v1377, %v1380
    %s1382 = sld [smem:[#allocation12 + $0x105]]
    %v1383 = vstv %s1382
    %v1384 = vmul.f32 %v855, %v1383
    %v1385 = vadd.f32 %v1381, %v1384
    %s1386 = sld [smem:[#allocation12 + $0x106]]
    %v1387 = vstv %s1386
    %v1388 = vmul.f32 %v922, %v1387
    %v1389 = vadd.f32 %v1385, %v1388
    %s1390 = sld [smem:[#allocation12 + $0x107]]
    %v1391 = vstv %s1390
    %v1392 = vmul.f32 %v989, %v1391
    %v1393 = vadd.f32 %v1389, %v1392
    %s1394 = sld [smem:[#allocation12 + $0x108]]
    %v1395 = vstv %s1394
    %v1396 = vmul.f32 %v1056, %v1395
    %v1397 = vadd.f32 %v1393, %v1396
    %s1398 = sld [smem:[#allocation12 + $0x109]]
    %v1399 = vstv %s1398
    %v1400 = vmul.f32 %v1123, %v1399
    %v1401 = vadd.f32 %v1397, %v1400
    %s1402 = sld [smem:[#allocation12 + $0x10a]]
    %v1403 = vstv %s1402
    %v1404 = vmul.f32 %v1190, %v1403
    %v1405 = vadd.f32 %v1401, %v1404
    %s1406 = sld [smem:[#allocation12 + $0x10b]]
    %v1407 = vstv %s1406
    %v1408 = vmul.f32 %v1257, %v1407
    %v1409 = vadd.f32 %v1405, %v1408
    %v1410 = vmax.f32 %v1409, 0.0
    %s1411 = sld [smem:[#allocation12 + $0x180]]
    %v1412 = vstv %s1411
    %v1413 = vmul.f32 %v520, %v1412
    %s1414 = sld [smem:[#allocation14 + $0x3]]
    %v1415 = vstv %s1414
    %v1416 = vadd.f32 %v1413, %v1415
    %s1417 = sld [smem:[#allocation12 + $0x181]]
    %v1418 = vstv %s1417
    %v1419 = vmul.f32 %v587, %v1418
    %v1420 = vadd.f32 %v1416, %v1419
    %s1421 = sld [smem:[#allocation12 + $0x182]]
    %v1422 = vstv %s1421
    %v1423 = vmul.f32 %v654, %v1422
    %v1424 = vadd.f32 %v1420, %v1423
    %s1425 = sld [smem:[#allocation12 + $0x183]]
    %v1426 = vstv %s1425
    %v1427 = vmul.f32 %v721, %v1426
    %v1428 = vadd.f32 %v1424, %v1427
    %s1429 = sld [smem:[#allocation12 + $0x184]]
    %v1430 = vstv %s1429
    %v1431 = vmul.f32 %v788, %v1430
    %v1432 = vadd.f32 %v1428, %v1431
    %s1433 = sld [smem:[#allocation12 + $0x185]]
    %v1434 = vstv %s1433
    %v1435 = vmul.f32 %v855, %v1434
    %v1436 = vadd.f32 %v1432, %v1435
    %s1437 = sld [smem:[#allocation12 + $0x186]]
    %v1438 = vstv %s1437
    %v1439 = vmul.f32 %v922, %v1438
    %v1440 = vadd.f32 %v1436, %v1439
    %s1441 = sld [smem:[#allocation12 + $0x187]]
    %v1442 = vstv %s1441
    %v1443 = vmul.f32 %v989, %v1442
    %v1444 = vadd.f32 %v1440, %v1443
    %s1445 = sld [smem:[#allocation12 + $0x188]]
    %v1446 = vstv %s1445
    %v1447 = vmul.f32 %v1056, %v1446
    %v1448 = vadd.f32 %v1444, %v1447
    %s1449 = sld [smem:[#allocation12 + $0x189]]
    %v1450 = vstv %s1449
    %v1451 = vmul.f32 %v1123, %v1450
    %v1452 = vadd.f32 %v1448, %v1451
    %s1453 = sld [smem:[#allocation12 + $0x18a]]
    %v1454 = vstv %s1453
    %v1455 = vmul.f32 %v1190, %v1454
    %v1456 = vadd.f32 %v1452, %v1455
    %s1457 = sld [smem:[#allocation12 + $0x18b]]
    %v1458 = vstv %s1457
    %v1459 = vmul.f32 %v1257, %v1458
    %v1460 = vadd.f32 %v1456, %v1459
    %v1461 = vmax.f32 %v1460, 0.0
    %s1462 = sld [smem:[#allocation12 + $0x200]]
    %v1463 = vstv %s1462
    %v1464 = vmul.f32 %v520, %v1463
    %s1465 = sld [smem:[#allocation14 + $0x4]]
    %v1466 = vstv %s1465
    %v1467 = vadd.f32 %v1464, %v1466
    %s1468 = sld [smem:[#allocation12 + $0x201]]
    %v1469 = vstv %s1468
    %v1470 = vmul.f32 %v587, %v1469
    %v1471 = vadd.f32 %v1467, %v1470
    %s1472 = sld [smem:[#allocation12 + $0x202]]
    %v1473 = vstv %s1472
    %v1474 = vmul.f32 %v654, %v1473
    %v1475 = vadd.f32 %v1471, %v1474
    %s1476 = sld [smem:[#allocation12 + $0x203]]
    %v1477 = vstv %s1476
    %v1478 = vmul.f32 %v721, %v1477
    %v1479 = vadd.f32 %v1475, %v1478
    %s1480 = sld [smem:[#allocation12 + $0x204]]
    %v1481 = vstv %s1480
    %v1482 = vmul.f32 %v788, %v1481
    %v1483 = vadd.f32 %v1479, %v1482
    %s1484 = sld [smem:[#allocation12 + $0x205]]
    %v1485 = vstv %s1484
    %v1486 = vmul.f32 %v855, %v1485
    %v1487 = vadd.f32 %v1483, %v1486
    %s1488 = sld [smem:[#allocation12 + $0x206]]
    %v1489 = vstv %s1488
    %v1490 = vmul.f32 %v922, %v1489
    %v1491 = vadd.f32 %v1487, %v1490
    %s1492 = sld [smem:[#allocation12 + $0x207]]
    %v1493 = vstv %s1492
    %v1494 = vmul.f32 %v989, %v1493
    %v1495 = vadd.f32 %v1491, %v1494
    %s1496 = sld [smem:[#allocation12 + $0x208]]
    %v1497 = vstv %s1496
    %v1498 = vmul.f32 %v1056, %v1497
    %v1499 = vadd.f32 %v1495, %v1498
    %s1500 = sld [smem:[#allocation12 + $0x209]]
    %v1501 = vstv %s1500
    %v1502 = vmul.f32 %v1123, %v1501
    %v1503 = vadd.f32 %v1499, %v1502
    %s1504 = sld [smem:[#allocation12 + $0x20a]]
    %v1505 = vstv %s1504
    %v1506 = vmul.f32 %v1190, %v1505
    %v1507 = vadd.f32 %v1503, %v1506
    %s1508 = sld [smem:[#allocation12 + $0x20b]]
    %v1509 = vstv %s1508
    %v1510 = vmul.f32 %v1257, %v1509
    %v1511 = vadd.f32 %v1507, %v1510
    %v1512 = vmax.f32 %v1511, 0.0
    %s1513 = sld [smem:[#allocation12 + $0x280]]
    %v1514 = vstv %s1513
    %v1515 = vmul.f32 %v520, %v1514
    %s1516 = sld [smem:[#allocation14 + $0x5]]
    %v1517 = vstv %s1516
    %v1518 = vadd.f32 %v1515, %v1517
    %s1519 = sld [smem:[#allocation12 + $0x281]]
    %v1520 = vstv %s1519
    %v1521 = vmul.f32 %v587, %v1520
    %v1522 = vadd.f32 %v1518, %v1521
    %s1523 = sld [smem:[#allocation12 + $0x282]]
    %v1524 = vstv %s1523
    %v1525 = vmul.f32 %v654, %v1524
    %v1526 = vadd.f32 %v1522, %v1525
    %s1527 = sld [smem:[#allocation12 + $0x283]]
    %v1528 = vstv %s1527
    %v1529 = vmul.f32 %v721, %v1528
    %v1530 = vadd.f32 %v1526, %v1529
    %s1531 = sld [smem:[#allocation12 + $0x284]]
    %v1532 = vstv %s1531
    %v1533 = vmul.f32 %v788, %v1532
    %v1534 = vadd.f32 %v1530, %v1533
    %s1535 = sld [smem:[#allocation12 + $0x285]]
    %v1536 = vstv %s1535
    %v1537 = vmul.f32 %v855, %v1536
    %v1538 = vadd.f32 %v1534, %v1537
    %s1539 = sld [smem:[#allocation12 + $0x286]]
    %v1540 = vstv %s1539
    %v1541 = vmul.f32 %v922, %v1540
    %v1542 = vadd.f32 %v1538, %v1541
    %s1543 = sld [smem:[#allocation12 + $0x287]]
    %v1544 = vstv %s1543
    %v1545 = vmul.f32 %v989, %v1544
    %v1546 = vadd.f32 %v1542, %v1545
    %s1547 = sld [smem:[#allocation12 + $0x288]]
    %v1548 = vstv %s1547
    %v1549 = vmul.f32 %v1056, %v1548
    %v1550 = vadd.f32 %v1546, %v1549
    %s1551 = sld [smem:[#allocation12 + $0x289]]
    %v1552 = vstv %s1551
    %v1553 = vmul.f32 %v1123, %v1552
    %v1554 = vadd.f32 %v1550, %v1553
    %s1555 = sld [smem:[#allocation12 + $0x28a]]
    %v1556 = vstv %s1555
    %v1557 = vmul.f32 %v1190, %v1556
    %v1558 = vadd.f32 %v1554, %v1557
    %s1559 = sld [smem:[#allocation12 + $0x28b]]
    %v1560 = vstv %s1559
    %v1561 = vmul.f32 %v1257, %v1560
    %v1562 = vadd.f32 %v1558, %v1561
    %v1563 = vmax.f32 %v1562, 0.0
    %s1564 = sld [smem:[#allocation12 + $0x300]]
    %v1565 = vstv %s1564
    %v1566 = vmul.f32 %v520, %v1565
    %s1567 = sld [smem:[#allocation14 + $0x6]]
    %v1568 = vstv %s1567
    %v1569 = vadd.f32 %v1566, %v1568
    %s1570 = sld [smem:[#allocation12 + $0x301]]
    %v1571 = vstv %s1570
    %v1572 = vmul.f32 %v587, %v1571
    %v1573 = vadd.f32 %v1569, %v1572
    %s1574 = sld [smem:[#allocation12 + $0x302]]
    %v1575 = vstv %s1574
    %v1576 = vmul.f32 %v654, %v1575
    %v1577 = vadd.f32 %v1573, %v1576
    %s1578 = sld [smem:[#allocation12 + $0x303]]
    %v1579 = vstv %s1578
    %v1580 = vmul.f32 %v721, %v1579
    %v1581 = vadd.f32 %v1577, %v1580
    %s1582 = sld [smem:[#allocation12 + $0x304]]
    %v1583 = vstv %s1582
    %v1584 = vmul.f32 %v788, %v1583
    %v1585 = vadd.f32 %v1581, %v1584
    %s1586 = sld [smem:[#allocation12 + $0x305]]
    %v1587 = vstv %s1586
    %v1588 = vmul.f32 %v855, %v1587
    %v1589 = vadd.f32 %v1585, %v1588
    %s1590 = sld [smem:[#allocation12 + $0x306]]
    %v1591 = vstv %s1590
    %v1592 = vmul.f32 %v922, %v1591
    %v1593 = vadd.f32 %v1589, %v1592
    %s1594 = sld [smem:[#allocation12 + $0x307]]
    %v1595 = vstv %s1594
    %v1596 = vmul.f32 %v989, %v1595
    %v1597 = vadd.f32 %v1593, %v1596
    %s1598 = sld [smem:[#allocation12 + $0x308]]
    %v1599 = vstv %s1598
    %v1600 = vmul.f32 %v1056, %v1599
    %v1601 = vadd.f32 %v1597, %v1600
    %s1602 = sld [smem:[#allocation12 + $0x309]]
    %v1603 = vstv %s1602
    %v1604 = vmul.f32 %v1123, %v1603
    %v1605 = vadd.f32 %v1601, %v1604
    %s1606 = sld [smem:[#allocation12 + $0x30a]]
    %v1607 = vstv %s1606
    %v1608 = vmul.f32 %v1190, %v1607
    %v1609 = vadd.f32 %v1605, %v1608
    %s1610 = sld [smem:[#allocation12 + $0x30b]]
    %v1611 = vstv %s1610
    %v1612 = vmul.f32 %v1257, %v1611
    %v1613 = vadd.f32 %v1609, %v1612
    %v1614 = vmax.f32 %v1613, 0.0
    %s1615 = sld [smem:[#allocation12 + $0x380]]
    %v1616 = vstv %s1615
    %v1617 = vmul.f32 %v520, %v1616
    %s1618 = sld [smem:[#allocation14 + $0x7]]
    %v1619 = vstv %s1618
    %v1620 = vadd.f32 %v1617, %v1619
    %s1621 = sld [smem:[#allocation12 + $0x381]]
    %v1622 = vstv %s1621
    %v1623 = vmul.f32 %v587, %v1622
    %v1624 = vadd.f32 %v1620, %v1623
    %s1625 = sld [smem:[#allocation12 + $0x382]]
    %v1626 = vstv %s1625
    %v1627 = vmul.f32 %v654, %v1626
    %v1628 = vadd.f32 %v1624, %v1627
    %s1629 = sld [smem:[#allocation12 + $0x383]]
    %v1630 = vstv %s1629
    %v1631 = vmul.f32 %v721, %v1630
    %v1632 = vadd.f32 %v1628, %v1631
    %s1633 = sld [smem:[#allocation12 + $0x384]]
    %v1634 = vstv %s1633
    %v1635 = vmul.f32 %v788, %v1634
    %v1636 = vadd.f32 %v1632, %v1635
    %s1637 = sld [smem:[#allocation12 + $0x385]]
    %v1638 = vstv %s1637
    %v1639 = vmul.f32 %v855, %v1638
    %v1640 = vadd.f32 %v1636, %v1639
    %s1641 = sld [smem:[#allocation12 + $0x386]]
    %v1642 = vstv %s1641
    %v1643 = vmul.f32 %v922, %v1642
    %v1644 = vadd.f32 %v1640, %v1643
    %s1645 = sld [smem:[#allocation12 + $0x387]]
    %v1646 = vstv %s1645
    %v1647 = vmul.f32 %v989, %v1646
    %v1648 = vadd.f32 %v1644, %v1647
    %s1649 = sld [smem:[#allocation12 + $0x388]]
    %v1650 = vstv %s1649
    %v1651 = vmul.f32 %v1056, %v1650
    %v1652 = vadd.f32 %v1648, %v1651
    %s1653 = sld [smem:[#allocation12 + $0x389]]
    %v1654 = vstv %s1653
    %v1655 = vmul.f32 %v1123, %v1654
    %v1656 = vadd.f32 %v1652, %v1655
    %s1657 = sld [smem:[#allocation12 + $0x38a]]
    %v1658 = vstv %s1657
    %v1659 = vmul.f32 %v1190, %v1658
    %v1660 = vadd.f32 %v1656, %v1659
    %s1661 = sld [smem:[#allocation12 + $0x38b]]
    %v1662 = vstv %s1661
    %v1663 = vmul.f32 %v1257, %v1662
    %v1664 = vadd.f32 %v1660, %v1663
    %v1665 = vmax.f32 %v1664, 0.0
    %s1666 = sld [smem:[#allocation15]]
    %v1667 = vstv %s1666
    %v1668 = vmul.f32 %v1308, %v1667
    %s1669 = sld [smem:[#allocation17]]
    %v1670 = vstv %s1669
    %v1671 = vadd.f32 %v1668, %v1670
    %s1672 = sld [smem:[#allocation15 + $0x1]]
    %v1673 = vstv %s1672
    %v1674 = vmul.f32 %v1359, %v1673
    %v1675 = vadd.f32 %v1671, %v1674
    %s1676 = sld [smem:[#allocation15 + $0x2]]
    %v1677 = vstv %s1676
    %v1678 = vmul.f32 %v1410, %v1677
    %v1679 = vadd.f32 %v1675, %v1678
    %s1680 = sld [smem:[#allocation15 + $0x3]]
    %v1681 = vstv %s1680
    %v1682 = vmul.f32 %v1461, %v1681
    %v1683 = vadd.f32 %v1679, %v1682
    %s1684 = sld [smem:[#allocation15 + $0x4]]
    %v1685 = vstv %s1684
    %v1686 = vmul.f32 %v1512, %v1685
    %v1687 = vadd.f32 %v1683, %v1686
    %s1688 = sld [smem:[#allocation15 + $0x5]]
    %v1689 = vstv %s1688
    %v1690 = vmul.f32 %v1563, %v1689
    %v1691 = vadd.f32 %v1687, %v1690
    %s1692 = sld [smem:[#allocation15 + $0x6]]
    %v1693 = vstv %s1692
    %v1694 = vmul.f32 %v1614, %v1693
    %v1695 = vadd.f32 %v1691, %v1694
    %s1696 = sld [smem:[#allocation15 + $0x7]]
    %v1697 = vstv %s1696
    %v1698 = vmul.f32 %v1665, %v1697
    %v1699 = vadd.f32 %v1695, %v1698
    %s1700 = sld [smem:[#allocation15 + $0x80]]
    %v1701 = vstv %s1700
    %v1702 = vmul.f32 %v1308, %v1701
    %s1703 = sld [smem:[#allocation17 + $0x1]]
    %v1704 = vstv %s1703
    %v1705 = vadd.f32 %v1702, %v1704
    %s1706 = sld [smem:[#allocation15 + $0x81]]
    %v1707 = vstv %s1706
    %v1708 = vmul.f32 %v1359, %v1707
    %v1709 = vadd.f32 %v1705, %v1708
    %s1710 = sld [smem:[#allocation15 + $0x82]]
    %v1711 = vstv %s1710
    %v1712 = vmul.f32 %v1410, %v1711
    %v1713 = vadd.f32 %v1709, %v1712
    %s1714 = sld [smem:[#allocation15 + $0x83]]
    %v1715 = vstv %s1714
    %v1716 = vmul.f32 %v1461, %v1715
    %v1717 = vadd.f32 %v1713, %v1716
    %s1718 = sld [smem:[#allocation15 + $0x84]]
    %v1719 = vstv %s1718
    %v1720 = vmul.f32 %v1512, %v1719
    %v1721 = vadd.f32 %v1717, %v1720
    %s1722 = sld [smem:[#allocation15 + $0x85]]
    %v1723 = vstv %s1722
    %v1724 = vmul.f32 %v1563, %v1723
    %v1725 = vadd.f32 %v1721, %v1724
    %s1726 = sld [smem:[#allocation15 + $0x86]]
    %v1727 = vstv %s1726
    %v1728 = vmul.f32 %v1614, %v1727
    %v1729 = vadd.f32 %v1725, %v1728
    %s1730 = sld [smem:[#allocation15 + $0x87]]
    %v1731 = vstv %s1730
    %v1732 = vmul.f32 %v1665, %v1731
    %v1733 = vadd.f32 %v1729, %v1732
    %s1734 = sld [smem:[#allocation15 + $0x100]]
    %v1735 = vstv %s1734
    %v1736 = vmul.f32 %v1308, %v1735
    %s1737 = sld [smem:[#allocation17 + $0x2]]
    %v1738 = vstv %s1737
    %v1739 = vadd.f32 %v1736, %v1738
    %s1740 = sld [smem:[#allocation15 + $0x101]]
    %v1741 = vstv %s1740
    %v1742 = vmul.f32 %v1359, %v1741
    %v1743 = vadd.f32 %v1739, %v1742
    %s1744 = sld [smem:[#allocation15 + $0x102]]
    %v1745 = vstv %s1744
    %v1746 = vmul.f32 %v1410, %v1745
    %v1747 = vadd.f32 %v1743, %v1746
    %s1748 = sld [smem:[#allocation15 + $0x103]]
    %v1749 = vstv %s1748
    %v1750 = vmul.f32 %v1461, %v1749
    %v1751 = vadd.f32 %v1747, %v1750
    %s1752 = sld [smem:[#allocation15 + $0x104]]
    %v1753 = vstv %s1752
    %v1754 = vmul.f32 %v1512, %v1753
    %v1755 = vadd.f32 %v1751, %v1754
    %s1756 = sld [smem:[#allocation15 + $0x105]]
    %v1757 = vstv %s1756
    %v1758 = vmul.f32 %v1563, %v1757
    %v1759 = vadd.f32 %v1755, %v1758
    %s1760 = sld [smem:[#allocation15 + $0x106]]
    %v1761 = vstv %s1760
    %v1762 = vmul.f32 %v1614, %v1761
    %v1763 = vadd.f32 %v1759, %v1762
    %s1764 = sld [smem:[#allocation15 + $0x107]]
    %v1765 = vstv %s1764
    %v1766 = vmul.f32 %v1665, %v1765
    %v1767 = vadd.f32 %v1763, %v1766
    %1768 = vst [vmem:[#allocation18] sm:$0xff] %v1308
    %s1769 = scalar_lea.vmem [#allocation18], 8
    %1770 = vst [vmem:[%s1769] sm:$0xff] %v1359
    %s1771 = scalar_lea.vmem [#allocation18], 16
    %1772 = vst [vmem:[%s1771] sm:$0xff] %v1410
    %s1773 = scalar_lea.vmem [#allocation18], 24
    %1774 = vst [vmem:[%s1773] sm:$0xff] %v1461
    %s1775 = scalar_lea.vmem [#allocation18], 32
    %1776 = vst [vmem:[%s1775] sm:$0xff] %v1512
    %s1777 = scalar_lea.vmem [#allocation18], 40
    %1778 = vst [vmem:[%s1777] sm:$0xff] %v1563
    %s1779 = scalar_lea.vmem [#allocation18], 48
    %1780 = vst [vmem:[%s1779] sm:$0xff] %v1614
    %s1781 = scalar_lea.vmem [#allocation18], 56
    %1782 = vst [vmem:[%s1781] sm:$0xff] %v1665
    %s1783 = scalar_lea.vmem [#allocation18], 64
    %1784 = vst [vmem:[%s1783] sm:$0xff] %v1699
    %s1785 = scalar_lea.vmem [#allocation18], 72
    %1786 = vst [vmem:[%s1785] sm:$0xff] %v1733
    %s1787 = scalar_lea.vmem [#allocation18], 80
    %1788 = vst [vmem:[%s1787] sm:$0xff] %v1767
    // Predicated region
    $region74: #{tpu_custom_call.1} parent=1 // pred_check
      _
    $region75: #{tpu_custom_call.1} parent=1 // pred_check_branch
      %1790 = sbr.rel (0) target = $region77
    $region76: #{tpu_custom_call.1} parent=1 // pred_region
      %s1792 = ssub.s32 1408, 1408
      %1793 = vsyncadd [#allocation4], %s1792
      %s1794 = sshll.u32 [#allocation18], 4
      %s1795 = int_to_ptr.vmem [resolvable:$true] %s1794
      %1800 = dma.vmem_to_hbm [thread:$0]  %s1795, 1408, %s9, [#allocation4], 128, 128, 8
    $region77: #{tpu_custom_call.1} parent=1 // pred_fallthru
      _
    // Predicated region
    $region78: #{tpu_custom_call.1} parent=1 // pred_check
      _
    $region79: #{tpu_custom_call.1} parent=1 // pred_check_branch
      %1802 = sbr.rel (0) target = $region81
    $region80: #{tpu_custom_call.1} parent=1 // pred_region
      %1803 = dma.done [#allocation4], 1408
    $region81: #{tpu_custom_call.1} parent=1 // pred_fallthru
      _
    %1804 = vsyncpa [#allocation3], 1
    %1805 = vsyncpa [#allocation4], 1
    %1806 = vsyncpa [#allocation5], 1
    %1807 = vsyncpa [#allocation6], 1
    %1808 = vsyncpa [#allocation9], 1
    %1809 = vsyncpa [#allocation13], 1
    %1810 = vsyncpa [#allocation16], 1

</llo_original>
